<compile_context>
chip_gen: v7x
topology: tpu7x:2x2x1
jax: 0.10.0
libtpu: 0.0.40
codegen_flags: <defaults>
</compile_context>

<pallas_src>
import jax
import jax.numpy as jnp
from jax.experimental import pallas as pl
from jax.experimental.pallas import tpu as pltpu

K_DIM = 13          # "k" of STN3d
BN_EPS = 1e-5
C3_TILE = 256       # conv3 output-channel tile for the fused epilogue


def _stn3d_kernel(x_ref,
                  w1_ref, b1_ref,
                  w2_ref, b2_ref,
                  w3_ref, b3_ref,
                  wf1_ref, bf1_ref,
                  wf2_ref, bf2_ref,
                  wf3_ref, bf3_ref,
                  o_ref, feat_ref):
    """One grid step == bb batch elements x nc points.

    x_ref    : (bb, nc, k)   bf16 point chunk for bb batch elements
    w*_ref   : (Cin, Cout)   BN-folded weights, bf16
    b*_ref   : (1, Cout)     BN-folded biases, f32 (bf3 includes the identity)
    o_ref    : (1, bb, k*k)  flattened k x k transforms for this batch block
    feat_ref : (bb, 1024)    f32 running max over point chunks (VMEM scratch)
    """
    nj = pl.program_id(1)
    bb, nc, kk = x_ref.shape
    c3 = feat_ref.shape[1]
    bf16 = jnp.bfloat16

    # Post-ReLU activations are >= 0, so zero-init is equivalent to -inf init.
    @pl.when(nj == 0)
    def _():
        feat_ref[...] = jnp.zeros(feat_ref.shape, feat_ref.dtype)

    # ---- conv trunk: per-point matmuls on bb*nc rows -----------------------
    x2d = x_ref[...].reshape(bb * nc, kk)            # layout-free leading merge
    h1 = jnp.maximum(
        jnp.dot(x2d, w1_ref[...], preferred_element_type=jnp.float32)
        + b1_ref[...], 0.0)
    h2 = jnp.maximum(
        jnp.dot(h1.astype(bf16), w2_ref[...], preferred_element_type=jnp.float32)
        + b2_ref[...], 0.0)
    h2b = h2.astype(bf16)

    # ---- conv3 with fused bias/ReLU/max epilogue, channel-tiled -------------
    for co in range(0, c3, C3_TILE):
        t = jnp.maximum(
            jnp.dot(h2b, w3_ref[:, co:co + C3_TILE],
                    preferred_element_type=jnp.float32)
            + b3_ref[:, co:co + C3_TILE], 0.0)                # (bb*nc, C3_TILE)
        tile_max = jnp.max(t.reshape(bb, nc, C3_TILE), axis=1)  # (bb, C3_TILE)
        feat_ref[:, co:co + C3_TILE] = jnp.maximum(
            feat_ref[:, co:co + C3_TILE], tile_max)

    # ---- fc head on the pooled (bb, 1024) features, last chunk only ---------
    @pl.when(nj == pl.num_programs(1) - 1)
    def _():
        feat = feat_ref[...]
        g1 = jnp.maximum(
            jnp.dot(feat.astype(bf16), wf1_ref[...],
                    preferred_element_type=jnp.float32) + bf1_ref[...], 0.0)
        g2 = jnp.maximum(
            jnp.dot(g1.astype(bf16), wf2_ref[...],
                    preferred_element_type=jnp.float32) + bf2_ref[...], 0.0)
        out = (jnp.dot(g2.astype(bf16), wf3_ref[...],
                       preferred_element_type=jnp.float32) + bf3_ref[...])
        o_ref[0] = out.astype(o_ref.dtype)


def _cdiv(a, b):
    return -(-a // b)


def _round_up(v, m):
    return _cdiv(v, m) * m


def _const_spec(shape):
    """BlockSpec covering a whole grid-invariant array (single-buffered)."""
    zeros = (0,) * len(shape)
    index_map = lambda b, n: zeros
    try:
        # Grid-invariant operand: a single VMEM buffer is enough.
        return pl.BlockSpec(shape, index_map, pipeline_mode=pl.Buffered(1))
    except TypeError:   # older BlockSpec signature without pipeline_mode
        return pl.BlockSpec(shape, index_map)


def _vmem_capacity_bytes():
    try:
        return int(pltpu.get_tpu_info().vmem_capacity_bytes)
    except Exception:
        return 64 << 20     # conservative (v7x-sized) fallback


def stn3d_forward(x_nkw, params, *, block_b=8, block_n=None):
    """x_nkw: (B, k, N) float32, PyTorch NCW layout.  Returns (B, k, k)."""
    B, k, N = x_nkw.shape
    assert k == K_DIM

    # --- generation-aware sizing -------------------------------------------
    vmem_cap = _vmem_capacity_bytes()
    if block_n is None:
        # 128 MiB VMEM parts (v5e/v6e) amortise grid overhead with nc=1024;
        # v7x (64 MiB) stays at nc=512.
        block_n = 1024 if vmem_cap >= (100 << 20) else 512
    vmem_limit = int(min(64 << 20, (vmem_cap * 3) // 4))   # 64 MiB / ~48 MiB on v7x

    # --- parameter prep: bf16 MXU weights, identity folded into fc3 bias ----
    (w1, b1, w2, b2, w3, b3, wf1, bf1, wf2, bf2, wf3, bf3) = params
    bf16 = jnp.bfloat16
    w1, w2, w3, wf1, wf2, wf3 = (w.astype(bf16) for w in (w1, w2, w3, wf1, wf2, wf3))
    bf3_eff = (bf3 + jnp.eye(k, dtype=jnp.float32).reshape(1, k * k)).astype(jnp.float32)

    # --- batch blocking: >= 2 batch blocks whenever B >= 2 (keeps both v7x
    # TensorCores busy); large batches use block_b-sized blocks. -------------
    if B > block_b:
        bb = block_b
    elif B >= 2:
        bb = _cdiv(B, 2)
    else:
        bb = 1
    B_pad = _round_up(B, bb)
    nb = B_pad // bb

    # --- balanced point chunking (edge-padding waste < 16 points) -----------
    nc = _round_up(_cdiv(N, _cdiv(N, block_n)), 16)
    n_chunks = _cdiv(N, nc)
    N_pad = n_chunks * nc

    # points-major layout (kernel_size=1 conv == per-point matmul), bf16 DMA
    x_pts = jnp.transpose(x_nkw, (0, 2, 1))                     # (B, N, k)
    if N_pad != N:
        # replicate the last real point: padded rows reproduce a real point's
        # activations exactly, so the max over points is unchanged.
        x_pts = jnp.pad(x_pts, ((0, 0), (0, N_pad - N), (0, 0)), mode="edge")
    if B_pad != B:
        x_pts = jnp.pad(x_pts, ((0, B_pad - B), (0, 0), (0, 0)))  # sliced off below
    x_pts = x_pts.astype(bf16)

    in_arrays = (x_pts, w1, b1, w2, b2, w3, b3,
                 wf1, bf1, wf2, bf2, wf3, bf3_eff)
    in_specs = [pl.BlockSpec((bb, nc, k), lambda b, n: (b, n, 0))]
    in_specs += [_const_spec(a.shape) for a in in_arrays[1:]]

    c3 = w3.shape[1]   # 1024

    out_blk = pl.pallas_call(
        _stn3d_kernel,
        out_shape=jax.ShapeDtypeStruct((nb, bb, k * k), jnp.float32),
        grid_spec=pltpu.PrefetchScalarGridSpec(
            num_scalar_prefetch=0,
            grid=(nb, n_chunks),
            in_specs=in_specs,
            out_specs=pl.BlockSpec((1, bb, k * k), lambda b, n: (b, 0, 0)),
            scratch_shapes=[pltpu.VMEM((bb, c3), jnp.float32)],
        ),
        compiler_params=pltpu.CompilerParams(
            dimension_semantics=("parallel", "arbitrary"),
            vmem_limit_bytes=vmem_limit,
        ),
    )(*in_arrays)

    return out_blk.reshape(B_pad, k * k)[:B].reshape(B, k, k)


def _fold_bn(w, b, gamma, beta, mean, var, eps=BN_EPS):
    """Fold inference-mode BatchNorm1d into a (Cin,Cout) weight + (1,Cout) bias."""
    s = gamma / jnp.sqrt(var + eps)                # (Cout,)
    w_f = w * s[None, :]
    b_f = (b - mean) * s + beta
    return w_f.astype(jnp.float32), b_f.reshape(1, -1).astype(jnp.float32)


def make_params(key, k=K_DIM):
    """Deterministic synthetic parameters matching STN3d's layer shapes."""
    dims = [
        ("conv1", k,    64,   True),
        ("conv2", 64,   128,  True),
        ("conv3", 128,  1024, True),
        ("fc1",   1024, 512,  True),
        ("fc2",   512,  256,  True),
        ("fc3",   256,  k * k, False),
    ]
    params = []
    for name, cin, cout, has_bn in dims:
        key, kw, kb, kg, kbe = jax.random.split(key, 5)
        w = jax.random.normal(kw, (cin, cout), jnp.float32) * 0.05
        b = jax.random.normal(kb, (cout,), jnp.float32) * 0.05
        if has_bn:
            gamma = 1.0 + 0.1 * jax.random.normal(kg, (cout,), jnp.float32)
            beta = 0.1 * jax.random.normal(kbe, (cout,), jnp.float32)
            mean = jnp.zeros((cout,), jnp.float32)
            var = jnp.ones((cout,), jnp.float32)
            w_f, b_f = _fold_bn(w, b, gamma, beta, mean, var)
        else:
            w_f, b_f = w, b.reshape(1, -1)
        params += [w_f, b_f]
    return tuple(params)


def stn3d_reference(x_nkw, params, k=K_DIM):
    """Pure-JAX reference with the same (BN-folded, bf16-matmul) numerics."""
    (w1, b1, w2, b2, w3, b3, wf1, bf1, wf2, bf2, wf3, bf3) = params
    bf16, f32 = jnp.bfloat16, jnp.float32

    def mm(a, w):
        return jnp.dot(a.astype(bf16), w.astype(bf16), preferred_element_type=f32)

    x = jnp.transpose(x_nkw, (0, 2, 1))                               # (B, N, k)
    h = jax.nn.relu(mm(x, w1) + b1)
    h = jax.nn.relu(mm(h, w2) + b2)
    h = jax.nn.relu(mm(h, w3) + b3)
    f = jnp.max(h, axis=1)                                            # (B, 1024)
    g = jax.nn.relu(mm(f, wf1) + bf1)
    g = jax.nn.relu(mm(g, wf2) + bf2)
    out = mm(g, wf3) + bf3 + jnp.eye(k, dtype=f32).reshape(1, k * k)
    return out.reshape(-1, k, k)


if __name__ == "__main__":
    key = jax.random.PRNGKey(0)
    k_params, k_x = jax.random.split(key)

    B, N = 2, 16
    params = make_params(k_params)
    x = jax.random.normal(k_x, (B, K_DIM, N), jnp.float32)   # PyTorch NCW input

    out = stn3d_forward(x, params)
    out = jax.block_until_ready(out)

    ref = stn3d_reference(x, params)
    assert out.shape == (B, K_DIM, K_DIM)
    assert jnp.allclose(out, ref, atol=2e-3, rtol=2e-3), "mismatch vs reference"

    print("KERNEL_OK")
</pallas_src>

<mosaic_0001>
module attributes {stable_mosaic.version = 11 : i64} {
  func.func @_stn3d_kernel(%arg0: i32, %arg1: i32, %arg2: memref<1x16x13xbf16, #tpu.memory_space<vmem>>, %arg3: memref<13x64xbf16, #tpu.memory_space<vmem>>, %arg4: memref<1x64xf32, #tpu.memory_space<vmem>>, %arg5: memref<64x128xbf16, #tpu.memory_space<vmem>>, %arg6: memref<1x128xf32, #tpu.memory_space<vmem>>, %arg7: memref<128x1024xbf16, #tpu.memory_space<vmem>>, %arg8: memref<1x1024xf32, #tpu.memory_space<vmem>>, %arg9: memref<1024x512xbf16, #tpu.memory_space<vmem>>, %arg10: memref<1x512xf32, #tpu.memory_space<vmem>>, %arg11: memref<512x256xbf16, #tpu.memory_space<vmem>>, %arg12: memref<1x256xf32, #tpu.memory_space<vmem>>, %arg13: memref<256x169xbf16, #tpu.memory_space<vmem>>, %arg14: memref<1x169xf32, #tpu.memory_space<vmem>>, %arg15: memref<1x1x169xf32, #tpu.memory_space<vmem>>, %arg16: memref<1x1024xf32, #tpu.memory_space<vmem>>) attributes {dimension_semantics = [#tpu.dimension_semantics<parallel>, #tpu.dimension_semantics<arbitrary>], iteration_bounds = array<i64: 2, 1>, scalar_prefetch = 0 : i64, scratch_operands = 1 : i64, tpu.core_type = #tpu.core_type<tc>, window_params = [{transform_indices = @transform_0, window_bounds = array<i64: 1, 16, 13>}, {pipeline_mode = #tpu.pipeline_mode<synchronous>, transform_indices = @transform_1, window_bounds = array<i64: 13, 64>}, {pipeline_mode = #tpu.pipeline_mode<synchronous>, transform_indices = @transform_2, window_bounds = array<i64: 1, 64>}, {pipeline_mode = #tpu.pipeline_mode<synchronous>, transform_indices = @transform_3, window_bounds = array<i64: 64, 128>}, {pipeline_mode = #tpu.pipeline_mode<synchronous>, transform_indices = @transform_4, window_bounds = array<i64: 1, 128>}, {pipeline_mode = #tpu.pipeline_mode<synchronous>, transform_indices = @transform_5, window_bounds = array<i64: 128, 1024>}, {pipeline_mode = #tpu.pipeline_mode<synchronous>, transform_indices = @transform_6, window_bounds = array<i64: 1, 1024>}, {pipeline_mode = #tpu.pipeline_mode<synchronous>, transform_indices = @transform_7, window_bounds = array<i64: 1024, 512>}, {pipeline_mode = #tpu.pipeline_mode<synchronous>, transform_indices = @transform_8, window_bounds = array<i64: 1, 512>}, {pipeline_mode = #tpu.pipeline_mode<synchronous>, transform_indices = @transform_9, window_bounds = array<i64: 512, 256>}, {pipeline_mode = #tpu.pipeline_mode<synchronous>, transform_indices = @transform_10, window_bounds = array<i64: 1, 256>}, {pipeline_mode = #tpu.pipeline_mode<synchronous>, transform_indices = @transform_11, window_bounds = array<i64: 256, 169>}, {pipeline_mode = #tpu.pipeline_mode<synchronous>, transform_indices = @transform_12, window_bounds = array<i64: 1, 169>}, {transform_indices = @transform_13, window_bounds = array<i64: 1, 1, 169>}]} {
    %c0_i32 = arith.constant 0 : i32
    %0 = arith.cmpi eq, %arg1, %c0_i32 : i32
    %1 = arith.extui %0 : i1 to i32
    %c0_i32_0 = arith.constant 0 : i32
    %2 = arith.cmpi ne, %1, %c0_i32_0 : i32
    scf.if %2 {
      %cst_57 = arith.constant 0.000000e+00 : f32
      %72 = vector.broadcast %cst_57 : f32 to vector<1x1024xf32>
      %c0_58 = arith.constant 0 : index
      %c0_59 = arith.constant 0 : index
      %73 = vector.load %arg16[%c0_58, %c0_59] : memref<1x1024xf32, #tpu.memory_space<vmem>>, vector<1x1024xf32>
      tpu.vector_store %arg16[%c0_58, %c0_59], %72 {strides = array<i32>} : memref<1x1024xf32, #tpu.memory_space<vmem>>, vector<1x1024xf32>,
    } else {
    }
    %c0 = arith.constant 0 : index
    %c0_1 = arith.constant 0 : index
    %c0_2 = arith.constant 0 : index
    %3 = vector.load %arg2[%c0, %c0_1, %c0_2] : memref<1x16x13xbf16, #tpu.memory_space<vmem>>, vector<1x16x13xbf16>
    %4 = vector.shape_cast %3 : vector<1x16x13xbf16> to vector<16x13xbf16>
    %c0_3 = arith.constant 0 : index
    %c0_4 = arith.constant 0 : index
    %5 = vector.load %arg3[%c0_3, %c0_4] : memref<13x64xbf16, #tpu.memory_space<vmem>>, vector<13x64xbf16>
    %cst = arith.constant dense<0.000000e+00> : vector<16x64xf32>
    %6 = tpu.matmul %4, %5, %cst {dimension_numbers = #tpu.dot_dimension_numbers<[1], [0], [0], [1], [0, 0, 1, 1], [], []>} : vector<16x13xbf16>, vector<13x64xbf16>, vector<16x64xf32> -> vector<16x64xf32>
    %c0_5 = arith.constant 0 : index
    %c0_6 = arith.constant 0 : index
    %7 = vector.load %arg4[%c0_5, %c0_6] : memref<1x64xf32, #tpu.memory_space<vmem>>, vector<1x64xf32>
    %8 = vector.broadcast %7 : vector<1x64xf32> to vector<16x64xf32>
    %9 = arith.addf %6, %8 : vector<16x64xf32>
    %cst_7 = arith.constant 0.000000e+00 : f32
    %10 = vector.broadcast %cst_7 : f32 to vector<16x64xf32>
    %11 = arith.maximumf %9, %10 : vector<16x64xf32>
    %12 = arith.truncf %11 : vector<16x64xf32> to vector<16x64xbf16>
    %c0_8 = arith.constant 0 : index
    %c0_9 = arith.constant 0 : index
    %13 = vector.load %arg5[%c0_8, %c0_9] : memref<64x128xbf16, #tpu.memory_space<vmem>>, vector<64x128xbf16>
    %cst_10 = arith.constant dense<0.000000e+00> : vector<16x128xf32>
    %14 = tpu.matmul %12, %13, %cst_10 {dimension_numbers = #tpu.dot_dimension_numbers<[1], [0], [0], [1], [0, 0, 1, 1], [], []>} : vector<16x64xbf16>, vector<64x128xbf16>, vector<16x128xf32> -> vector<16x128xf32>
    %c0_11 = arith.constant 0 : index
    %c0_12 = arith.constant 0 : index
    %15 = vector.load %arg6[%c0_11, %c0_12] : memref<1x128xf32, #tpu.memory_space<vmem>>, vector<1x128xf32>
    %16 = vector.broadcast %15 : vector<1x128xf32> to vector<16x128xf32>
    %17 = arith.addf %14, %16 : vector<16x128xf32>
    %cst_13 = arith.constant 0.000000e+00 : f32
    %18 = vector.broadcast %cst_13 : f32 to vector<16x128xf32>
    %19 = arith.maximumf %17, %18 : vector<16x128xf32>
    %20 = arith.truncf %19 : vector<16x128xf32> to vector<16x128xbf16>
    %c0_14 = arith.constant 0 : index
    %c0_15 = arith.constant 0 : index
    %21 = vector.load %arg7[%c0_14, %c0_15] : memref<128x1024xbf16, #tpu.memory_space<vmem>>, vector<128x256xbf16>
    %cst_16 = arith.constant dense<0.000000e+00> : vector<16x256xf32>
    %22 = tpu.matmul %20, %21, %cst_16 {dimension_numbers = #tpu.dot_dimension_numbers<[1], [0], [0], [1], [0, 0, 1, 1], [], []>} : vector<16x128xbf16>, vector<128x256xbf16>, vector<16x256xf32> -> vector<16x256xf32>
    %c0_17 = arith.constant 0 : index
    %c0_18 = arith.constant 0 : index
    %23 = vector.load %arg8[%c0_17, %c0_18] : memref<1x1024xf32, #tpu.memory_space<vmem>>, vector<1x256xf32>
    %24 = vector.broadcast %23 : vector<1x256xf32> to vector<16x256xf32>
    %25 = arith.addf %22, %24 : vector<16x256xf32>
    %cst_19 = arith.constant 0.000000e+00 : f32
    %26 = vector.broadcast %cst_19 : f32 to vector<16x256xf32>
    %27 = arith.maximumf %25, %26 : vector<16x256xf32>
    %28 = vector.shape_cast %27 : vector<16x256xf32> to vector<1x16x256xf32>
    %cst_20 = arith.constant dense<0xFF800000> : vector<1x256xf32>
    %29 = vector.multi_reduction <maximumf>, %28, %cst_20 [1] : vector<1x16x256xf32> to vector<1x256xf32>
    %c0_21 = arith.constant 0 : index
    %c0_22 = arith.constant 0 : index
    %30 = vector.load %arg16[%c0_21, %c0_22] : memref<1x1024xf32, #tpu.memory_space<vmem>>, vector<1x256xf32>
    %31 = arith.maximumf %30, %29 : vector<1x256xf32>
    %c0_23 = arith.constant 0 : index
    %c0_24 = arith.constant 0 : index
    %32 = vector.load %arg16[%c0_23, %c0_24] : memref<1x1024xf32, #tpu.memory_space<vmem>>, vector<1x256xf32>
    tpu.vector_store %arg16[%c0_23, %c0_24], %31 {strides = array<i32>} : memref<1x1024xf32, #tpu.memory_space<vmem>>, vector<1x256xf32>,
    %c0_25 = arith.constant 0 : index
    %c256 = arith.constant 256 : index
    %33 = vector.load %arg7[%c0_25, %c256] : memref<128x1024xbf16, #tpu.memory_space<vmem>>, vector<128x256xbf16>
    %cst_26 = arith.constant dense<0.000000e+00> : vector<16x256xf32>
    %34 = tpu.matmul %20, %33, %cst_26 {dimension_numbers = #tpu.dot_dimension_numbers<[1], [0], [0], [1], [0, 0, 1, 1], [], []>} : vector<16x128xbf16>, vector<128x256xbf16>, vector<16x256xf32> -> vector<16x256xf32>
    %c0_27 = arith.constant 0 : index
    %c256_28 = arith.constant 256 : index
    %35 = vector.load %arg8[%c0_27, %c256_28] : memref<1x1024xf32, #tpu.memory_space<vmem>>, vector<1x256xf32>
    %36 = vector.broadcast %35 : vector<1x256xf32> to vector<16x256xf32>
    %37 = arith.addf %34, %36 : vector<16x256xf32>
    %cst_29 = arith.constant 0.000000e+00 : f32
    %38 = vector.broadcast %cst_29 : f32 to vector<16x256xf32>
    %39 = arith.maximumf %37, %38 : vector<16x256xf32>
    %40 = vector.shape_cast %39 : vector<16x256xf32> to vector<1x16x256xf32>
    %cst_30 = arith.constant dense<0xFF800000> : vector<1x256xf32>
    %41 = vector.multi_reduction <maximumf>, %40, %cst_30 [1] : vector<1x16x256xf32> to vector<1x256xf32>
    %c0_31 = arith.constant 0 : index
    %c256_32 = arith.constant 256 : index
    %42 = vector.load %arg16[%c0_31, %c256_32] : memref<1x1024xf32, #tpu.memory_space<vmem>>, vector<1x256xf32>
    %43 = arith.maximumf %42, %41 : vector<1x256xf32>
    %c0_33 = arith.constant 0 : index
    %c256_34 = arith.constant 256 : index
    %44 = vector.load %arg16[%c0_33, %c256_34] : memref<1x1024xf32, #tpu.memory_space<vmem>>, vector<1x256xf32>
    tpu.vector_store %arg16[%c0_33, %c256_34], %43 {strides = array<i32>} : memref<1x1024xf32, #tpu.memory_space<vmem>>, vector<1x256xf32>,
    %c0_35 = arith.constant 0 : index
    %c512 = arith.constant 512 : index
    %45 = vector.load %arg7[%c0_35, %c512] : memref<128x1024xbf16, #tpu.memory_space<vmem>>, vector<128x256xbf16>
    %cst_36 = arith.constant dense<0.000000e+00> : vector<16x256xf32>
    %46 = tpu.matmul %20, %45, %cst_36 {dimension_numbers = #tpu.dot_dimension_numbers<[1], [0], [0], [1], [0, 0, 1, 1], [], []>} : vector<16x128xbf16>, vector<128x256xbf16>, vector<16x256xf32> -> vector<16x256xf32>
    %c0_37 = arith.constant 0 : index
    %c512_38 = arith.constant 512 : index
    %47 = vector.load %arg8[%c0_37, %c512_38] : memref<1x1024xf32, #tpu.memory_space<vmem>>, vector<1x256xf32>
    %48 = vector.broadcast %47 : vector<1x256xf32> to vector<16x256xf32>
    %49 = arith.addf %46, %48 : vector<16x256xf32>
    %cst_39 = arith.constant 0.000000e+00 : f32
    %50 = vector.broadcast %cst_39 : f32 to vector<16x256xf32>
    %51 = arith.maximumf %49, %50 : vector<16x256xf32>
    %52 = vector.shape_cast %51 : vector<16x256xf32> to vector<1x16x256xf32>
    %cst_40 = arith.constant dense<0xFF800000> : vector<1x256xf32>
    %53 = vector.multi_reduction <maximumf>, %52, %cst_40 [1] : vector<1x16x256xf32> to vector<1x256xf32>
    %c0_41 = arith.constant 0 : index
    %c512_42 = arith.constant 512 : index
    %54 = vector.load %arg16[%c0_41, %c512_42] : memref<1x1024xf32, #tpu.memory_space<vmem>>, vector<1x256xf32>
    %55 = arith.maximumf %54, %53 : vector<1x256xf32>
    %c0_43 = arith.constant 0 : index
    %c512_44 = arith.constant 512 : index
    %56 = vector.load %arg16[%c0_43, %c512_44] : memref<1x1024xf32, #tpu.memory_space<vmem>>, vector<1x256xf32>
    tpu.vector_store %arg16[%c0_43, %c512_44], %55 {strides = array<i32>} : memref<1x1024xf32, #tpu.memory_space<vmem>>, vector<1x256xf32>,
    %c0_45 = arith.constant 0 : index
    %c768 = arith.constant 768 : index
    %57 = vector.load %arg7[%c0_45, %c768] : memref<128x1024xbf16, #tpu.memory_space<vmem>>, vector<128x256xbf16>
    %cst_46 = arith.constant dense<0.000000e+00> : vector<16x256xf32>
    %58 = tpu.matmul %20, %57, %cst_46 {dimension_numbers = #tpu.dot_dimension_numbers<[1], [0], [0], [1], [0, 0, 1, 1], [], []>} : vector<16x128xbf16>, vector<128x256xbf16>, vector<16x256xf32> -> vector<16x256xf32>
    %c0_47 = arith.constant 0 : index
    %c768_48 = arith.constant 768 : index
    %59 = vector.load %arg8[%c0_47, %c768_48] : memref<1x1024xf32, #tpu.memory_space<vmem>>, vector<1x256xf32>
    %60 = vector.broadcast %59 : vector<1x256xf32> to vector<16x256xf32>
    %61 = arith.addf %58, %60 : vector<16x256xf32>
    %cst_49 = arith.constant 0.000000e+00 : f32
    %62 = vector.broadcast %cst_49 : f32 to vector<16x256xf32>
    %63 = arith.maximumf %61, %62 : vector<16x256xf32>
    %64 = vector.shape_cast %63 : vector<16x256xf32> to vector<1x16x256xf32>
    %cst_50 = arith.constant dense<0xFF800000> : vector<1x256xf32>
    %65 = vector.multi_reduction <maximumf>, %64, %cst_50 [1] : vector<1x16x256xf32> to vector<1x256xf32>
    %c0_51 = arith.constant 0 : index
    %c768_52 = arith.constant 768 : index
    %66 = vector.load %arg16[%c0_51, %c768_52] : memref<1x1024xf32, #tpu.memory_space<vmem>>, vector<1x256xf32>
    %67 = arith.maximumf %66, %65 : vector<1x256xf32>
    %c0_53 = arith.constant 0 : index
    %c768_54 = arith.constant 768 : index
    %68 = vector.load %arg16[%c0_53, %c768_54] : memref<1x1024xf32, #tpu.memory_space<vmem>>, vector<1x256xf32>
    tpu.vector_store %arg16[%c0_53, %c768_54], %67 {strides = array<i32>} : memref<1x1024xf32, #tpu.memory_space<vmem>>, vector<1x256xf32>,
    %c0_i32_55 = arith.constant 0 : i32
    %69 = arith.cmpi eq, %arg1, %c0_i32_55 : i32
    %70 = arith.extui %69 : i1 to i32
    %c0_i32_56 = arith.constant 0 : i32
    %71 = arith.cmpi ne, %70, %c0_i32_56 : i32
    scf.if %71 {
      %c0_57 = arith.constant 0 : index
      %c0_58 = arith.constant 0 : index
      %72 = vector.load %arg16[%c0_57, %c0_58] : memref<1x1024xf32, #tpu.memory_space<vmem>>, vector<1x1024xf32>
      %73 = arith.truncf %72 : vector<1x1024xf32> to vector<1x1024xbf16>
      %c0_59 = arith.constant 0 : index
      %c0_60 = arith.constant 0 : index
      %74 = vector.load %arg9[%c0_59, %c0_60] : memref<1024x512xbf16, #tpu.memory_space<vmem>>, vector<1024x512xbf16>
      %cst_61 = arith.constant dense<0.000000e+00> : vector<1x512xf32>
      %75 = tpu.matmul %73, %74, %cst_61 {dimension_numbers = #tpu.dot_dimension_numbers<[1], [0], [0], [1], [0, 0, 1, 1], [], []>} : vector<1x1024xbf16>, vector<1024x512xbf16>, vector<1x512xf32> -> vector<1x512xf32>
      %c0_62 = arith.constant 0 : index
      %c0_63 = arith.constant 0 : index
      %76 = vector.load %arg10[%c0_62, %c0_63] : memref<1x512xf32, #tpu.memory_space<vmem>>, vector<1x512xf32>
      %77 = arith.addf %75, %76 : vector<1x512xf32>
      %cst_64 = arith.constant 0.000000e+00 : f32
      %78 = vector.broadcast %cst_64 : f32 to vector<1x512xf32>
      %79 = arith.maximumf %77, %78 : vector<1x512xf32>
      %80 = arith.truncf %79 : vector<1x512xf32> to vector<1x512xbf16>
      %c0_65 = arith.constant 0 : index
      %c0_66 = arith.constant 0 : index
      %81 = vector.load %arg11[%c0_65, %c0_66] : memref<512x256xbf16, #tpu.memory_space<vmem>>, vector<512x256xbf16>
      %cst_67 = arith.constant dense<0.000000e+00> : vector<1x256xf32>
      %82 = tpu.matmul %80, %81, %cst_67 {dimension_numbers = #tpu.dot_dimension_numbers<[1], [0], [0], [1], [0, 0, 1, 1], [], []>} : vector<1x512xbf16>, vector<512x256xbf16>, vector<1x256xf32> -> vector<1x256xf32>
      %c0_68 = arith.constant 0 : index
      %c0_69 = arith.constant 0 : index
      %83 = vector.load %arg12[%c0_68, %c0_69] : memref<1x256xf32, #tpu.memory_space<vmem>>, vector<1x256xf32>
      %84 = arith.addf %82, %83 : vector<1x256xf32>
      %cst_70 = arith.constant 0.000000e+00 : f32
      %85 = vector.broadcast %cst_70 : f32 to vector<1x256xf32>
      %86 = arith.maximumf %84, %85 : vector<1x256xf32>
      %87 = arith.truncf %86 : vector<1x256xf32> to vector<1x256xbf16>
      %c0_71 = arith.constant 0 : index
      %c0_72 = arith.constant 0 : index
      %88 = vector.load %arg13[%c0_71, %c0_72] : memref<256x169xbf16, #tpu.memory_space<vmem>>, vector<256x169xbf16>
      %cst_73 = arith.constant dense<0.000000e+00> : vector<1x169xf32>
      %89 = tpu.matmul %87, %88, %cst_73 {dimension_numbers = #tpu.dot_dimension_numbers<[1], [0], [0], [1], [0, 0, 1, 1], [], []>} : vector<1x256xbf16>, vector<256x169xbf16>, vector<1x169xf32> -> vector<1x169xf32>
      %c0_74 = arith.constant 0 : index
      %c0_75 = arith.constant 0 : index
      %90 = vector.load %arg14[%c0_74, %c0_75] : memref<1x169xf32, #tpu.memory_space<vmem>>, vector<1x169xf32>
      %91 = arith.addf %89, %90 : vector<1x169xf32>
      %c0_76 = arith.constant 0 : index
      %c0_77 = arith.constant 0 : index
      %c0_78 = arith.constant 0 : index
      %92 = vector.load %arg15[%c0_76, %c0_77, %c0_78] : memref<1x1x169xf32, #tpu.memory_space<vmem>>, vector<1x1x169xf32>
      %93 = vector.shape_cast %92 : vector<1x1x169xf32> to vector<1x169xf32>
      %94 = vector.shape_cast %91 : vector<1x169xf32> to vector<1x1x169xf32>
      tpu.vector_store %arg15[%c0_76, %c0_77, %c0_78], %94 {strides = array<i32>} : memref<1x1x169xf32, #tpu.memory_space<vmem>>, vector<1x1x169xf32>,
    } else {
    }
    return
  }
  func.func @transform_0(%arg0: i32, %arg1: i32) -> (i32, i32, i32) {
    %c0_i32 = arith.constant 0 : i32
    %c0_i32_0 = arith.constant 0 : i32
    return %arg0, %arg1, %c0_i32 : i32, i32, i32
  }
  func.func @transform_1(%arg0: i32, %arg1: i32) -> (i32, i32) {
    %c0_i32 = arith.constant 0 : i32
    %c0_i32_0 = arith.constant 0 : i32
    %c0_i32_1 = arith.constant 0 : i32
    return %c0_i32, %c0_i32_0 : i32, i32
  }
  func.func @transform_2(%arg0: i32, %arg1: i32) -> (i32, i32) {
    %c0_i32 = arith.constant 0 : i32
    %c0_i32_0 = arith.constant 0 : i32
    %c0_i32_1 = arith.constant 0 : i32
    return %c0_i32, %c0_i32_0 : i32, i32
  }
  func.func @transform_3(%arg0: i32, %arg1: i32) -> (i32, i32) {
    %c0_i32 = arith.constant 0 : i32
    %c0_i32_0 = arith.constant 0 : i32
    %c0_i32_1 = arith.constant 0 : i32
    return %c0_i32, %c0_i32_0 : i32, i32
  }
  func.func @transform_4(%arg0: i32, %arg1: i32) -> (i32, i32) {
    %c0_i32 = arith.constant 0 : i32
    %c0_i32_0 = arith.constant 0 : i32
    %c0_i32_1 = arith.constant 0 : i32
    return %c0_i32, %c0_i32_0 : i32, i32
  }
  func.func @transform_5(%arg0: i32, %arg1: i32) -> (i32, i32) {
    %c0_i32 = arith.constant 0 : i32
    %c0_i32_0 = arith.constant 0 : i32
    %c0_i32_1 = arith.constant 0 : i32
    return %c0_i32, %c0_i32_0 : i32, i32
  }
  func.func @transform_6(%arg0: i32, %arg1: i32) -> (i32, i32) {
    %c0_i32 = arith.constant 0 : i32
    %c0_i32_0 = arith.constant 0 : i32
    %c0_i32_1 = arith.constant 0 : i32
    return %c0_i32, %c0_i32_0 : i32, i32
  }
  func.func @transform_7(%arg0: i32, %arg1: i32) -> (i32, i32) {
    %c0_i32 = arith.constant 0 : i32
    %c0_i32_0 = arith.constant 0 : i32
    %c0_i32_1 = arith.constant 0 : i32
    return %c0_i32, %c0_i32_0 : i32, i32
  }
  func.func @transform_8(%arg0: i32, %arg1: i32) -> (i32, i32) {
    %c0_i32 = arith.constant 0 : i32
    %c0_i32_0 = arith.constant 0 : i32
    %c0_i32_1 = arith.constant 0 : i32
    return %c0_i32, %c0_i32_0 : i32, i32
  }
  func.func @transform_9(%arg0: i32, %arg1: i32) -> (i32, i32) {
    %c0_i32 = arith.constant 0 : i32
    %c0_i32_0 = arith.constant 0 : i32
    %c0_i32_1 = arith.constant 0 : i32
    return %c0_i32, %c0_i32_0 : i32, i32
  }
  func.func @transform_10(%arg0: i32, %arg1: i32) -> (i32, i32) {
    %c0_i32 = arith.constant 0 : i32
    %c0_i32_0 = arith.constant 0 : i32
    %c0_i32_1 = arith.constant 0 : i32
    return %c0_i32, %c0_i32_0 : i32, i32
  }
  func.func @transform_11(%arg0: i32, %arg1: i32) -> (i32, i32) {
    %c0_i32 = arith.constant 0 : i32
    %c0_i32_0 = arith.constant 0 : i32
    %c0_i32_1 = arith.constant 0 : i32
    return %c0_i32, %c0_i32_0 : i32, i32
  }
  func.func @transform_12(%arg0: i32, %arg1: i32) -> (i32, i32) {
    %c0_i32 = arith.constant 0 : i32
    %c0_i32_0 = arith.constant 0 : i32
    %c0_i32_1 = arith.constant 0 : i32
    return %c0_i32, %c0_i32_0 : i32, i32
  }
  func.func @transform_13(%arg0: i32, %arg1: i32) -> (i32, i32, i32) {
    %c0_i32 = arith.constant 0 : i32
    %c0_i32_0 = arith.constant 0 : i32
    %c0_i32_1 = arith.constant 0 : i32
    return %arg0, %c0_i32, %c0_i32_0 : i32, i32, i32
  }
}

</mosaic_0001>

<llo_original>
// kernel: tpu_custom_call.1
$region0: #{tpu_custom_call.1}
  #allocation0 [shape = 'u32[]', space=smem, size = 0x4, offset = 0x4, fixed_abs, tag = 'smem constant byte address 0x4 - core index']
  #allocation1 [shape = 'u32[144,128]{1,0:T(1,128)}', space=vmem, size = 0x12000, scoped, tag = 'internal scratch']
  #allocation2 [shape = 'f32[1,1024]{1,0:T(1,128)}', space=vmem, size = 0x1000, scoped, tag = 'scratch operand']
  %s0 = inlined_call_operand.vmem [shape: bf16[2,16,13], index: 0, kind: input, shape index: {}]
  %s1 = inlined_call_operand.vmem [shape: bf16[13,64], index: 1, kind: input, shape index: {}]
  %s2 = inlined_call_operand.vmem [shape: f32[1,64], index: 2, kind: input, shape index: {}]
  %s3 = inlined_call_operand.vmem [shape: bf16[64,128], index: 3, kind: input, shape index: {}]
  %s4 = inlined_call_operand.vmem [shape: f32[1,128], index: 4, kind: input, shape index: {}]
  %s5 = inlined_call_operand.hbm [shape: bf16[128,1024], index: 5, kind: input, shape index: {}]
  %s6 = inlined_call_operand.vmem [shape: f32[1,1024], index: 6, kind: input, shape index: {}]
  %s7 = inlined_call_operand.hbm [shape: bf16[1024,512], index: 7, kind: input, shape index: {}]
  %s8 = inlined_call_operand.vmem [shape: f32[1,512], index: 8, kind: input, shape index: {}]
  %s9 = inlined_call_operand.hbm [shape: bf16[512,256], index: 9, kind: input, shape index: {}]
  %s10 = inlined_call_operand.vmem [shape: f32[1,256], index: 10, kind: input, shape index: {}]
  %s11 = inlined_call_operand.vmem [shape: bf16[256,169], index: 11, kind: input, shape index: {}]
  %s12 = inlined_call_operand.vmem [shape: f32[1,169], index: 12, kind: input, shape index: {}]
  %s13 = inlined_call_operand.hbm [shape: f32[2,1,169], index: 13, kind: output, shape index: {}]
  %s14 = sld [smem:[#allocation0]]
  $region105: #{tpu_custom_call.1} parent=0
    _
  %s16 = ssub.s32 1, %s14
  %s17 = scalar_select 0, %s16, %s14
  $region1: #{tpu_custom_call.1} parent=0
    #allocation3 [shape = 'u8[262144]{0}', space=vmem, size = 0x40000, scoped, tag = 'input window, operand 5, single buffered']
    #allocation4 [shape = 's32[2]{0}', space=sflag, size = 0x8, scoped, tag = 'scoped memory for tpu_custom_call.1']
    #allocation5 [shape = 's32[2]{0}', space=sflag, size = 0x8, scoped, tag = 'scoped memory for tpu_custom_call.1']
    #allocation6 [shape = 'u8[1048576]{0}', space=vmem, size = 0x100000, scoped, tag = 'input window, operand 7, single buffered']
    #allocation7 [shape = 's32[1]{0}', space=sflag, size = 0x4, scoped, tag = 'scoped memory for tpu_custom_call.1']
    #allocation8 [shape = 'u8[262144]{0}', space=vmem, size = 0x40000, scoped, tag = 'input window, operand 9, single buffered']
    #allocation9 [shape = 'u8[2048]{0}', space=vmem, size = 0x800, scoped, tag = 'output window, operand 0']
    %18 = vsyncpa [#allocation4], 0
    %19 = vsyncpa [#allocation7], 0
    %20 = vsyncpa [#allocation5], 0
    %s21 = scalar_lea.sflag [#allocation5], 1
    %22 = vsyncpa %s21, 0
    loop: start=0, step=1, limit=4
    $region2: #{tpu_custom_call.1} parent=1 // loop_pre_header
      _
    $region3: #{tpu_custom_call.1} parent=1 // loop_header
      %s24 = sphi 0, %s28
      %p25 = scmp.ge.s32.totalorder %s24, 4
      %s31 = sphi 0, %s43
      %s32 = sphi 0, %s39
      %s33 = sphi 0, %s31
      %s34 = sphi 0, %s32
      %s35 = sphi 0, %s33
      %s36 = sphi 0, %s34
      %s48 = sphi 0, %s50
      %s51 = sphi 0, %s48
      %s52 = sphi 0, %s51
      %s68 = sphi 0, %s52
      %s72 = sphi 0, %s72
      %s74 = sphi 0, %s72
      %s75 = sphi 0, %s74
      %s89 = sphi 0, %s75
      %s93 = sphi 0, %s93
      %s95 = sphi 0, %s93
      %s96 = sphi 0, %s95
      %s110 = sphi 0, %s96
      %s114 = sphi 0, %s114
      %s116 = sphi 0, %s114
      %s117 = sphi 0, %s116
      %s131 = sphi 0, %s117
      %s135 = sphi 0, %s135
      %s137 = sphi 0, %s135
      %s138 = sphi 0, %s137
      %s152 = sphi 0, %s138
      %s156 = sphi 0, %s156
      %s158 = sphi 0, %s156
      %s159 = sphi 0, %s158
      %s173 = sphi 0, %s159
      %s177 = sphi 0, %s177
      %s179 = sphi 0, %s177
      %s180 = sphi 0, %s179
      %s194 = sphi 0, %s180
      %s198 = sphi 0, %s198
      %s200 = sphi 0, %s198
      %s201 = sphi 0, %s200
      %s215 = sphi 0, %s201
      %s219 = sphi 0, %s219
      %s221 = sphi 0, %s219
      %s222 = sphi 0, %s221
      %s236 = sphi 0, %s222
      %s240 = sphi 0, %s240
      %s242 = sphi 0, %s240
      %s243 = sphi 0, %s242
      %s257 = sphi 0, %s243
      %s261 = sphi 0, %s261
      %s263 = sphi 0, %s261
      %s264 = sphi 0, %s263
      %s278 = sphi 0, %s264
      %s282 = sphi 0, %s282
      %s284 = sphi 0, %s282
      %s285 = sphi 0, %s284
      %s299 = sphi 0, %s285
      %s303 = sphi 0, %s303
      %s305 = sphi 0, %s303
      %s306 = sphi 0, %s305
      %s320 = sphi 0, %s306
      %s326 = sphi 0, %s328
      %s329 = sphi 0, %s326
      %s330 = sphi 0, %s329
      %s346 = sphi 0, %s330
    $region4: #{tpu_custom_call.1} parent=1 // loop_header_branch
      %27 = sbr.rel (%p25) target = $region8
    $region5: #{tpu_custom_call.1} parent=1 // loop_body
      %s29 = ssub.s32 %s24, 1
      %s30 = ssub.s32 %s24, 2
      %s37 = sadd.s32 1, %s32
      %p38 = scmp.ge.s32.totalorder %s37, 1
      %s39 = scalar_select %p38, 0, %s37
      %s40 = sadd.s32 1, %s31
      %s41 = scalar_select %p38, %s40, %s31
      %p42 = scmp.ge.s32.totalorder %s41, 2
      %s43 = scalar_select %p42, 0, %s41
      %s44 = ssub.s32 %s31, %s43
      %s45 = ssub.s32 %s32, %s39
      %s46 = sor.u32 %s44, %s45
      %p47 = scmp.eq.s32.totalorder %s46, 0
      %s49 = sadd.s32 %s48, 1
      %s50 = scalar_select %p47, %s48, %s49
      %p53 = pneg %p47
      %p54 = scmp.eq.s32.totalorder %s24, 1
      %p55 = por %p53, %p54
      %p56 = scmp.ne.s32.totalorder %s48, %s51
      %p57 = scmp.eq.s32.totalorder %s24, 0
      %p58 = por %p56, %p57
      %p59 = scmp.ne.s32.totalorder %s48, %s51
      %p60 = scmp.eq.s32.totalorder %s29, 1
      %p61 = por %p59, %p60
      %p62 = scmp.ne.s32.totalorder %s51, %s52
      %p63 = scmp.eq.s32.totalorder %s29, 0
      %p64 = por %p62, %p63
      %p65 = scmp.ne.s32.totalorder %s51, %s52
      %p66 = scmp.eq.s32.totalorder %s30, 1
      %p67 = por %p65, %p66
      %p69 = scmp.ne.s32.totalorder %s52, %s68
      %p70 = scmp.eq.s32.totalorder %s30, 0
      %p71 = por %p69, %p70
      %s73 = sadd.s32 %s72, 1
      %p76 = scmp.eq.s32.totalorder %s24, 1
      %p77 = scmp.ne.s32.totalorder %s72, %s74
      %p78 = scmp.eq.s32.totalorder %s24, 0
      %p79 = por %p77, %p78
      %p80 = scmp.ne.s32.totalorder %s72, %s74
      %p81 = scmp.eq.s32.totalorder %s29, 1
      %p82 = por %p80, %p81
      %p83 = scmp.ne.s32.totalorder %s74, %s75
      %p84 = scmp.eq.s32.totalorder %s29, 0
      %p85 = por %p83, %p84
      %p86 = scmp.ne.s32.totalorder %s74, %s75
      %p87 = scmp.eq.s32.totalorder %s30, 1
      %p88 = por %p86, %p87
      %p90 = scmp.ne.s32.totalorder %s75, %s89
      %p91 = scmp.eq.s32.totalorder %s30, 0
      %p92 = por %p90, %p91
      %s94 = sadd.s32 %s93, 1
      %p97 = scmp.eq.s32.totalorder %s24, 1
      %p98 = scmp.ne.s32.totalorder %s93, %s95
      %p99 = scmp.eq.s32.totalorder %s24, 0
      %p100 = por %p98, %p99
      %p101 = scmp.ne.s32.totalorder %s93, %s95
      %p102 = scmp.eq.s32.totalorder %s29, 1
      %p103 = por %p101, %p102
      %p104 = scmp.ne.s32.totalorder %s95, %s96
      %p105 = scmp.eq.s32.totalorder %s29, 0
      %p106 = por %p104, %p105
      %p107 = scmp.ne.s32.totalorder %s95, %s96
      %p108 = scmp.eq.s32.totalorder %s30, 1
      %p109 = por %p107, %p108
      %p111 = scmp.ne.s32.totalorder %s96, %s110
      %p112 = scmp.eq.s32.totalorder %s30, 0
      %p113 = por %p111, %p112
      %s115 = sadd.s32 %s114, 1
      %p118 = scmp.eq.s32.totalorder %s24, 1
      %p119 = scmp.ne.s32.totalorder %s114, %s116
      %p120 = scmp.eq.s32.totalorder %s24, 0
      %p121 = por %p119, %p120
      %p122 = scmp.ne.s32.totalorder %s114, %s116
      %p123 = scmp.eq.s32.totalorder %s29, 1
      %p124 = por %p122, %p123
      %p125 = scmp.ne.s32.totalorder %s116, %s117
      %p126 = scmp.eq.s32.totalorder %s29, 0
      %p127 = por %p125, %p126
      %p128 = scmp.ne.s32.totalorder %s116, %s117
      %p129 = scmp.eq.s32.totalorder %s30, 1
      %p130 = por %p128, %p129
      %p132 = scmp.ne.s32.totalorder %s117, %s131
      %p133 = scmp.eq.s32.totalorder %s30, 0
      %p134 = por %p132, %p133
      %s136 = sadd.s32 %s135, 1
      %p139 = scmp.eq.s32.totalorder %s24, 1
      %p140 = scmp.ne.s32.totalorder %s135, %s137
      %p141 = scmp.eq.s32.totalorder %s24, 0
      %p142 = por %p140, %p141
      %p143 = scmp.ne.s32.totalorder %s135, %s137
      %p144 = scmp.eq.s32.totalorder %s29, 1
      %p145 = por %p143, %p144
      %p146 = scmp.ne.s32.totalorder %s137, %s138
      %p147 = scmp.eq.s32.totalorder %s29, 0
      %p148 = por %p146, %p147
      %p149 = scmp.ne.s32.totalorder %s137, %s138
      %p150 = scmp.eq.s32.totalorder %s30, 1
      %p151 = por %p149, %p150
      %p153 = scmp.ne.s32.totalorder %s138, %s152
      %p154 = scmp.eq.s32.totalorder %s30, 0
      %p155 = por %p153, %p154
      %s157 = sadd.s32 %s156, 1
      %p160 = scmp.eq.s32.totalorder %s24, 1
      %p161 = scmp.ne.s32.totalorder %s156, %s158
      %p162 = scmp.eq.s32.totalorder %s24, 0
      %p163 = por %p161, %p162
      %p164 = scmp.ne.s32.totalorder %s156, %s158
      %p165 = scmp.eq.s32.totalorder %s29, 1
      %p166 = por %p164, %p165
      %p167 = scmp.ne.s32.totalorder %s158, %s159
      %p168 = scmp.eq.s32.totalorder %s29, 0
      %p169 = por %p167, %p168
      %p170 = scmp.ne.s32.totalorder %s158, %s159
      %p171 = scmp.eq.s32.totalorder %s30, 1
      %p172 = por %p170, %p171
      %p174 = scmp.ne.s32.totalorder %s159, %s173
      %p175 = scmp.eq.s32.totalorder %s30, 0
      %p176 = por %p174, %p175
      %s178 = sadd.s32 %s177, 1
      %p181 = scmp.eq.s32.totalorder %s24, 1
      %p182 = scmp.ne.s32.totalorder %s177, %s179
      %p183 = scmp.eq.s32.totalorder %s24, 0
      %p184 = por %p182, %p183
      %p185 = scmp.ne.s32.totalorder %s177, %s179
      %p186 = scmp.eq.s32.totalorder %s29, 1
      %p187 = por %p185, %p186
      %p188 = scmp.ne.s32.totalorder %s179, %s180
      %p189 = scmp.eq.s32.totalorder %s29, 0
      %p190 = por %p188, %p189
      %p191 = scmp.ne.s32.totalorder %s179, %s180
      %p192 = scmp.eq.s32.totalorder %s30, 1
      %p193 = por %p191, %p192
      %p195 = scmp.ne.s32.totalorder %s180, %s194
      %p196 = scmp.eq.s32.totalorder %s30, 0
      %p197 = por %p195, %p196
      %s199 = sadd.s32 %s198, 1
      %p202 = scmp.eq.s32.totalorder %s24, 1
      %p203 = scmp.ne.s32.totalorder %s198, %s200
      %p204 = scmp.eq.s32.totalorder %s24, 0
      %p205 = por %p203, %p204
      %p206 = scmp.ne.s32.totalorder %s198, %s200
      %p207 = scmp.eq.s32.totalorder %s29, 1
      %p208 = por %p206, %p207
      %p209 = scmp.ne.s32.totalorder %s200, %s201
      %p210 = scmp.eq.s32.totalorder %s29, 0
      %p211 = por %p209, %p210
      %p212 = scmp.ne.s32.totalorder %s200, %s201
      %p213 = scmp.eq.s32.totalorder %s30, 1
      %p214 = por %p212, %p213
      %p216 = scmp.ne.s32.totalorder %s201, %s215
      %p217 = scmp.eq.s32.totalorder %s30, 0
      %p218 = por %p216, %p217
      %s220 = sadd.s32 %s219, 1
      %p223 = scmp.eq.s32.totalorder %s24, 1
      %p224 = scmp.ne.s32.totalorder %s219, %s221
      %p225 = scmp.eq.s32.totalorder %s24, 0
      %p226 = por %p224, %p225
      %p227 = scmp.ne.s32.totalorder %s219, %s221
      %p228 = scmp.eq.s32.totalorder %s29, 1
      %p229 = por %p227, %p228
      %p230 = scmp.ne.s32.totalorder %s221, %s222
      %p231 = scmp.eq.s32.totalorder %s29, 0
      %p232 = por %p230, %p231
      %p233 = scmp.ne.s32.totalorder %s221, %s222
      %p234 = scmp.eq.s32.totalorder %s30, 1
      %p235 = por %p233, %p234
      %p237 = scmp.ne.s32.totalorder %s222, %s236
      %p238 = scmp.eq.s32.totalorder %s30, 0
      %p239 = por %p237, %p238
      %s241 = sadd.s32 %s240, 1
      %p244 = scmp.eq.s32.totalorder %s24, 1
      %p245 = scmp.ne.s32.totalorder %s240, %s242
      %p246 = scmp.eq.s32.totalorder %s24, 0
      %p247 = por %p245, %p246
      %p248 = scmp.ne.s32.totalorder %s240, %s242
      %p249 = scmp.eq.s32.totalorder %s29, 1
      %p250 = por %p248, %p249
      %p251 = scmp.ne.s32.totalorder %s242, %s243
      %p252 = scmp.eq.s32.totalorder %s29, 0
      %p253 = por %p251, %p252
      %p254 = scmp.ne.s32.totalorder %s242, %s243
      %p255 = scmp.eq.s32.totalorder %s30, 1
      %p256 = por %p254, %p255
      %p258 = scmp.ne.s32.totalorder %s243, %s257
      %p259 = scmp.eq.s32.totalorder %s30, 0
      %p260 = por %p258, %p259
      %s262 = sadd.s32 %s261, 1
      %p265 = scmp.eq.s32.totalorder %s24, 1
      %p266 = scmp.ne.s32.totalorder %s261, %s263
      %p267 = scmp.eq.s32.totalorder %s24, 0
      %p268 = por %p266, %p267
      %p269 = scmp.ne.s32.totalorder %s261, %s263
      %p270 = scmp.eq.s32.totalorder %s29, 1
      %p271 = por %p269, %p270
      %p272 = scmp.ne.s32.totalorder %s263, %s264
      %p273 = scmp.eq.s32.totalorder %s29, 0
      %p274 = por %p272, %p273
      %p275 = scmp.ne.s32.totalorder %s263, %s264
      %p276 = scmp.eq.s32.totalorder %s30, 1
      %p277 = por %p275, %p276
      %p279 = scmp.ne.s32.totalorder %s264, %s278
      %p280 = scmp.eq.s32.totalorder %s30, 0
      %p281 = por %p279, %p280
      %s283 = sadd.s32 %s282, 1
      %p286 = scmp.eq.s32.totalorder %s24, 1
      %p287 = scmp.ne.s32.totalorder %s282, %s284
      %p288 = scmp.eq.s32.totalorder %s24, 0
      %p289 = por %p287, %p288
      %p290 = scmp.ne.s32.totalorder %s282, %s284
      %p291 = scmp.eq.s32.totalorder %s29, 1
      %p292 = por %p290, %p291
      %p293 = scmp.ne.s32.totalorder %s284, %s285
      %p294 = scmp.eq.s32.totalorder %s29, 0
      %p295 = por %p293, %p294
      %p296 = scmp.ne.s32.totalorder %s284, %s285
      %p297 = scmp.eq.s32.totalorder %s30, 1
      %p298 = por %p296, %p297
      %p300 = scmp.ne.s32.totalorder %s285, %s299
      %p301 = scmp.eq.s32.totalorder %s30, 0
      %p302 = por %p300, %p301
      %s304 = sadd.s32 %s303, 1
      %p307 = scmp.eq.s32.totalorder %s24, 1
      %p308 = scmp.ne.s32.totalorder %s303, %s305
      %p309 = scmp.eq.s32.totalorder %s24, 0
      %p310 = por %p308, %p309
      %p311 = scmp.ne.s32.totalorder %s303, %s305
      %p312 = scmp.eq.s32.totalorder %s29, 1
      %p313 = por %p311, %p312
      %p314 = scmp.ne.s32.totalorder %s305, %s306
      %p315 = scmp.eq.s32.totalorder %s29, 0
      %p316 = por %p314, %p315
      %p317 = scmp.ne.s32.totalorder %s305, %s306
      %p318 = scmp.eq.s32.totalorder %s30, 1
      %p319 = por %p317, %p318
      %p321 = scmp.ne.s32.totalorder %s306, %s320
      %p322 = scmp.eq.s32.totalorder %s30, 0
      %p323 = por %p321, %p322
      %s324 = ssub.s32 %s31, %s43
      %p325 = scmp.eq.s32.totalorder %s324, 0
      %s327 = sadd.s32 %s326, 1
      %s328 = scalar_select %p325, %s326, %s327
      %p331 = pneg %p325
      %p332 = scmp.eq.s32.totalorder %s24, 1
      %p333 = por %p331, %p332
      %p334 = scmp.ne.s32.totalorder %s326, %s329
      %p335 = scmp.eq.s32.totalorder %s24, 0
      %p336 = por %p334, %p335
      %p337 = scmp.ne.s32.totalorder %s326, %s329
      %p338 = scmp.eq.s32.totalorder %s29, 1
      %p339 = por %p337, %p338
      %p340 = scmp.ne.s32.totalorder %s329, %s330
      %p341 = scmp.eq.s32.totalorder %s29, 0
      %p342 = por %p340, %p341
      %p343 = scmp.ne.s32.totalorder %s329, %s330
      %p344 = scmp.eq.s32.totalorder %s30, 1
      %p345 = por %p343, %p344
      %p347 = scmp.ne.s32.totalorder %s330, %s346
      %p348 = scmp.eq.s32.totalorder %s30, 0
      %p349 = por %p347, %p348
      %p350 = scmp.le.s32.totalorder 1, %s24
      %p351 = scmp.lt.s32.totalorder %s24, 3
      %p352 = pnand %p350, %p351
      %p353 = pneg %p352
      // Predicated region
      $region9: #{tpu_custom_call.1} parent=5 // pred_check
        _
      $region10: #{tpu_custom_call.1} parent=5 // pred_check_branch
        %355 = sbr.rel (%p352) target = $region12
      $region11: #{tpu_custom_call.1} parent=5 // pred_region
        %s356 = ssub.s32 %s24, 1
        // Predicated region
        $region13: #{tpu_custom_call.1} parent=11 // pred_check
          %p357 = pneg %p85
        $region14: #{tpu_custom_call.1} parent=11 // pred_check_branch
          %359 = sbr.rel (%p357) target = $region16
        $region15: #{tpu_custom_call.1} parent=11 // pred_region
          _
        $region16: #{tpu_custom_call.1} parent=11 // pred_fallthru
          _
        // Predicated region
        $region17: #{tpu_custom_call.1} parent=11 // pred_check
          %p360 = pneg %p106
        $region18: #{tpu_custom_call.1} parent=11 // pred_check_branch
          %362 = sbr.rel (%p360) target = $region20
        $region19: #{tpu_custom_call.1} parent=11 // pred_region
          _
        $region20: #{tpu_custom_call.1} parent=11 // pred_fallthru
          _
        // Predicated region
        $region21: #{tpu_custom_call.1} parent=11 // pred_check
          %p363 = pneg %p127
        $region22: #{tpu_custom_call.1} parent=11 // pred_check_branch
          %365 = sbr.rel (%p363) target = $region24
        $region23: #{tpu_custom_call.1} parent=11 // pred_region
          _
        $region24: #{tpu_custom_call.1} parent=11 // pred_fallthru
          _
        // Predicated region
        $region25: #{tpu_custom_call.1} parent=11 // pred_check
          %p366 = pneg %p148
        $region26: #{tpu_custom_call.1} parent=11 // pred_check_branch
          %368 = sbr.rel (%p366) target = $region28
        $region27: #{tpu_custom_call.1} parent=11 // pred_region
          _
        $region28: #{tpu_custom_call.1} parent=11 // pred_fallthru
          _
        // Predicated region
        $region29: #{tpu_custom_call.1} parent=11 // pred_check
          %p369 = pneg %p169
        $region30: #{tpu_custom_call.1} parent=11 // pred_check_branch
          %371 = sbr.rel (%p369) target = $region32
        $region31: #{tpu_custom_call.1} parent=11 // pred_region
          %s373 = ssub.s32 8192, 8192
          %374 = vsyncadd [#allocation4], %s373
          %s375 = sshll.u32 [#allocation3], 4
          %s376 = int_to_ptr.vmem [resolvable:$true] %s375
          %381 = dma.hbm_to_vmem [thread:$0]  %s5, 8192, %s376, [#allocation4], 512, 512, 32
        $region32: #{tpu_custom_call.1} parent=11 // pred_fallthru
          _
        // Predicated region
        $region33: #{tpu_custom_call.1} parent=11 // pred_check
          %p382 = pneg %p190
        $region34: #{tpu_custom_call.1} parent=11 // pred_check_branch
          %384 = sbr.rel (%p382) target = $region36
        $region35: #{tpu_custom_call.1} parent=11 // pred_region
          _
        $region36: #{tpu_custom_call.1} parent=11 // pred_fallthru
          _
        // Predicated region
        $region37: #{tpu_custom_call.1} parent=11 // pred_check
          %p385 = pneg %p211
        $region38: #{tpu_custom_call.1} parent=11 // pred_check_branch
          %387 = sbr.rel (%p385) target = $region40
        $region39: #{tpu_custom_call.1} parent=11 // pred_region
          %s389 = ssub.s32 32768, 32768
          %390 = vsyncadd [#allocation7], %s389
          %s391 = sshll.u32 [#allocation6], 4
          %s392 = int_to_ptr.vmem [resolvable:$true] %s391
          %397 = dma.hbm_to_vmem [thread:$0]  %s7, 32768, %s392, [#allocation7], 256, 256, 16
        $region40: #{tpu_custom_call.1} parent=11 // pred_fallthru
          _
        // Predicated region
        $region41: #{tpu_custom_call.1} parent=11 // pred_check
          %p398 = pneg %p232
        $region42: #{tpu_custom_call.1} parent=11 // pred_check_branch
          %400 = sbr.rel (%p398) target = $region44
        $region43: #{tpu_custom_call.1} parent=11 // pred_region
          _
        $region44: #{tpu_custom_call.1} parent=11 // pred_fallthru
          _
        // Predicated region
        $region45: #{tpu_custom_call.1} parent=11 // pred_check
          %p401 = pneg %p253
        $region46: #{tpu_custom_call.1} parent=11 // pred_check_branch
          %403 = sbr.rel (%p401) target = $region48
        $region47: #{tpu_custom_call.1} parent=11 // pred_region
          %s405 = ssub.s32 8192, 8192
          %406 = vsyncadd [#allocation7], %s405
          %s407 = sshll.u32 [#allocation8], 4
          %s408 = int_to_ptr.vmem [resolvable:$true] %s407
          %413 = dma.hbm_to_vmem [thread:$0]  %s9, 8192, %s408, [#allocation7], 128, 128, 8
        $region48: #{tpu_custom_call.1} parent=11 // pred_fallthru
          _
        // Predicated region
        $region49: #{tpu_custom_call.1} parent=11 // pred_check
          %p414 = pneg %p274
        $region50: #{tpu_custom_call.1} parent=11 // pred_check_branch
          %416 = sbr.rel (%p414) target = $region52
        $region51: #{tpu_custom_call.1} parent=11 // pred_region
          _
        $region52: #{tpu_custom_call.1} parent=11 // pred_fallthru
          _
        // Predicated region
        $region53: #{tpu_custom_call.1} parent=11 // pred_check
          %p417 = pneg %p295
        $region54: #{tpu_custom_call.1} parent=11 // pred_check_branch
          %419 = sbr.rel (%p417) target = $region56
        $region55: #{tpu_custom_call.1} parent=11 // pred_region
          _
        $region56: #{tpu_custom_call.1} parent=11 // pred_fallthru
          _
        // Predicated region
        $region57: #{tpu_custom_call.1} parent=11 // pred_check
          %p420 = pneg %p316
        $region58: #{tpu_custom_call.1} parent=11 // pred_check_branch
          %422 = sbr.rel (%p420) target = $region60
        $region59: #{tpu_custom_call.1} parent=11 // pred_region
          _
        $region60: #{tpu_custom_call.1} parent=11 // pred_fallthru
          _
      $region12: #{tpu_custom_call.1} parent=5 // pred_fallthru
        _
      %p423 = scmp.lt.s32.totalorder %s24, 2
      // Predicated region
      $region61: #{tpu_custom_call.1} parent=5 // pred_check
        %p424 = pneg %p423
      $region62: #{tpu_custom_call.1} parent=5 // pred_check_branch
        %426 = sbr.rel (%p424) target = $region64
      $region63: #{tpu_custom_call.1} parent=5 // pred_region
        // Predicated region
        $region65: #{tpu_custom_call.1} parent=63 // pred_check
          %p427 = pneg %p58
        $region66: #{tpu_custom_call.1} parent=63 // pred_check_branch
          %429 = sbr.rel (%p427) target = $region68
        $region67: #{tpu_custom_call.1} parent=63 // pred_region
          %s430 = smul.u32 2, %s32
          %p431 = scmp.lt.s32.totalorder %s31, 1
          %s432 = scalar_select %p431, %s31, 1
          %p433 = scmp.lt.s32.totalorder %s430, 1
          %s434 = scalar_select %p433, %s430, 1
          %s435 = smul.addr %s432, 2
          %s436 = sadd.s32 %s434, %s435
          %s437 = smul.addr %s436, 4
          %s438 = scalar_lea.vmem %s0, %s437
          %s439 = smul.u32 2, %s32
        $region68: #{tpu_custom_call.1} parent=63 // pred_fallthru
          _
      $region64: #{tpu_custom_call.1} parent=5 // pred_fallthru
        _
      %p440 = scmp.le.s32.totalorder 1, %s24
      %p441 = scmp.lt.s32.totalorder %s24, 3
      %p442 = pnand %p440, %p441
      %p443 = pneg %p442
      // Predicated region
      $region69: #{tpu_custom_call.1} parent=5 // pred_check
        _
      $region70: #{tpu_custom_call.1} parent=5 // pred_check_branch
        %445 = sbr.rel (%p442) target = $region72
      $region71: #{tpu_custom_call.1} parent=5 // pred_region
        %s446 = ssub.s32 %s24, 1
        // Predicated region
        $region73: #{tpu_custom_call.1} parent=71 // pred_check
          %p447 = pneg %p169
        $region74: #{tpu_custom_call.1} parent=71 // pred_check_branch
          %449 = sbr.rel (%p447) target = $region76
        $region75: #{tpu_custom_call.1} parent=71 // pred_region
          %450 = dma.done [#allocation4], 8192
        $region76: #{tpu_custom_call.1} parent=71 // pred_fallthru
          _
        // Predicated region
        $region77: #{tpu_custom_call.1} parent=71 // pred_check
          %p451 = pneg %p211
        $region78: #{tpu_custom_call.1} parent=71 // pred_check_branch
          %453 = sbr.rel (%p451) target = $region80
        $region79: #{tpu_custom_call.1} parent=71 // pred_region
          %454 = dma.done [#allocation7], 32768
        $region80: #{tpu_custom_call.1} parent=71 // pred_fallthru
          _
        // Predicated region
        $region81: #{tpu_custom_call.1} parent=71 // pred_check
          %p455 = pneg %p253
        $region82: #{tpu_custom_call.1} parent=71 // pred_check_branch
          %457 = sbr.rel (%p455) target = $region84
        $region83: #{tpu_custom_call.1} parent=71 // pred_region
          %458 = dma.done [#allocation7], 8192
        $region84: #{tpu_custom_call.1} parent=71 // pred_fallthru
          _
        %s459 = smul.u32 2, %s34
        %p460 = scmp.lt.s32.totalorder %s33, 1
        %s461 = scalar_select %p460, %s33, 1
        %p462 = scmp.lt.s32.totalorder %s459, 1
        %s463 = scalar_select %p462, %s459, 1
        %s464 = smul.addr %s461, 2
        %s465 = sadd.s32 %s463, %s464
        %s466 = smul.addr %s465, 4
        %s467 = scalar_lea.vmem %s0, %s466
        %p468 = pneg %p64
        %p469 = pneg %p61
        %p470 = pneg %p85
        %p471 = pneg %p82
        %p472 = pneg %p106
        %p473 = pneg %p103
        %p474 = pneg %p127
        %p475 = pneg %p124
        %p476 = pneg %p148
        %p477 = pneg %p145
        %p478 = pneg %p169
        %p479 = pneg %p166
        %p480 = pneg %p190
        %p481 = pneg %p187
        %p482 = pneg %p211
        %p483 = pneg %p208
        %p484 = pneg %p232
        %p485 = pneg %p229
        %p486 = pneg %p253
        %p487 = pneg %p250
        %p488 = pneg %p274
        %p489 = pneg %p271
        %p490 = pneg %p295
        %p491 = pneg %p292
        %p492 = pneg %p316
        %p493 = pneg %p313
        %p494 = pneg %p342
        %p495 = pneg %p339
        %s496 = sand.u32 %s329, 1
        %s497 = scalar_lea.sflag [#allocation5], %s496
        %s498 = sand.u32 %s329, 1
        %s499 = smul.addr %s498, 2
        %s500 = scalar_lea.vmem [#allocation9], %s499
        %s501 = smul.u32 2, %s34
        %p502 = scmp.lt.s32.totalorder %s33, 1
        %s503 = scalar_select %p502, %s33, 1
        %p504 = scmp.lt.s32.totalorder %s501, 1
        %s505 = scalar_select %p504, %s501, 1
        %s506 = smul.addr %s503, 2
        %s507 = sadd.s32 %s505, %s506
        %s508 = smul.addr %s507, 4
        %s509 = scalar_lea.vmem %s0, %s508
        %s510 = smul.u32 2, %s34
        %p512 = scmp.eq.s32.totalorder %s34, 0
        // Predicated region
        $region85: #{tpu_custom_call.1} parent=71 // pred_check
          %p513 = pneg %p512
        $region86: #{tpu_custom_call.1} parent=71 // pred_check_branch
          %515 = sbr.rel (%p513) target = $region88
        $region87: #{tpu_custom_call.1} parent=71 // pred_region
          %516 = vst [vmem:[#allocation2] sm:$0xff] 0.0
        $region88: #{tpu_custom_call.1} parent=71 // pred_fallthru
          _
        %v517 = vld [vmem:[%s509] sm:$0xf]
        %v518 = vld [vmem:[%s509 + $0x4] sm:$0xf]
        %v519 = vld [vmem:[%s1] sm:$0xf]
        %v520 = vld [vmem:[%s1 + $0x4] sm:$0x7]
        %v521 = vld [vmem:[%s2] sm:$0x1]
        %v523 = vlaneseq
        %v524 = vshrl.u32 %v523, 7
        %v525 = vsub.s32 0, %v524
        %v526 = vrot.slane %v521, %v525
        %v530 = vunpack.c.l.b16 %v517
        %v531 = vunpack.c.l.b16 %v518
        %v532 = vpack.c.b16 %v531, %v530
        %v535 = vunpack.c.l.b16 %v519
        %v536 = vunpack.c.l.b16 %v520
        %v537 = vpack.c.b16 %v536, %v535
        %vm538 = vcmask 105472
        %v540 = vsel %vm538, %v532, 0
        %vm542 = vcmask 1045504
        %vm543 = vcmask 1046528
        %v544 = vsel %vm542, 4294967295, 65535
        %v545 = vsel %vm543, %v544, 0
        %v547 = vand.u32 %v537, %v545
        %549 = vmatprep.subr.bf16.mxu0 0
        %550 = vmatpush1.bf16.msra.mxu0 %v547
        %551 = vmatprep.subr.bf16.mxu0 0
        %552 = vmatpush1.bf16.msra.mxu0 0
        %553 = vmatprep.subr.bf16.mxu0 0
        %554 = vmatpush1.bf16.msra.mxu0 0
        %555 = vmatprep.subr.bf16.mxu0 0
        %556 = vmatpush1.bf16.msra.mxu0 0
        %557 = vmatprep.subr.bf16.mxu0 0
        %558 = vmatpush1.bf16.msra.mxu0 0
        %559 = vmatprep.subr.bf16.mxu0 0
        %560 = vmatpush1.bf16.msra.mxu0 0
        %561 = vmatprep.subr.bf16.mxu0 0
        %562 = vmatpush1.bf16.msra.mxu0 0
        %563 = vmatprep.subr.bf16.mxu0 0
        %564 = vmatpush1.bf16.msra.mxu0 0
        %565 = vmatprep.subr.bf16.mxu0 0
        %566 = vmatpush1.bf16.msra.mxu0 0
        %567 = vmatprep.subr.bf16.mxu0 0
        %568 = vmatpush1.bf16.msra.mxu0 0
        %569 = vmatprep.subr.bf16.mxu0 0
        %570 = vmatpush1.bf16.msra.mxu0 0
        %571 = vmatprep.subr.bf16.mxu0 0
        %572 = vmatpush1.bf16.msra.mxu0 0
        %573 = vmatprep.subr.bf16.mxu0 0
        %574 = vmatpush1.bf16.msra.mxu0 0
        %575 = vmatprep.subr.bf16.mxu0 0
        %576 = vmatpush1.bf16.msra.mxu0 0
        %577 = vmatprep.subr.bf16.mxu0 0
        %578 = vmatpush1.bf16.msra.mxu0 0
        %579 = vmatprep.subr.bf16.mxu0 0
        %580 = vmatpush1.bf16.msra.mxu0 0
        %581 = vmatprep.mubr.bf16.mxu0 0
        %582 = vmatmul.mubr.bf16.gmra.mrb[0].mxu0 %v540
        %v583 = vpop.f32.mrb[0].mxu0
        %v584 = vadd.f32 %v526, %v583
        %v585 = vpop.f32.mrb[0].mxu0
        %v586 = vpop.f32.mrb[0].mxu0
        %v587 = vadd.f32 %v526, %v586
        %v588 = vpop.f32.mrb[0].mxu0
        %589 = vdwg.mxu0
        %v590 = vmax.f32 %v584, 0.0
        %v591 = vmax.f32 %v587, 0.0
        %v592 = vpack.c.bf16 %v591, %v590
        %v593 = vld [vmem:[%s3] sm:$0xf]
        %v594 = vld [vmem:[%s3 + $0x4] sm:$0xf]
        %v595 = vld [vmem:[%s3 + $0x8] sm:$0xf]
        %v596 = vld [vmem:[%s3 + $0xc] sm:$0xf]
        %v597 = vld [vmem:[%s3 + $0x10] sm:$0xf]
        %v598 = vld [vmem:[%s3 + $0x14] sm:$0xf]
        %v599 = vld [vmem:[%s3 + $0x18] sm:$0xf]
        %v600 = vld [vmem:[%s3 + $0x1c] sm:$0xf]
        %v601 = vld [vmem:[%s4] sm:$0x1]
        %v603 = vlaneseq
        %v604 = vshrl.u32 %v603, 7
        %v605 = vsub.s32 0, %v604
        %v606 = vrot.slane %v601, %v605
        %v616 = vunpack.c.l.b16 %v593
        %v617 = vunpack.c.l.b16 %v594
        %v618 = vunpack.c.l.b16 %v595
        %v619 = vunpack.c.l.b16 %v596
        %v620 = vunpack.c.l.b16 %v597
        %v621 = vunpack.c.l.b16 %v598
        %v622 = vunpack.c.l.b16 %v599
        %v623 = vunpack.c.l.b16 %v600
        %v624 = vpack.c.b16 %v617, %v616
        %v625 = vpack.c.b16 %v619, %v618
        %v626 = vpack.c.b16 %v621, %v620
        %v627 = vpack.c.b16 %v623, %v622
        %vm632 = vcmask 523264
        %v634 = vsel %vm632, %v592, 0
        %636 = vmatprep.subr.bf16.mxu0 0
        %637 = vmatpush1.bf16.msra.mxu0 %v624
        %638 = vmatprep.subr.bf16.mxu0 0
        %639 = vmatpush1.bf16.msra.mxu0 %v625
        %640 = vmatprep.subr.bf16.mxu0 0
        %641 = vmatpush1.bf16.msra.mxu0 %v626
        %642 = vmatprep.subr.bf16.mxu0 0
        %643 = vmatpush1.bf16.msra.mxu0 %v627
        %644 = vmatprep.subr.bf16.mxu0 0
        %645 = vmatpush1.bf16.msra.mxu0 0
        %646 = vmatprep.subr.bf16.mxu0 0
        %647 = vmatpush1.bf16.msra.mxu0 0
        %648 = vmatprep.subr.bf16.mxu0 0
        %649 = vmatpush1.bf16.msra.mxu0 0
        %650 = vmatprep.subr.bf16.mxu0 0
        %651 = vmatpush1.bf16.msra.mxu0 0
        %652 = vmatprep.subr.bf16.mxu0 0
        %653 = vmatpush1.bf16.msra.mxu0 0
        %654 = vmatprep.subr.bf16.mxu0 0
        %655 = vmatpush1.bf16.msra.mxu0 0
        %656 = vmatprep.subr.bf16.mxu0 0
        %657 = vmatpush1.bf16.msra.mxu0 0
        %658 = vmatprep.subr.bf16.mxu0 0
        %659 = vmatpush1.bf16.msra.mxu0 0
        %660 = vmatprep.subr.bf16.mxu0 0
        %661 = vmatpush1.bf16.msra.mxu0 0
        %662 = vmatprep.subr.bf16.mxu0 0
        %663 = vmatpush1.bf16.msra.mxu0 0
        %664 = vmatprep.subr.bf16.mxu0 0
        %665 = vmatpush1.bf16.msra.mxu0 0
        %666 = vmatprep.subr.bf16.mxu0 0
        %667 = vmatpush1.bf16.msra.mxu0 0
        %668 = vmatprep.mubr.bf16.mxu0 0
        %669 = vmatmul.mubr.bf16.gmra.mrb[0].mxu0 %v634
        %v670 = vpop.f32.mrb[0].mxu0
        %v671 = vadd.f32 %v606, %v670
        %v672 = vpop.f32.mrb[0].mxu0
        %v673 = vpop.f32.mrb[0].mxu0
        %v674 = vadd.f32 %v606, %v673
        %v675 = vpop.f32.mrb[0].mxu0
        %676 = vdwg.mxu0
        %v677 = vmax.f32 %v671, 0.0
        %v678 = vmax.f32 %v674, 0.0
        %v679 = vpack.c.bf16 %v678, %v677
        %v680 = vld [vmem:[#allocation3] sm:$0xff]
        %v681 = vld [vmem:[#allocation3 + $0x20] sm:$0xff]
        %v682 = vld [vmem:[#allocation3 + $0x40] sm:$0xff]
        %v683 = vld [vmem:[#allocation3 + $0x60] sm:$0xff]
        %v684 = vld [vmem:[#allocation3 + $0x80] sm:$0xff]
        %v685 = vld [vmem:[#allocation3 + $0xa0] sm:$0xff]
        %v686 = vld [vmem:[#allocation3 + $0xc0] sm:$0xff]
        %v687 = vld [vmem:[#allocation3 + $0xe0] sm:$0xff]
        %v688 = vld [vmem:[#allocation3 + $0x100] sm:$0xff]
        %v689 = vld [vmem:[#allocation3 + $0x120] sm:$0xff]
        %v690 = vld [vmem:[#allocation3 + $0x140] sm:$0xff]
        %v691 = vld [vmem:[#allocation3 + $0x160] sm:$0xff]
        %v692 = vld [vmem:[#allocation3 + $0x180] sm:$0xff]
        %v693 = vld [vmem:[#allocation3 + $0x1a0] sm:$0xff]
        %v694 = vld [vmem:[#allocation3 + $0x1c0] sm:$0xff]
        %v695 = vld [vmem:[#allocation3 + $0x1e0] sm:$0xff]
        %v696 = vld [vmem:[%s6] sm:$0x3]
        %v698 = vlaneseq
        %v699 = vshrl.u32 %v698, 7
        %v700 = vsub.s32 0, %v699
        %v701 = vrot.slane %v696, %v700
        %v702 = vlaneseq
        %v703 = vshrl.u32 %v702, 7
        %v704 = vsub.s32 1, %v703
        %v705 = vrot.slane %v696, %v704
        %v724 = vunpack.c.l.b16 %v680
        %v725 = vunpack.c.h.b16 %v680
        %v726 = vunpack.c.l.b16 %v681
        %v727 = vunpack.c.h.b16 %v681
        %v728 = vunpack.c.l.b16 %v682
        %v729 = vunpack.c.h.b16 %v682
        %v730 = vunpack.c.l.b16 %v683
        %v731 = vunpack.c.h.b16 %v683
        %v732 = vunpack.c.l.b16 %v684
        %v733 = vunpack.c.h.b16 %v684
        %v734 = vunpack.c.l.b16 %v685
        %v735 = vunpack.c.h.b16 %v685
        %v736 = vunpack.c.l.b16 %v686
        %v737 = vunpack.c.h.b16 %v686
        %v738 = vunpack.c.l.b16 %v687
        %v739 = vunpack.c.h.b16 %v687
        %v740 = vunpack.c.l.b16 %v688
        %v741 = vunpack.c.h.b16 %v688
        %v742 = vunpack.c.l.b16 %v689
        %v743 = vunpack.c.h.b16 %v689
        %v744 = vunpack.c.l.b16 %v690
        %v745 = vunpack.c.h.b16 %v690
        %v746 = vunpack.c.l.b16 %v691
        %v747 = vunpack.c.h.b16 %v691
        %v748 = vunpack.c.l.b16 %v692
        %v749 = vunpack.c.h.b16 %v692
        %v750 = vunpack.c.l.b16 %v693
        %v751 = vunpack.c.h.b16 %v693
        %v752 = vunpack.c.l.b16 %v694
        %v753 = vunpack.c.h.b16 %v694
        %v754 = vunpack.c.l.b16 %v695
        %v755 = vunpack.c.h.b16 %v695
        %v756 = vpack.c.b16 %v726, %v724
        %v757 = vpack.c.b16 %v727, %v725
        %v758 = vpack.c.b16 %v730, %v728
        %v759 = vpack.c.b16 %v731, %v729
        %v760 = vpack.c.b16 %v734, %v732
        %v761 = vpack.c.b16 %v735, %v733
        %v762 = vpack.c.b16 %v738, %v736
        %v763 = vpack.c.b16 %v739, %v737
        %v764 = vpack.c.b16 %v742, %v740
        %v765 = vpack.c.b16 %v743, %v741
        %v766 = vpack.c.b16 %v746, %v744
        %v767 = vpack.c.b16 %v747, %v745
        %v768 = vpack.c.b16 %v750, %v748
        %v769 = vpack.c.b16 %v751, %v749
        %v770 = vpack.c.b16 %v754, %v752
        %v771 = vpack.c.b16 %v755, %v753
        %788 = vmatprep.subr.bf16.mxu0 %v757
        %789 = vmatpush1.bf16.msra.mxu0 %v756
        %790 = vmatprep.subr.bf16.mxu0 %v759
        %791 = vmatpush1.bf16.msra.mxu0 %v758
        %792 = vmatprep.subr.bf16.mxu0 %v761
        %793 = vmatpush1.bf16.msra.mxu0 %v760
        %794 = vmatprep.subr.bf16.mxu0 %v763
        %795 = vmatpush1.bf16.msra.mxu0 %v762
        %796 = vmatprep.subr.bf16.mxu0 %v765
        %797 = vmatpush1.bf16.msra.mxu0 %v764
        %798 = vmatprep.subr.bf16.mxu0 %v767
        %799 = vmatpush1.bf16.msra.mxu0 %v766
        %800 = vmatprep.subr.bf16.mxu0 %v769
        %801 = vmatpush1.bf16.msra.mxu0 %v768
        %802 = vmatprep.subr.bf16.mxu0 %v771
        %803 = vmatpush1.bf16.msra.mxu0 %v770
        %804 = vmatprep.subr.bf16.mxu0 0
        %805 = vmatpush1.bf16.msra.mxu0 0
        %806 = vmatprep.subr.bf16.mxu0 0
        %807 = vmatpush1.bf16.msra.mxu0 0
        %808 = vmatprep.subr.bf16.mxu0 0
        %809 = vmatpush1.bf16.msra.mxu0 0
        %810 = vmatprep.subr.bf16.mxu0 0
        %811 = vmatpush1.bf16.msra.mxu0 0
        %812 = vmatprep.subr.bf16.mxu0 0
        %813 = vmatpush1.bf16.msra.mxu0 0
        %814 = vmatprep.subr.bf16.mxu0 0
        %815 = vmatpush1.bf16.msra.mxu0 0
        %816 = vmatprep.subr.bf16.mxu0 0
        %817 = vmatpush1.bf16.msra.mxu0 0
        %818 = vmatprep.subr.bf16.mxu0 0
        %819 = vmatpush1.bf16.msra.mxu0 0
        %820 = vmatprep.mubr.bf16.mxu0 0
        %821 = vmatmul.mubr.bf16.gmra.mrb[0].mxu0 %v679
        %v822 = vpop.f32.mrb[0].mxu0
        %v823 = vadd.f32 %v701, %v822
        %v824 = vpop.f32.mrb[0].mxu0
        %v825 = vadd.f32 %v705, %v824
        %v826 = vpop.f32.mrb[0].mxu0
        %v827 = vadd.f32 %v701, %v826
        %v828 = vpop.f32.mrb[0].mxu0
        %v829 = vadd.f32 %v705, %v828
        %830 = vdwg.mxu0
        %v831 = vmax.f32 %v823, 0.0
        %v832 = vmax.f32 %v825, 0.0
        %v833 = vmax.f32 %v827, 0.0
        %v834 = vmax.f32 %v829, 0.0
        %v835 = vmax.f32 %v831, %v833
        %v836 = vrot.slane %v835, 4
        %v837 = vmax.f32 %v835, %v836
        %v838 = vrot.slane %v837, 2
        %v839 = vmax.f32 %v837, %v838
        %v840 = vrot.slane %v839, 1
        %v841 = vmax.f32 %v839, %v840
        %v842 = vmax.f32 %v832, %v834
        %v843 = vrot.slane %v842, 4
        %v844 = vmax.f32 %v842, %v843
        %v845 = vrot.slane %v844, 2
        %v846 = vmax.f32 %v844, %v845
        %v847 = vrot.slane %v846, 1
        %v848 = vmax.f32 %v846, %v847
        %v849 = vld [vmem:[#allocation2] sm:$0x3]
        %v852 = vcombine.low %v841, %v848
        %v854 = vunpack.c.l.s4 1966171168
        %v855 = vunpack.c.0.s8 %v854
        %v856 = vlaneseq
        %v857 = vshrl.u32 %v856, 7
        %v858 = vsub.s32 %v855, %v857
        %v859 = vrot.slane %v852, %v858
        %v861 = vunpack.c.l.s4 1966171168
        %v862 = vunpack.c.0.s8 %v861
        %v863 = vlaneseq
        %v864 = vshrl.u32 %v863, 7
        %v865 = vsub.s32 %v862, %v864
        %v866 = vrot.slane %v859, %v865
        %v868 = vmax.f32 %v849, %v866
        %v869 = vlaneseq
        %vm870 = vcmp.ge.s32.totalorder %v869, 0
        %vm871 = vcmp.lt.s32.totalorder %v869, 256
        %vm872 = vmand %vm870, %vm871
        %873 = vst.msk [vmem:[#allocation2] sm:$0x3] %vm872, %v868
        %v874 = vld [vmem:[#allocation3 + $0x8] sm:$0xff]
        %v875 = vld [vmem:[#allocation3 + $0x28] sm:$0xff]
        %v876 = vld [vmem:[#allocation3 + $0x48] sm:$0xff]
        %v877 = vld [vmem:[#allocation3 + $0x68] sm:$0xff]
        %v878 = vld [vmem:[#allocation3 + $0x88] sm:$0xff]
        %v879 = vld [vmem:[#allocation3 + $0xa8] sm:$0xff]
        %v880 = vld [vmem:[#allocation3 + $0xc8] sm:$0xff]
        %v881 = vld [vmem:[#allocation3 + $0xe8] sm:$0xff]
        %v882 = vld [vmem:[#allocation3 + $0x108] sm:$0xff]
        %v883 = vld [vmem:[#allocation3 + $0x128] sm:$0xff]
        %v884 = vld [vmem:[#allocation3 + $0x148] sm:$0xff]
        %v885 = vld [vmem:[#allocation3 + $0x168] sm:$0xff]
        %v886 = vld [vmem:[#allocation3 + $0x188] sm:$0xff]
        %v887 = vld [vmem:[#allocation3 + $0x1a8] sm:$0xff]
        %v888 = vld [vmem:[#allocation3 + $0x1c8] sm:$0xff]
        %v889 = vld [vmem:[#allocation3 + $0x1e8] sm:$0xff]
        %v890 = vld [vmem:[%s6 + $0x2] sm:$0x3]
        %v892 = vlaneseq
        %v893 = vshrl.u32 %v892, 7
        %v894 = vsub.s32 0, %v893
        %v895 = vrot.slane %v890, %v894
        %v896 = vlaneseq
        %v897 = vshrl.u32 %v896, 7
        %v898 = vsub.s32 1, %v897
        %v899 = vrot.slane %v890, %v898
        %v918 = vunpack.c.l.b16 %v874
        %v919 = vunpack.c.h.b16 %v874
        %v920 = vunpack.c.l.b16 %v875
        %v921 = vunpack.c.h.b16 %v875
        %v922 = vunpack.c.l.b16 %v876
        %v923 = vunpack.c.h.b16 %v876
        %v924 = vunpack.c.l.b16 %v877
        %v925 = vunpack.c.h.b16 %v877
        %v926 = vunpack.c.l.b16 %v878
        %v927 = vunpack.c.h.b16 %v878
        %v928 = vunpack.c.l.b16 %v879
        %v929 = vunpack.c.h.b16 %v879
        %v930 = vunpack.c.l.b16 %v880
        %v931 = vunpack.c.h.b16 %v880
        %v932 = vunpack.c.l.b16 %v881
        %v933 = vunpack.c.h.b16 %v881
        %v934 = vunpack.c.l.b16 %v882
        %v935 = vunpack.c.h.b16 %v882
        %v936 = vunpack.c.l.b16 %v883
        %v937 = vunpack.c.h.b16 %v883
        %v938 = vunpack.c.l.b16 %v884
        %v939 = vunpack.c.h.b16 %v884
        %v940 = vunpack.c.l.b16 %v885
        %v941 = vunpack.c.h.b16 %v885
        %v942 = vunpack.c.l.b16 %v886
        %v943 = vunpack.c.h.b16 %v886
        %v944 = vunpack.c.l.b16 %v887
        %v945 = vunpack.c.h.b16 %v887
        %v946 = vunpack.c.l.b16 %v888
        %v947 = vunpack.c.h.b16 %v888
        %v948 = vunpack.c.l.b16 %v889
        %v949 = vunpack.c.h.b16 %v889
        %v950 = vpack.c.b16 %v920, %v918
        %v951 = vpack.c.b16 %v921, %v919
        %v952 = vpack.c.b16 %v924, %v922
        %v953 = vpack.c.b16 %v925, %v923
        %v954 = vpack.c.b16 %v928, %v926
        %v955 = vpack.c.b16 %v929, %v927
        %v956 = vpack.c.b16 %v932, %v930
        %v957 = vpack.c.b16 %v933, %v931
        %v958 = vpack.c.b16 %v936, %v934
        %v959 = vpack.c.b16 %v937, %v935
        %v960 = vpack.c.b16 %v940, %v938
        %v961 = vpack.c.b16 %v941, %v939
        %v962 = vpack.c.b16 %v944, %v942
        %v963 = vpack.c.b16 %v945, %v943
        %v964 = vpack.c.b16 %v948, %v946
        %v965 = vpack.c.b16 %v949, %v947
        %982 = vmatprep.subr.bf16.mxu0 %v951
        %983 = vmatpush1.bf16.msra.mxu0 %v950
        %984 = vmatprep.subr.bf16.mxu0 %v953
        %985 = vmatpush1.bf16.msra.mxu0 %v952
        %986 = vmatprep.subr.bf16.mxu0 %v955
        %987 = vmatpush1.bf16.msra.mxu0 %v954
        %988 = vmatprep.subr.bf16.mxu0 %v957
        %989 = vmatpush1.bf16.msra.mxu0 %v956
        %990 = vmatprep.subr.bf16.mxu0 %v959
        %991 = vmatpush1.bf16.msra.mxu0 %v958
        %992 = vmatprep.subr.bf16.mxu0 %v961
        %993 = vmatpush1.bf16.msra.mxu0 %v960
        %994 = vmatprep.subr.bf16.mxu0 %v963
        %995 = vmatpush1.bf16.msra.mxu0 %v962
        %996 = vmatprep.subr.bf16.mxu0 %v965
        %997 = vmatpush1.bf16.msra.mxu0 %v964
        %998 = vmatprep.subr.bf16.mxu0 0
        %999 = vmatpush1.bf16.msra.mxu0 0
        %1000 = vmatprep.subr.bf16.mxu0 0
        %1001 = vmatpush1.bf16.msra.mxu0 0
        %1002 = vmatprep.subr.bf16.mxu0 0
        %1003 = vmatpush1.bf16.msra.mxu0 0
        %1004 = vmatprep.subr.bf16.mxu0 0
        %1005 = vmatpush1.bf16.msra.mxu0 0
        %1006 = vmatprep.subr.bf16.mxu0 0
        %1007 = vmatpush1.bf16.msra.mxu0 0
        %1008 = vmatprep.subr.bf16.mxu0 0
        %1009 = vmatpush1.bf16.msra.mxu0 0
        %1010 = vmatprep.subr.bf16.mxu0 0
        %1011 = vmatpush1.bf16.msra.mxu0 0
        %1012 = vmatprep.subr.bf16.mxu0 0
        %1013 = vmatpush1.bf16.msra.mxu0 0
        %1014 = vmatprep.mubr.bf16.mxu0 0
        %1015 = vmatmul.mubr.bf16.gmra.mrb[0].mxu0 %v679
        %v1016 = vpop.f32.mrb[0].mxu0
        %v1017 = vadd.f32 %v895, %v1016
        %v1018 = vpop.f32.mrb[0].mxu0
        %v1019 = vadd.f32 %v899, %v1018
        %v1020 = vpop.f32.mrb[0].mxu0
        %v1021 = vadd.f32 %v895, %v1020
        %v1022 = vpop.f32.mrb[0].mxu0
        %v1023 = vadd.f32 %v899, %v1022
        %1024 = vdwg.mxu0
        %v1025 = vmax.f32 %v1017, 0.0
        %v1026 = vmax.f32 %v1019, 0.0
        %v1027 = vmax.f32 %v1021, 0.0
        %v1028 = vmax.f32 %v1023, 0.0
        %v1029 = vmax.f32 %v1025, %v1027
        %v1030 = vrot.slane %v1029, 4
        %v1031 = vmax.f32 %v1029, %v1030
        %v1032 = vrot.slane %v1031, 2
        %v1033 = vmax.f32 %v1031, %v1032
        %v1034 = vrot.slane %v1033, 1
        %v1035 = vmax.f32 %v1033, %v1034
        %v1036 = vmax.f32 %v1026, %v1028
        %v1037 = vrot.slane %v1036, 4
        %v1038 = vmax.f32 %v1036, %v1037
        %v1039 = vrot.slane %v1038, 2
        %v1040 = vmax.f32 %v1038, %v1039
        %v1041 = vrot.slane %v1040, 1
        %v1042 = vmax.f32 %v1040, %v1041
        %v1043 = vld [vmem:[#allocation2 + $0x2] sm:$0x3]
        %v1046 = vcombine.low %v1035, %v1042
        %v1048 = vunpack.c.l.s4 1966171168
        %v1049 = vunpack.c.0.s8 %v1048
        %v1050 = vlaneseq
        %v1051 = vshrl.u32 %v1050, 7
        %v1052 = vsub.s32 %v1049, %v1051
        %v1053 = vrot.slane %v1046, %v1052
        %v1055 = vunpack.c.l.s4 1966171168
        %v1056 = vunpack.c.0.s8 %v1055
        %v1057 = vlaneseq
        %v1058 = vshrl.u32 %v1057, 7
        %v1059 = vsub.s32 %v1056, %v1058
        %v1060 = vrot.slane %v1053, %v1059
        %v1062 = vmax.f32 %v1043, %v1060
        %1063 = vst.msk [vmem:[#allocation2 + $0x2] sm:$0x3] %vm872, %v1062
        %v1064 = vld [vmem:[#allocation3 + $0x10] sm:$0xff]
        %v1065 = vld [vmem:[#allocation3 + $0x30] sm:$0xff]
        %v1066 = vld [vmem:[#allocation3 + $0x50] sm:$0xff]
        %v1067 = vld [vmem:[#allocation3 + $0x70] sm:$0xff]
        %v1068 = vld [vmem:[#allocation3 + $0x90] sm:$0xff]
        %v1069 = vld [vmem:[#allocation3 + $0xb0] sm:$0xff]
        %v1070 = vld [vmem:[#allocation3 + $0xd0] sm:$0xff]
        %v1071 = vld [vmem:[#allocation3 + $0xf0] sm:$0xff]
        %v1072 = vld [vmem:[#allocation3 + $0x110] sm:$0xff]
        %v1073 = vld [vmem:[#allocation3 + $0x130] sm:$0xff]
        %v1074 = vld [vmem:[#allocation3 + $0x150] sm:$0xff]
        %v1075 = vld [vmem:[#allocation3 + $0x170] sm:$0xff]
        %v1076 = vld [vmem:[#allocation3 + $0x190] sm:$0xff]
        %v1077 = vld [vmem:[#allocation3 + $0x1b0] sm:$0xff]
        %v1078 = vld [vmem:[#allocation3 + $0x1d0] sm:$0xff]
        %v1079 = vld [vmem:[#allocation3 + $0x1f0] sm:$0xff]
        %v1080 = vld [vmem:[%s6 + $0x4] sm:$0x3]
        %v1082 = vlaneseq
        %v1083 = vshrl.u32 %v1082, 7
        %v1084 = vsub.s32 0, %v1083
        %v1085 = vrot.slane %v1080, %v1084
        %v1086 = vlaneseq
        %v1087 = vshrl.u32 %v1086, 7
        %v1088 = vsub.s32 1, %v1087
        %v1089 = vrot.slane %v1080, %v1088
        %v1108 = vunpack.c.l.b16 %v1064
        %v1109 = vunpack.c.h.b16 %v1064
        %v1110 = vunpack.c.l.b16 %v1065
        %v1111 = vunpack.c.h.b16 %v1065
        %v1112 = vunpack.c.l.b16 %v1066
        %v1113 = vunpack.c.h.b16 %v1066
        %v1114 = vunpack.c.l.b16 %v1067
        %v1115 = vunpack.c.h.b16 %v1067
        %v1116 = vunpack.c.l.b16 %v1068
        %v1117 = vunpack.c.h.b16 %v1068
        %v1118 = vunpack.c.l.b16 %v1069
        %v1119 = vunpack.c.h.b16 %v1069
        %v1120 = vunpack.c.l.b16 %v1070
        %v1121 = vunpack.c.h.b16 %v1070
        %v1122 = vunpack.c.l.b16 %v1071
        %v1123 = vunpack.c.h.b16 %v1071
        %v1124 = vunpack.c.l.b16 %v1072
        %v1125 = vunpack.c.h.b16 %v1072
        %v1126 = vunpack.c.l.b16 %v1073
        %v1127 = vunpack.c.h.b16 %v1073
        %v1128 = vunpack.c.l.b16 %v1074
        %v1129 = vunpack.c.h.b16 %v1074
        %v1130 = vunpack.c.l.b16 %v1075
        %v1131 = vunpack.c.h.b16 %v1075
        %v1132 = vunpack.c.l.b16 %v1076
        %v1133 = vunpack.c.h.b16 %v1076
        %v1134 = vunpack.c.l.b16 %v1077
        %v1135 = vunpack.c.h.b16 %v1077
        %v1136 = vunpack.c.l.b16 %v1078
        %v1137 = vunpack.c.h.b16 %v1078
        %v1138 = vunpack.c.l.b16 %v1079
        %v1139 = vunpack.c.h.b16 %v1079
        %v1140 = vpack.c.b16 %v1110, %v1108
        %v1141 = vpack.c.b16 %v1111, %v1109
        %v1142 = vpack.c.b16 %v1114, %v1112
        %v1143 = vpack.c.b16 %v1115, %v1113
        %v1144 = vpack.c.b16 %v1118, %v1116
        %v1145 = vpack.c.b16 %v1119, %v1117
        %v1146 = vpack.c.b16 %v1122, %v1120
        %v1147 = vpack.c.b16 %v1123, %v1121
        %v1148 = vpack.c.b16 %v1126, %v1124
        %v1149 = vpack.c.b16 %v1127, %v1125
        %v1150 = vpack.c.b16 %v1130, %v1128
        %v1151 = vpack.c.b16 %v1131, %v1129
        %v1152 = vpack.c.b16 %v1134, %v1132
        %v1153 = vpack.c.b16 %v1135, %v1133
        %v1154 = vpack.c.b16 %v1138, %v1136
        %v1155 = vpack.c.b16 %v1139, %v1137
        %1172 = vmatprep.subr.bf16.mxu0 %v1141
        %1173 = vmatpush1.bf16.msra.mxu0 %v1140
        %1174 = vmatprep.subr.bf16.mxu0 %v1143
        %1175 = vmatpush1.bf16.msra.mxu0 %v1142
        %1176 = vmatprep.subr.bf16.mxu0 %v1145
        %1177 = vmatpush1.bf16.msra.mxu0 %v1144
        %1178 = vmatprep.subr.bf16.mxu0 %v1147
        %1179 = vmatpush1.bf16.msra.mxu0 %v1146
        %1180 = vmatprep.subr.bf16.mxu0 %v1149
        %1181 = vmatpush1.bf16.msra.mxu0 %v1148
        %1182 = vmatprep.subr.bf16.mxu0 %v1151
        %1183 = vmatpush1.bf16.msra.mxu0 %v1150
        %1184 = vmatprep.subr.bf16.mxu0 %v1153
        %1185 = vmatpush1.bf16.msra.mxu0 %v1152
        %1186 = vmatprep.subr.bf16.mxu0 %v1155
        %1187 = vmatpush1.bf16.msra.mxu0 %v1154
        %1188 = vmatprep.subr.bf16.mxu0 0
        %1189 = vmatpush1.bf16.msra.mxu0 0
        %1190 = vmatprep.subr.bf16.mxu0 0
        %1191 = vmatpush1.bf16.msra.mxu0 0
        %1192 = vmatprep.subr.bf16.mxu0 0
        %1193 = vmatpush1.bf16.msra.mxu0 0
        %1194 = vmatprep.subr.bf16.mxu0 0
        %1195 = vmatpush1.bf16.msra.mxu0 0
        %1196 = vmatprep.subr.bf16.mxu0 0
        %1197 = vmatpush1.bf16.msra.mxu0 0
        %1198 = vmatprep.subr.bf16.mxu0 0
        %1199 = vmatpush1.bf16.msra.mxu0 0
        %1200 = vmatprep.subr.bf16.mxu0 0
        %1201 = vmatpush1.bf16.msra.mxu0 0
        %1202 = vmatprep.subr.bf16.mxu0 0
        %1203 = vmatpush1.bf16.msra.mxu0 0
        %1204 = vmatprep.mubr.bf16.mxu0 0
        %1205 = vmatmul.mubr.bf16.gmra.mrb[0].mxu0 %v679
        %v1206 = vpop.f32.mrb[0].mxu0
        %v1207 = vadd.f32 %v1085, %v1206
        %v1208 = vpop.f32.mrb[0].mxu0
        %v1209 = vadd.f32 %v1089, %v1208
        %v1210 = vpop.f32.mrb[0].mxu0
        %v1211 = vadd.f32 %v1085, %v1210
        %v1212 = vpop.f32.mrb[0].mxu0
        %v1213 = vadd.f32 %v1089, %v1212
        %1214 = vdwg.mxu0
        %v1215 = vmax.f32 %v1207, 0.0
        %v1216 = vmax.f32 %v1209, 0.0
        %v1217 = vmax.f32 %v1211, 0.0
        %v1218 = vmax.f32 %v1213, 0.0
        %v1219 = vmax.f32 %v1215, %v1217
        %v1220 = vrot.slane %v1219, 4
        %v1221 = vmax.f32 %v1219, %v1220
        %v1222 = vrot.slane %v1221, 2
        %v1223 = vmax.f32 %v1221, %v1222
        %v1224 = vrot.slane %v1223, 1
        %v1225 = vmax.f32 %v1223, %v1224
        %v1226 = vmax.f32 %v1216, %v1218
        %v1227 = vrot.slane %v1226, 4
        %v1228 = vmax.f32 %v1226, %v1227
        %v1229 = vrot.slane %v1228, 2
        %v1230 = vmax.f32 %v1228, %v1229
        %v1231 = vrot.slane %v1230, 1
        %v1232 = vmax.f32 %v1230, %v1231
        %v1233 = vld [vmem:[#allocation2 + $0x4] sm:$0x3]
        %v1236 = vcombine.low %v1225, %v1232
        %v1238 = vunpack.c.l.s4 1966171168
        %v1239 = vunpack.c.0.s8 %v1238
        %v1240 = vlaneseq
        %v1241 = vshrl.u32 %v1240, 7
        %v1242 = vsub.s32 %v1239, %v1241
        %v1243 = vrot.slane %v1236, %v1242
        %v1245 = vunpack.c.l.s4 1966171168
        %v1246 = vunpack.c.0.s8 %v1245
        %v1247 = vlaneseq
        %v1248 = vshrl.u32 %v1247, 7
        %v1249 = vsub.s32 %v1246, %v1248
        %v1250 = vrot.slane %v1243, %v1249
        %v1252 = vmax.f32 %v1233, %v1250
        %1253 = vst.msk [vmem:[#allocation2 + $0x4] sm:$0x3] %vm872, %v1252
        %v1254 = vld [vmem:[#allocation3 + $0x18] sm:$0xff]
        %v1255 = vld [vmem:[#allocation3 + $0x38] sm:$0xff]
        %v1256 = vld [vmem:[#allocation3 + $0x58] sm:$0xff]
        %v1257 = vld [vmem:[#allocation3 + $0x78] sm:$0xff]
        %v1258 = vld [vmem:[#allocation3 + $0x98] sm:$0xff]
        %v1259 = vld [vmem:[#allocation3 + $0xb8] sm:$0xff]
        %v1260 = vld [vmem:[#allocation3 + $0xd8] sm:$0xff]
        %v1261 = vld [vmem:[#allocation3 + $0xf8] sm:$0xff]
        %v1262 = vld [vmem:[#allocation3 + $0x118] sm:$0xff]
        %v1263 = vld [vmem:[#allocation3 + $0x138] sm:$0xff]
        %v1264 = vld [vmem:[#allocation3 + $0x158] sm:$0xff]
        %v1265 = vld [vmem:[#allocation3 + $0x178] sm:$0xff]
        %v1266 = vld [vmem:[#allocation3 + $0x198] sm:$0xff]
        %v1267 = vld [vmem:[#allocation3 + $0x1b8] sm:$0xff]
        %v1268 = vld [vmem:[#allocation3 + $0x1d8] sm:$0xff]
        %v1269 = vld [vmem:[#allocation3 + $0x1f8] sm:$0xff]
        %v1270 = vld [vmem:[%s6 + $0x6] sm:$0x3]
        %v1272 = vlaneseq
        %v1273 = vshrl.u32 %v1272, 7
        %v1274 = vsub.s32 0, %v1273
        %v1275 = vrot.slane %v1270, %v1274
        %v1276 = vlaneseq
        %v1277 = vshrl.u32 %v1276, 7
        %v1278 = vsub.s32 1, %v1277
        %v1279 = vrot.slane %v1270, %v1278
        %v1298 = vunpack.c.l.b16 %v1254
        %v1299 = vunpack.c.h.b16 %v1254
        %v1300 = vunpack.c.l.b16 %v1255
        %v1301 = vunpack.c.h.b16 %v1255
        %v1302 = vunpack.c.l.b16 %v1256
        %v1303 = vunpack.c.h.b16 %v1256
        %v1304 = vunpack.c.l.b16 %v1257
        %v1305 = vunpack.c.h.b16 %v1257
        %v1306 = vunpack.c.l.b16 %v1258
        %v1307 = vunpack.c.h.b16 %v1258
        %v1308 = vunpack.c.l.b16 %v1259
        %v1309 = vunpack.c.h.b16 %v1259
        %v1310 = vunpack.c.l.b16 %v1260
        %v1311 = vunpack.c.h.b16 %v1260
        %v1312 = vunpack.c.l.b16 %v1261
        %v1313 = vunpack.c.h.b16 %v1261
        %v1314 = vunpack.c.l.b16 %v1262
        %v1315 = vunpack.c.h.b16 %v1262
        %v1316 = vunpack.c.l.b16 %v1263
        %v1317 = vunpack.c.h.b16 %v1263
        %v1318 = vunpack.c.l.b16 %v1264
        %v1319 = vunpack.c.h.b16 %v1264
        %v1320 = vunpack.c.l.b16 %v1265
        %v1321 = vunpack.c.h.b16 %v1265
        %v1322 = vunpack.c.l.b16 %v1266
        %v1323 = vunpack.c.h.b16 %v1266
        %v1324 = vunpack.c.l.b16 %v1267
        %v1325 = vunpack.c.h.b16 %v1267
        %v1326 = vunpack.c.l.b16 %v1268
        %v1327 = vunpack.c.h.b16 %v1268
        %v1328 = vunpack.c.l.b16 %v1269
        %v1329 = vunpack.c.h.b16 %v1269
        %v1330 = vpack.c.b16 %v1300, %v1298
        %v1331 = vpack.c.b16 %v1301, %v1299
        %v1332 = vpack.c.b16 %v1304, %v1302
        %v1333 = vpack.c.b16 %v1305, %v1303
        %v1334 = vpack.c.b16 %v1308, %v1306
        %v1335 = vpack.c.b16 %v1309, %v1307
        %v1336 = vpack.c.b16 %v1312, %v1310
        %v1337 = vpack.c.b16 %v1313, %v1311
        %v1338 = vpack.c.b16 %v1316, %v1314
        %v1339 = vpack.c.b16 %v1317, %v1315
        %v1340 = vpack.c.b16 %v1320, %v1318
        %v1341 = vpack.c.b16 %v1321, %v1319
        %v1342 = vpack.c.b16 %v1324, %v1322
        %v1343 = vpack.c.b16 %v1325, %v1323
        %v1344 = vpack.c.b16 %v1328, %v1326
        %v1345 = vpack.c.b16 %v1329, %v1327
        %1362 = vmatprep.subr.bf16.mxu0 %v1331
        %1363 = vmatpush1.bf16.msra.mxu0 %v1330
        %1364 = vmatprep.subr.bf16.mxu0 %v1333
        %1365 = vmatpush1.bf16.msra.mxu0 %v1332
        %1366 = vmatprep.subr.bf16.mxu0 %v1335
        %1367 = vmatpush1.bf16.msra.mxu0 %v1334
        %1368 = vmatprep.subr.bf16.mxu0 %v1337
        %1369 = vmatpush1.bf16.msra.mxu0 %v1336
        %1370 = vmatprep.subr.bf16.mxu0 %v1339
        %1371 = vmatpush1.bf16.msra.mxu0 %v1338
        %1372 = vmatprep.subr.bf16.mxu0 %v1341
        %1373 = vmatpush1.bf16.msra.mxu0 %v1340
        %1374 = vmatprep.subr.bf16.mxu0 %v1343
        %1375 = vmatpush1.bf16.msra.mxu0 %v1342
        %1376 = vmatprep.subr.bf16.mxu0 %v1345
        %1377 = vmatpush1.bf16.msra.mxu0 %v1344
        %1378 = vmatprep.subr.bf16.mxu0 0
        %1379 = vmatpush1.bf16.msra.mxu0 0
        %1380 = vmatprep.subr.bf16.mxu0 0
        %1381 = vmatpush1.bf16.msra.mxu0 0
        %1382 = vmatprep.subr.bf16.mxu0 0
        %1383 = vmatpush1.bf16.msra.mxu0 0
        %1384 = vmatprep.subr.bf16.mxu0 0
        %1385 = vmatpush1.bf16.msra.mxu0 0
        %1386 = vmatprep.subr.bf16.mxu0 0
        %1387 = vmatpush1.bf16.msra.mxu0 0
        %1388 = vmatprep.subr.bf16.mxu0 0
        %1389 = vmatpush1.bf16.msra.mxu0 0
        %1390 = vmatprep.subr.bf16.mxu0 0
        %1391 = vmatpush1.bf16.msra.mxu0 0
        %1392 = vmatprep.subr.bf16.mxu0 0
        %1393 = vmatpush1.bf16.msra.mxu0 0
        %1394 = vmatprep.mubr.bf16.mxu0 0
        %1395 = vmatmul.mubr.bf16.gmra.mrb[0].mxu0 %v679
        %v1396 = vpop.f32.mrb[0].mxu0
        %v1397 = vadd.f32 %v1275, %v1396
        %v1398 = vpop.f32.mrb[0].mxu0
        %v1399 = vadd.f32 %v1279, %v1398
        %v1400 = vpop.f32.mrb[0].mxu0
        %v1401 = vadd.f32 %v1275, %v1400
        %v1402 = vpop.f32.mrb[0].mxu0
        %v1403 = vadd.f32 %v1279, %v1402
        %1404 = vdwg.mxu0
        %v1405 = vmax.f32 %v1397, 0.0
        %v1406 = vmax.f32 %v1399, 0.0
        %v1407 = vmax.f32 %v1401, 0.0
        %v1408 = vmax.f32 %v1403, 0.0
        %v1409 = vmax.f32 %v1405, %v1407
        %v1410 = vrot.slane %v1409, 4
        %v1411 = vmax.f32 %v1409, %v1410
        %v1412 = vrot.slane %v1411, 2
        %v1413 = vmax.f32 %v1411, %v1412
        %v1414 = vrot.slane %v1413, 1
        %v1415 = vmax.f32 %v1413, %v1414
        %v1416 = vmax.f32 %v1406, %v1408
        %v1417 = vrot.slane %v1416, 4
        %v1418 = vmax.f32 %v1416, %v1417
        %v1419 = vrot.slane %v1418, 2
        %v1420 = vmax.f32 %v1418, %v1419
        %v1421 = vrot.slane %v1420, 1
        %v1422 = vmax.f32 %v1420, %v1421
        %v1423 = vld [vmem:[#allocation2 + $0x6] sm:$0x3]
        %v1426 = vcombine.low %v1415, %v1422
        %v1428 = vunpack.c.l.s4 1966171168
        %v1429 = vunpack.c.0.s8 %v1428
        %v1430 = vlaneseq
        %v1431 = vshrl.u32 %v1430, 7
        %v1432 = vsub.s32 %v1429, %v1431
        %v1433 = vrot.slane %v1426, %v1432
        %v1435 = vunpack.c.l.s4 1966171168
        %v1436 = vunpack.c.0.s8 %v1435
        %v1437 = vlaneseq
        %v1438 = vshrl.u32 %v1437, 7
        %v1439 = vsub.s32 %v1436, %v1438
        %v1440 = vrot.slane %v1433, %v1439
        %v1442 = vmax.f32 %v1423, %v1440
        %1443 = vst.msk [vmem:[#allocation2 + $0x6] sm:$0x3] %vm872, %v1442
        // Predicated region
        $region89: #{tpu_custom_call.1} parent=71 // pred_check
          %p1444 = pneg %p512
        $region90: #{tpu_custom_call.1} parent=71 // pred_check_branch
          %1446 = sbr.rel (%p1444) target = $region92
        $region91: #{tpu_custom_call.1} parent=71 // pred_region
          %v1447 = vld [vmem:[#allocation2] sm:$0xff]
          %v1449 = vlaneseq
          %v1450 = vshrl.u32 %v1449, 7
          %v1451 = vsub.s32 0, %v1450
          %v1452 = vrot.slane %v1447, %v1451
          %v1453 = vlaneseq
          %v1454 = vshrl.u32 %v1453, 7
          %v1455 = vsub.s32 1, %v1454
          %v1456 = vrot.slane %v1447, %v1455
          %v1457 = vlaneseq
          %v1458 = vshrl.u32 %v1457, 7
          %v1459 = vsub.s32 2, %v1458
          %v1460 = vrot.slane %v1447, %v1459
          %v1461 = vlaneseq
          %v1462 = vshrl.u32 %v1461, 7
          %v1463 = vsub.s32 3, %v1462
          %v1464 = vrot.slane %v1447, %v1463
          %v1465 = vlaneseq
          %v1466 = vshrl.u32 %v1465, 7
          %v1467 = vsub.s32 4, %v1466
          %v1468 = vrot.slane %v1447, %v1467
          %v1469 = vlaneseq
          %v1470 = vshrl.u32 %v1469, 7
          %v1471 = vsub.s32 5, %v1470
          %v1472 = vrot.slane %v1447, %v1471
          %v1473 = vlaneseq
          %v1474 = vshrl.u32 %v1473, 7
          %v1475 = vsub.s32 6, %v1474
          %v1476 = vrot.slane %v1447, %v1475
          %v1477 = vlaneseq
          %v1478 = vshrl.u32 %v1477, 7
          %v1479 = vsub.s32 7, %v1478
          %v1480 = vrot.slane %v1447, %v1479
          %v1489 = vpack.c.bf16 %v1452, %v1452
          %v1490 = vpack.c.bf16 %v1456, %v1456
          %v1491 = vpack.c.bf16 %v1460, %v1460
          %v1492 = vpack.c.bf16 %v1464, %v1464
          %v1493 = vpack.c.bf16 %v1468, %v1468
          %v1494 = vpack.c.bf16 %v1472, %v1472
          %v1495 = vpack.c.bf16 %v1476, %v1476
          %v1496 = vpack.c.bf16 %v1480, %v1480
          %v1497 = vld [vmem:[#allocation6] sm:$0xff]
          %v1498 = vld [vmem:[#allocation6 + $0x8] sm:$0xff]
          %v1499 = vld [vmem:[#allocation6 + $0x10] sm:$0xff]
          %v1500 = vld [vmem:[#allocation6 + $0x18] sm:$0xff]
          %v1501 = vld [vmem:[#allocation6 + $0x20] sm:$0xff]
          %v1502 = vld [vmem:[#allocation6 + $0x28] sm:$0xff]
          %v1503 = vld [vmem:[#allocation6 + $0x30] sm:$0xff]
          %v1504 = vld [vmem:[#allocation6 + $0x38] sm:$0xff]
          %v1505 = vld [vmem:[#allocation6 + $0x40] sm:$0xff]
          %v1506 = vld [vmem:[#allocation6 + $0x48] sm:$0xff]
          %v1507 = vld [vmem:[#allocation6 + $0x50] sm:$0xff]
          %v1508 = vld [vmem:[#allocation6 + $0x58] sm:$0xff]
          %v1509 = vld [vmem:[#allocation6 + $0x60] sm:$0xff]
          %v1510 = vld [vmem:[#allocation6 + $0x68] sm:$0xff]
          %v1511 = vld [vmem:[#allocation6 + $0x70] sm:$0xff]
          %v1512 = vld [vmem:[#allocation6 + $0x78] sm:$0xff]
          %v1513 = vld [vmem:[#allocation6 + $0x80] sm:$0xff]
          %v1514 = vld [vmem:[#allocation6 + $0x88] sm:$0xff]
          %v1515 = vld [vmem:[#allocation6 + $0x90] sm:$0xff]
          %v1516 = vld [vmem:[#allocation6 + $0x98] sm:$0xff]
          %v1517 = vld [vmem:[#allocation6 + $0xa0] sm:$0xff]
          %v1518 = vld [vmem:[#allocation6 + $0xa8] sm:$0xff]
          %v1519 = vld [vmem:[#allocation6 + $0xb0] sm:$0xff]
          %v1520 = vld [vmem:[#allocation6 + $0xb8] sm:$0xff]
          %v1521 = vld [vmem:[#allocation6 + $0xc0] sm:$0xff]
          %v1522 = vld [vmem:[#allocation6 + $0xc8] sm:$0xff]
          %v1523 = vld [vmem:[#allocation6 + $0xd0] sm:$0xff]
          %v1524 = vld [vmem:[#allocation6 + $0xd8] sm:$0xff]
          %v1525 = vld [vmem:[#allocation6 + $0xe0] sm:$0xff]
          %v1526 = vld [vmem:[#allocation6 + $0xe8] sm:$0xff]
          %v1527 = vld [vmem:[#allocation6 + $0xf0] sm:$0xff]
          %v1528 = vld [vmem:[#allocation6 + $0xf8] sm:$0xff]
          %v1529 = vld [vmem:[#allocation6 + $0x100] sm:$0xff]
          %v1530 = vld [vmem:[#allocation6 + $0x108] sm:$0xff]
          %v1531 = vld [vmem:[#allocation6 + $0x110] sm:$0xff]
          %v1532 = vld [vmem:[#allocation6 + $0x118] sm:$0xff]
          %v1533 = vld [vmem:[#allocation6 + $0x120] sm:$0xff]
          %v1534 = vld [vmem:[#allocation6 + $0x128] sm:$0xff]
          %v1535 = vld [vmem:[#allocation6 + $0x130] sm:$0xff]
          %v1536 = vld [vmem:[#allocation6 + $0x138] sm:$0xff]
          %v1537 = vld [vmem:[#allocation6 + $0x140] sm:$0xff]
          %v1538 = vld [vmem:[#allocation6 + $0x148] sm:$0xff]
          %v1539 = vld [vmem:[#allocation6 + $0x150] sm:$0xff]
          %v1540 = vld [vmem:[#allocation6 + $0x158] sm:$0xff]
          %v1541 = vld [vmem:[#allocation6 + $0x160] sm:$0xff]
          %v1542 = vld [vmem:[#allocation6 + $0x168] sm:$0xff]
          %v1543 = vld [vmem:[#allocation6 + $0x170] sm:$0xff]
          %v1544 = vld [vmem:[#allocation6 + $0x178] sm:$0xff]
          %v1545 = vld [vmem:[#allocation6 + $0x180] sm:$0xff]
          %v1546 = vld [vmem:[#allocation6 + $0x188] sm:$0xff]
          %v1547 = vld [vmem:[#allocation6 + $0x190] sm:$0xff]
          %v1548 = vld [vmem:[#allocation6 + $0x198] sm:$0xff]
          %v1549 = vld [vmem:[#allocation6 + $0x1a0] sm:$0xff]
          %v1550 = vld [vmem:[#allocation6 + $0x1a8] sm:$0xff]
          %v1551 = vld [vmem:[#allocation6 + $0x1b0] sm:$0xff]
          %v1552 = vld [vmem:[#allocation6 + $0x1b8] sm:$0xff]
          %v1553 = vld [vmem:[#allocation6 + $0x1c0] sm:$0xff]
          %v1554 = vld [vmem:[#allocation6 + $0x1c8] sm:$0xff]
          %v1555 = vld [vmem:[#allocation6 + $0x1d0] sm:$0xff]
          %v1556 = vld [vmem:[#allocation6 + $0x1d8] sm:$0xff]
          %v1557 = vld [vmem:[#allocation6 + $0x1e0] sm:$0xff]
          %v1558 = vld [vmem:[#allocation6 + $0x1e8] sm:$0xff]
          %v1559 = vld [vmem:[#allocation6 + $0x1f0] sm:$0xff]
          %v1560 = vld [vmem:[#allocation6 + $0x1f8] sm:$0xff]
          %v1561 = vld [vmem:[#allocation6 + $0x200] sm:$0xff]
          %v1562 = vld [vmem:[#allocation6 + $0x208] sm:$0xff]
          %v1563 = vld [vmem:[#allocation6 + $0x210] sm:$0xff]
          %v1564 = vld [vmem:[#allocation6 + $0x218] sm:$0xff]
          %v1565 = vld [vmem:[#allocation6 + $0x220] sm:$0xff]
          %v1566 = vld [vmem:[#allocation6 + $0x228] sm:$0xff]
          %v1567 = vld [vmem:[#allocation6 + $0x230] sm:$0xff]
          %v1568 = vld [vmem:[#allocation6 + $0x238] sm:$0xff]
          %v1569 = vld [vmem:[#allocation6 + $0x240] sm:$0xff]
          %v1570 = vld [vmem:[#allocation6 + $0x248] sm:$0xff]
          %v1571 = vld [vmem:[#allocation6 + $0x250] sm:$0xff]
          %v1572 = vld [vmem:[#allocation6 + $0x258] sm:$0xff]
          %v1573 = vld [vmem:[#allocation6 + $0x260] sm:$0xff]
          %v1574 = vld [vmem:[#allocation6 + $0x268] sm:$0xff]
          %v1575 = vld [vmem:[#allocation6 + $0x270] sm:$0xff]
          %v1576 = vld [vmem:[#allocation6 + $0x278] sm:$0xff]
          %v1577 = vld [vmem:[#allocation6 + $0x280] sm:$0xff]
          %v1578 = vld [vmem:[#allocation6 + $0x288] sm:$0xff]
          %v1579 = vld [vmem:[#allocation6 + $0x290] sm:$0xff]
          %v1580 = vld [vmem:[#allocation6 + $0x298] sm:$0xff]
          %v1581 = vld [vmem:[#allocation6 + $0x2a0] sm:$0xff]
          %v1582 = vld [vmem:[#allocation6 + $0x2a8] sm:$0xff]
          %v1583 = vld [vmem:[#allocation6 + $0x2b0] sm:$0xff]
          %v1584 = vld [vmem:[#allocation6 + $0x2b8] sm:$0xff]
          %v1585 = vld [vmem:[#allocation6 + $0x2c0] sm:$0xff]
          %v1586 = vld [vmem:[#allocation6 + $0x2c8] sm:$0xff]
          %v1587 = vld [vmem:[#allocation6 + $0x2d0] sm:$0xff]
          %v1588 = vld [vmem:[#allocation6 + $0x2d8] sm:$0xff]
          %v1589 = vld [vmem:[#allocation6 + $0x2e0] sm:$0xff]
          %v1590 = vld [vmem:[#allocation6 + $0x2e8] sm:$0xff]
          %v1591 = vld [vmem:[#allocation6 + $0x2f0] sm:$0xff]
          %v1592 = vld [vmem:[#allocation6 + $0x2f8] sm:$0xff]
          %v1593 = vld [vmem:[#allocation6 + $0x300] sm:$0xff]
          %v1594 = vld [vmem:[#allocation6 + $0x308] sm:$0xff]
          %v1595 = vld [vmem:[#allocation6 + $0x310] sm:$0xff]
          %v1596 = vld [vmem:[#allocation6 + $0x318] sm:$0xff]
          %v1597 = vld [vmem:[#allocation6 + $0x320] sm:$0xff]
          %v1598 = vld [vmem:[#allocation6 + $0x328] sm:$0xff]
          %v1599 = vld [vmem:[#allocation6 + $0x330] sm:$0xff]
          %v1600 = vld [vmem:[#allocation6 + $0x338] sm:$0xff]
          %v1601 = vld [vmem:[#allocation6 + $0x340] sm:$0xff]
          %v1602 = vld [vmem:[#allocation6 + $0x348] sm:$0xff]
          %v1603 = vld [vmem:[#allocation6 + $0x350] sm:$0xff]
          %v1604 = vld [vmem:[#allocation6 + $0x358] sm:$0xff]
          %v1605 = vld [vmem:[#allocation6 + $0x360] sm:$0xff]
          %v1606 = vld [vmem:[#allocation6 + $0x368] sm:$0xff]
          %v1607 = vld [vmem:[#allocation6 + $0x370] sm:$0xff]
          %v1608 = vld [vmem:[#allocation6 + $0x378] sm:$0xff]
          %v1609 = vld [vmem:[#allocation6 + $0x380] sm:$0xff]
          %v1610 = vld [vmem:[#allocation6 + $0x388] sm:$0xff]
          %v1611 = vld [vmem:[#allocation6 + $0x390] sm:$0xff]
          %v1612 = vld [vmem:[#allocation6 + $0x398] sm:$0xff]
          %v1613 = vld [vmem:[#allocation6 + $0x3a0] sm:$0xff]
          %v1614 = vld [vmem:[#allocation6 + $0x3a8] sm:$0xff]
          %v1615 = vld [vmem:[#allocation6 + $0x3b0] sm:$0xff]
          %v1616 = vld [vmem:[#allocation6 + $0x3b8] sm:$0xff]
          %v1617 = vld [vmem:[#allocation6 + $0x3c0] sm:$0xff]
          %v1618 = vld [vmem:[#allocation6 + $0x3c8] sm:$0xff]
          %v1619 = vld [vmem:[#allocation6 + $0x3d0] sm:$0xff]
          %v1620 = vld [vmem:[#allocation6 + $0x3d8] sm:$0xff]
          %v1621 = vld [vmem:[#allocation6 + $0x3e0] sm:$0xff]
          %v1622 = vld [vmem:[#allocation6 + $0x3e8] sm:$0xff]
          %v1623 = vld [vmem:[#allocation6 + $0x3f0] sm:$0xff]
          %v1624 = vld [vmem:[#allocation6 + $0x3f8] sm:$0xff]
          %v1625 = vld [vmem:[#allocation6 + $0x400] sm:$0xff]
          %v1626 = vld [vmem:[#allocation6 + $0x408] sm:$0xff]
          %v1627 = vld [vmem:[#allocation6 + $0x410] sm:$0xff]
          %v1628 = vld [vmem:[#allocation6 + $0x418] sm:$0xff]
          %v1629 = vld [vmem:[#allocation6 + $0x420] sm:$0xff]
          %v1630 = vld [vmem:[#allocation6 + $0x428] sm:$0xff]
          %v1631 = vld [vmem:[#allocation6 + $0x430] sm:$0xff]
          %v1632 = vld [vmem:[#allocation6 + $0x438] sm:$0xff]
          %v1633 = vld [vmem:[#allocation6 + $0x440] sm:$0xff]
          %v1634 = vld [vmem:[#allocation6 + $0x448] sm:$0xff]
          %v1635 = vld [vmem:[#allocation6 + $0x450] sm:$0xff]
          %v1636 = vld [vmem:[#allocation6 + $0x458] sm:$0xff]
          %v1637 = vld [vmem:[#allocation6 + $0x460] sm:$0xff]
          %v1638 = vld [vmem:[#allocation6 + $0x468] sm:$0xff]
          %v1639 = vld [vmem:[#allocation6 + $0x470] sm:$0xff]
          %v1640 = vld [vmem:[#allocation6 + $0x478] sm:$0xff]
          %v1641 = vld [vmem:[#allocation6 + $0x480] sm:$0xff]
          %v1642 = vld [vmem:[#allocation6 + $0x488] sm:$0xff]
          %v1643 = vld [vmem:[#allocation6 + $0x490] sm:$0xff]
          %v1644 = vld [vmem:[#allocation6 + $0x498] sm:$0xff]
          %v1645 = vld [vmem:[#allocation6 + $0x4a0] sm:$0xff]
          %v1646 = vld [vmem:[#allocation6 + $0x4a8] sm:$0xff]
          %v1647 = vld [vmem:[#allocation6 + $0x4b0] sm:$0xff]
          %v1648 = vld [vmem:[#allocation6 + $0x4b8] sm:$0xff]
          %v1649 = vld [vmem:[#allocation6 + $0x4c0] sm:$0xff]
          %v1650 = vld [vmem:[#allocation6 + $0x4c8] sm:$0xff]
          %v1651 = vld [vmem:[#allocation6 + $0x4d0] sm:$0xff]
          %v1652 = vld [vmem:[#allocation6 + $0x4d8] sm:$0xff]
          %v1653 = vld [vmem:[#allocation6 + $0x4e0] sm:$0xff]
          %v1654 = vld [vmem:[#allocation6 + $0x4e8] sm:$0xff]
          %v1655 = vld [vmem:[#allocation6 + $0x4f0] sm:$0xff]
          %v1656 = vld [vmem:[#allocation6 + $0x4f8] sm:$0xff]
          %v1657 = vld [vmem:[#allocation6 + $0x500] sm:$0xff]
          %v1658 = vld [vmem:[#allocation6 + $0x508] sm:$0xff]
          %v1659 = vld [vmem:[#allocation6 + $0x510] sm:$0xff]
          %v1660 = vld [vmem:[#allocation6 + $0x518] sm:$0xff]
          %v1661 = vld [vmem:[#allocation6 + $0x520] sm:$0xff]
          %v1662 = vld [vmem:[#allocation6 + $0x528] sm:$0xff]
          %v1663 = vld [vmem:[#allocation6 + $0x530] sm:$0xff]
          %v1664 = vld [vmem:[#allocation6 + $0x538] sm:$0xff]
          %v1665 = vld [vmem:[#allocation6 + $0x540] sm:$0xff]
          %v1666 = vld [vmem:[#allocation6 + $0x548] sm:$0xff]
          %v1667 = vld [vmem:[#allocation6 + $0x550] sm:$0xff]
          %v1668 = vld [vmem:[#allocation6 + $0x558] sm:$0xff]
          %v1669 = vld [vmem:[#allocation6 + $0x560] sm:$0xff]
          %v1670 = vld [vmem:[#allocation6 + $0x568] sm:$0xff]
          %v1671 = vld [vmem:[#allocation6 + $0x570] sm:$0xff]
          %v1672 = vld [vmem:[#allocation6 + $0x578] sm:$0xff]
          %v1673 = vld [vmem:[#allocation6 + $0x580] sm:$0xff]
          %v1674 = vld [vmem:[#allocation6 + $0x588] sm:$0xff]
          %v1675 = vld [vmem:[#allocation6 + $0x590] sm:$0xff]
          %v1676 = vld [vmem:[#allocation6 + $0x598] sm:$0xff]
          %v1677 = vld [vmem:[#allocation6 + $0x5a0] sm:$0xff]
          %v1678 = vld [vmem:[#allocation6 + $0x5a8] sm:$0xff]
          %v1679 = vld [vmem:[#allocation6 + $0x5b0] sm:$0xff]
          %v1680 = vld [vmem:[#allocation6 + $0x5b8] sm:$0xff]
          %v1681 = vld [vmem:[#allocation6 + $0x5c0] sm:$0xff]
          %v1682 = vld [vmem:[#allocation6 + $0x5c8] sm:$0xff]
          %v1683 = vld [vmem:[#allocation6 + $0x5d0] sm:$0xff]
          %v1684 = vld [vmem:[#allocation6 + $0x5d8] sm:$0xff]
          %v1685 = vld [vmem:[#allocation6 + $0x5e0] sm:$0xff]
          %v1686 = vld [vmem:[#allocation6 + $0x5e8] sm:$0xff]
          %v1687 = vld [vmem:[#allocation6 + $0x5f0] sm:$0xff]
          %v1688 = vld [vmem:[#allocation6 + $0x5f8] sm:$0xff]
          %v1689 = vld [vmem:[#allocation6 + $0x600] sm:$0xff]
          %v1690 = vld [vmem:[#allocation6 + $0x608] sm:$0xff]
          %v1691 = vld [vmem:[#allocation6 + $0x610] sm:$0xff]
          %v1692 = vld [vmem:[#allocation6 + $0x618] sm:$0xff]
          %v1693 = vld [vmem:[#allocation6 + $0x620] sm:$0xff]
          %v1694 = vld [vmem:[#allocation6 + $0x628] sm:$0xff]
          %v1695 = vld [vmem:[#allocation6 + $0x630] sm:$0xff]
          %v1696 = vld [vmem:[#allocation6 + $0x638] sm:$0xff]
          %v1697 = vld [vmem:[#allocation6 + $0x640] sm:$0xff]
          %v1698 = vld [vmem:[#allocation6 + $0x648] sm:$0xff]
          %v1699 = vld [vmem:[#allocation6 + $0x650] sm:$0xff]
          %v1700 = vld [vmem:[#allocation6 + $0x658] sm:$0xff]
          %v1701 = vld [vmem:[#allocation6 + $0x660] sm:$0xff]
          %v1702 = vld [vmem:[#allocation6 + $0x668] sm:$0xff]
          %v1703 = vld [vmem:[#allocation6 + $0x670] sm:$0xff]
          %v1704 = vld [vmem:[#allocation6 + $0x678] sm:$0xff]
          %v1705 = vld [vmem:[#allocation6 + $0x680] sm:$0xff]
          %v1706 = vld [vmem:[#allocation6 + $0x688] sm:$0xff]
          %v1707 = vld [vmem:[#allocation6 + $0x690] sm:$0xff]
          %v1708 = vld [vmem:[#allocation6 + $0x698] sm:$0xff]
          %v1709 = vld [vmem:[#allocation6 + $0x6a0] sm:$0xff]
          %v1710 = vld [vmem:[#allocation6 + $0x6a8] sm:$0xff]
          %v1711 = vld [vmem:[#allocation6 + $0x6b0] sm:$0xff]
          %v1712 = vld [vmem:[#allocation6 + $0x6b8] sm:$0xff]
          %v1713 = vld [vmem:[#allocation6 + $0x6c0] sm:$0xff]
          %v1714 = vld [vmem:[#allocation6 + $0x6c8] sm:$0xff]
          %v1715 = vld [vmem:[#allocation6 + $0x6d0] sm:$0xff]
          %v1716 = vld [vmem:[#allocation6 + $0x6d8] sm:$0xff]
          %v1717 = vld [vmem:[#allocation6 + $0x6e0] sm:$0xff]
          %v1718 = vld [vmem:[#allocation6 + $0x6e8] sm:$0xff]
          %v1719 = vld [vmem:[#allocation6 + $0x6f0] sm:$0xff]
          %v1720 = vld [vmem:[#allocation6 + $0x6f8] sm:$0xff]
          %v1721 = vld [vmem:[#allocation6 + $0x700] sm:$0xff]
          %v1722 = vld [vmem:[#allocation6 + $0x708] sm:$0xff]
          %v1723 = vld [vmem:[#allocation6 + $0x710] sm:$0xff]
          %v1724 = vld [vmem:[#allocation6 + $0x718] sm:$0xff]
          %v1725 = vld [vmem:[#allocation6 + $0x720] sm:$0xff]
          %v1726 = vld [vmem:[#allocation6 + $0x728] sm:$0xff]
          %v1727 = vld [vmem:[#allocation6 + $0x730] sm:$0xff]
          %v1728 = vld [vmem:[#allocation6 + $0x738] sm:$0xff]
          %v1729 = vld [vmem:[#allocation6 + $0x740] sm:$0xff]
          %v1730 = vld [vmem:[#allocation6 + $0x748] sm:$0xff]
          %v1731 = vld [vmem:[#allocation6 + $0x750] sm:$0xff]
          %v1732 = vld [vmem:[#allocation6 + $0x758] sm:$0xff]
          %v1733 = vld [vmem:[#allocation6 + $0x760] sm:$0xff]
          %v1734 = vld [vmem:[#allocation6 + $0x768] sm:$0xff]
          %v1735 = vld [vmem:[#allocation6 + $0x770] sm:$0xff]
          %v1736 = vld [vmem:[#allocation6 + $0x778] sm:$0xff]
          %v1737 = vld [vmem:[#allocation6 + $0x780] sm:$0xff]
          %v1738 = vld [vmem:[#allocation6 + $0x788] sm:$0xff]
          %v1739 = vld [vmem:[#allocation6 + $0x790] sm:$0xff]
          %v1740 = vld [vmem:[#allocation6 + $0x798] sm:$0xff]
          %v1741 = vld [vmem:[#allocation6 + $0x7a0] sm:$0xff]
          %v1742 = vld [vmem:[#allocation6 + $0x7a8] sm:$0xff]
          %v1743 = vld [vmem:[#allocation6 + $0x7b0] sm:$0xff]
          %v1744 = vld [vmem:[#allocation6 + $0x7b8] sm:$0xff]
          %v1745 = vld [vmem:[#allocation6 + $0x7c0] sm:$0xff]
          %v1746 = vld [vmem:[#allocation6 + $0x7c8] sm:$0xff]
          %v1747 = vld [vmem:[#allocation6 + $0x7d0] sm:$0xff]
          %v1748 = vld [vmem:[#allocation6 + $0x7d8] sm:$0xff]
          %v1749 = vld [vmem:[#allocation6 + $0x7e0] sm:$0xff]
          %v1750 = vld [vmem:[#allocation6 + $0x7e8] sm:$0xff]
          %v1751 = vld [vmem:[#allocation6 + $0x7f0] sm:$0xff]
          %v1752 = vld [vmem:[#allocation6 + $0x7f8] sm:$0xff]
          %v1753 = vld [vmem:[%s8] sm:$0xf]
          %v2010 = vunpack.c.l.b16 %v1497
          %v2011 = vunpack.c.h.b16 %v1497
          %v2012 = vunpack.c.l.b16 %v1498
          %v2013 = vunpack.c.h.b16 %v1498
          %v2014 = vunpack.c.l.b16 %v1499
          %v2015 = vunpack.c.h.b16 %v1499
          %v2016 = vunpack.c.l.b16 %v1500
          %v2017 = vunpack.c.h.b16 %v1500
          %v2018 = vunpack.c.l.b16 %v1501
          %v2019 = vunpack.c.h.b16 %v1501
          %v2020 = vunpack.c.l.b16 %v1502
          %v2021 = vunpack.c.h.b16 %v1502
          %v2022 = vunpack.c.l.b16 %v1503
          %v2023 = vunpack.c.h.b16 %v1503
          %v2024 = vunpack.c.l.b16 %v1504
          %v2025 = vunpack.c.h.b16 %v1504
          %v2026 = vunpack.c.l.b16 %v1505
          %v2027 = vunpack.c.h.b16 %v1505
          %v2028 = vunpack.c.l.b16 %v1506
          %v2029 = vunpack.c.h.b16 %v1506
          %v2030 = vunpack.c.l.b16 %v1507
          %v2031 = vunpack.c.h.b16 %v1507
          %v2032 = vunpack.c.l.b16 %v1508
          %v2033 = vunpack.c.h.b16 %v1508
          %v2034 = vunpack.c.l.b16 %v1509
          %v2035 = vunpack.c.h.b16 %v1509
          %v2036 = vunpack.c.l.b16 %v1510
          %v2037 = vunpack.c.h.b16 %v1510
          %v2038 = vunpack.c.l.b16 %v1511
          %v2039 = vunpack.c.h.b16 %v1511
          %v2040 = vunpack.c.l.b16 %v1512
          %v2041 = vunpack.c.h.b16 %v1512
          %v2042 = vunpack.c.l.b16 %v1513
          %v2043 = vunpack.c.h.b16 %v1513
          %v2044 = vunpack.c.l.b16 %v1514
          %v2045 = vunpack.c.h.b16 %v1514
          %v2046 = vunpack.c.l.b16 %v1515
          %v2047 = vunpack.c.h.b16 %v1515
          %v2048 = vunpack.c.l.b16 %v1516
          %v2049 = vunpack.c.h.b16 %v1516
          %v2050 = vunpack.c.l.b16 %v1517
          %v2051 = vunpack.c.h.b16 %v1517
          %v2052 = vunpack.c.l.b16 %v1518
          %v2053 = vunpack.c.h.b16 %v1518
          %v2054 = vunpack.c.l.b16 %v1519
          %v2055 = vunpack.c.h.b16 %v1519
          %v2056 = vunpack.c.l.b16 %v1520
          %v2057 = vunpack.c.h.b16 %v1520
          %v2058 = vunpack.c.l.b16 %v1521
          %v2059 = vunpack.c.h.b16 %v1521
          %v2060 = vunpack.c.l.b16 %v1522
          %v2061 = vunpack.c.h.b16 %v1522
          %v2062 = vunpack.c.l.b16 %v1523
          %v2063 = vunpack.c.h.b16 %v1523
          %v2064 = vunpack.c.l.b16 %v1524
          %v2065 = vunpack.c.h.b16 %v1524
          %v2066 = vunpack.c.l.b16 %v1525
          %v2067 = vunpack.c.h.b16 %v1525
          %v2068 = vunpack.c.l.b16 %v1526
          %v2069 = vunpack.c.h.b16 %v1526
          %v2070 = vunpack.c.l.b16 %v1527
          %v2071 = vunpack.c.h.b16 %v1527
          %v2072 = vunpack.c.l.b16 %v1528
          %v2073 = vunpack.c.h.b16 %v1528
          %v2074 = vunpack.c.l.b16 %v1529
          %v2075 = vunpack.c.h.b16 %v1529
          %v2076 = vunpack.c.l.b16 %v1530
          %v2077 = vunpack.c.h.b16 %v1530
          %v2078 = vunpack.c.l.b16 %v1531
          %v2079 = vunpack.c.h.b16 %v1531
          %v2080 = vunpack.c.l.b16 %v1532
          %v2081 = vunpack.c.h.b16 %v1532
          %v2082 = vunpack.c.l.b16 %v1533
          %v2083 = vunpack.c.h.b16 %v1533
          %v2084 = vunpack.c.l.b16 %v1534
          %v2085 = vunpack.c.h.b16 %v1534
          %v2086 = vunpack.c.l.b16 %v1535
          %v2087 = vunpack.c.h.b16 %v1535
          %v2088 = vunpack.c.l.b16 %v1536
          %v2089 = vunpack.c.h.b16 %v1536
          %v2090 = vunpack.c.l.b16 %v1537
          %v2091 = vunpack.c.h.b16 %v1537
          %v2092 = vunpack.c.l.b16 %v1538
          %v2093 = vunpack.c.h.b16 %v1538
          %v2094 = vunpack.c.l.b16 %v1539
          %v2095 = vunpack.c.h.b16 %v1539
          %v2096 = vunpack.c.l.b16 %v1540
          %v2097 = vunpack.c.h.b16 %v1540
          %v2098 = vunpack.c.l.b16 %v1541
          %v2099 = vunpack.c.h.b16 %v1541
          %v2100 = vunpack.c.l.b16 %v1542
          %v2101 = vunpack.c.h.b16 %v1542
          %v2102 = vunpack.c.l.b16 %v1543
          %v2103 = vunpack.c.h.b16 %v1543
          %v2104 = vunpack.c.l.b16 %v1544
          %v2105 = vunpack.c.h.b16 %v1544
          %v2106 = vunpack.c.l.b16 %v1545
          %v2107 = vunpack.c.h.b16 %v1545
          %v2108 = vunpack.c.l.b16 %v1546
          %v2109 = vunpack.c.h.b16 %v1546
          %v2110 = vunpack.c.l.b16 %v1547
          %v2111 = vunpack.c.h.b16 %v1547
          %v2112 = vunpack.c.l.b16 %v1548
          %v2113 = vunpack.c.h.b16 %v1548
          %v2114 = vunpack.c.l.b16 %v1549
          %v2115 = vunpack.c.h.b16 %v1549
          %v2116 = vunpack.c.l.b16 %v1550
          %v2117 = vunpack.c.h.b16 %v1550
          %v2118 = vunpack.c.l.b16 %v1551
          %v2119 = vunpack.c.h.b16 %v1551
          %v2120 = vunpack.c.l.b16 %v1552
          %v2121 = vunpack.c.h.b16 %v1552
          %v2122 = vunpack.c.l.b16 %v1553
          %v2123 = vunpack.c.h.b16 %v1553
          %v2124 = vunpack.c.l.b16 %v1554
          %v2125 = vunpack.c.h.b16 %v1554
          %v2126 = vunpack.c.l.b16 %v1555
          %v2127 = vunpack.c.h.b16 %v1555
          %v2128 = vunpack.c.l.b16 %v1556
          %v2129 = vunpack.c.h.b16 %v1556
          %v2130 = vunpack.c.l.b16 %v1557
          %v2131 = vunpack.c.h.b16 %v1557
          %v2132 = vunpack.c.l.b16 %v1558
          %v2133 = vunpack.c.h.b16 %v1558
          %v2134 = vunpack.c.l.b16 %v1559
          %v2135 = vunpack.c.h.b16 %v1559
          %v2136 = vunpack.c.l.b16 %v1560
          %v2137 = vunpack.c.h.b16 %v1560
          %v2138 = vunpack.c.l.b16 %v1561
          %v2139 = vunpack.c.h.b16 %v1561
          %v2140 = vunpack.c.l.b16 %v1562
          %v2141 = vunpack.c.h.b16 %v1562
          %v2142 = vunpack.c.l.b16 %v1563
          %v2143 = vunpack.c.h.b16 %v1563
          %v2144 = vunpack.c.l.b16 %v1564
          %v2145 = vunpack.c.h.b16 %v1564
          %v2146 = vunpack.c.l.b16 %v1565
          %v2147 = vunpack.c.h.b16 %v1565
          %v2148 = vunpack.c.l.b16 %v1566
          %v2149 = vunpack.c.h.b16 %v1566
          %v2150 = vunpack.c.l.b16 %v1567
          %v2151 = vunpack.c.h.b16 %v1567
          %v2152 = vunpack.c.l.b16 %v1568
          %v2153 = vunpack.c.h.b16 %v1568
          %v2154 = vunpack.c.l.b16 %v1569
          %v2155 = vunpack.c.h.b16 %v1569
          %v2156 = vunpack.c.l.b16 %v1570
          %v2157 = vunpack.c.h.b16 %v1570
          %v2158 = vunpack.c.l.b16 %v1571
          %v2159 = vunpack.c.h.b16 %v1571
          %v2160 = vunpack.c.l.b16 %v1572
          %v2161 = vunpack.c.h.b16 %v1572
          %v2162 = vunpack.c.l.b16 %v1573
          %v2163 = vunpack.c.h.b16 %v1573
          %v2164 = vunpack.c.l.b16 %v1574
          %v2165 = vunpack.c.h.b16 %v1574
          %v2166 = vunpack.c.l.b16 %v1575
          %v2167 = vunpack.c.h.b16 %v1575
          %v2168 = vunpack.c.l.b16 %v1576
          %v2169 = vunpack.c.h.b16 %v1576
          %v2170 = vunpack.c.l.b16 %v1577
          %v2171 = vunpack.c.h.b16 %v1577
          %v2172 = vunpack.c.l.b16 %v1578
          %v2173 = vunpack.c.h.b16 %v1578
          %v2174 = vunpack.c.l.b16 %v1579
          %v2175 = vunpack.c.h.b16 %v1579
          %v2176 = vunpack.c.l.b16 %v1580
          %v2177 = vunpack.c.h.b16 %v1580
          %v2178 = vunpack.c.l.b16 %v1581
          %v2179 = vunpack.c.h.b16 %v1581
          %v2180 = vunpack.c.l.b16 %v1582
          %v2181 = vunpack.c.h.b16 %v1582
          %v2182 = vunpack.c.l.b16 %v1583
          %v2183 = vunpack.c.h.b16 %v1583
          %v2184 = vunpack.c.l.b16 %v1584
          %v2185 = vunpack.c.h.b16 %v1584
          %v2186 = vunpack.c.l.b16 %v1585
          %v2187 = vunpack.c.h.b16 %v1585
          %v2188 = vunpack.c.l.b16 %v1586
          %v2189 = vunpack.c.h.b16 %v1586
          %v2190 = vunpack.c.l.b16 %v1587
          %v2191 = vunpack.c.h.b16 %v1587
          %v2192 = vunpack.c.l.b16 %v1588
          %v2193 = vunpack.c.h.b16 %v1588
          %v2194 = vunpack.c.l.b16 %v1589
          %v2195 = vunpack.c.h.b16 %v1589
          %v2196 = vunpack.c.l.b16 %v1590
          %v2197 = vunpack.c.h.b16 %v1590
          %v2198 = vunpack.c.l.b16 %v1591
          %v2199 = vunpack.c.h.b16 %v1591
          %v2200 = vunpack.c.l.b16 %v1592
          %v2201 = vunpack.c.h.b16 %v1592
          %v2202 = vunpack.c.l.b16 %v1593
          %v2203 = vunpack.c.h.b16 %v1593
          %v2204 = vunpack.c.l.b16 %v1594
          %v2205 = vunpack.c.h.b16 %v1594
          %v2206 = vunpack.c.l.b16 %v1595
          %v2207 = vunpack.c.h.b16 %v1595
          %v2208 = vunpack.c.l.b16 %v1596
          %v2209 = vunpack.c.h.b16 %v1596
          %v2210 = vunpack.c.l.b16 %v1597
          %v2211 = vunpack.c.h.b16 %v1597
          %v2212 = vunpack.c.l.b16 %v1598
          %v2213 = vunpack.c.h.b16 %v1598
          %v2214 = vunpack.c.l.b16 %v1599
          %v2215 = vunpack.c.h.b16 %v1599
          %v2216 = vunpack.c.l.b16 %v1600
          %v2217 = vunpack.c.h.b16 %v1600
          %v2218 = vunpack.c.l.b16 %v1601
          %v2219 = vunpack.c.h.b16 %v1601
          %v2220 = vunpack.c.l.b16 %v1602
          %v2221 = vunpack.c.h.b16 %v1602
          %v2222 = vunpack.c.l.b16 %v1603
          %v2223 = vunpack.c.h.b16 %v1603
          %v2224 = vunpack.c.l.b16 %v1604
          %v2225 = vunpack.c.h.b16 %v1604
          %v2226 = vunpack.c.l.b16 %v1605
          %v2227 = vunpack.c.h.b16 %v1605
          %v2228 = vunpack.c.l.b16 %v1606
          %v2229 = vunpack.c.h.b16 %v1606
          %v2230 = vunpack.c.l.b16 %v1607
          %v2231 = vunpack.c.h.b16 %v1607
          %v2232 = vunpack.c.l.b16 %v1608
          %v2233 = vunpack.c.h.b16 %v1608
          %v2234 = vunpack.c.l.b16 %v1609
          %v2235 = vunpack.c.h.b16 %v1609
          %v2236 = vunpack.c.l.b16 %v1610
          %v2237 = vunpack.c.h.b16 %v1610
          %v2238 = vunpack.c.l.b16 %v1611
          %v2239 = vunpack.c.h.b16 %v1611
          %v2240 = vunpack.c.l.b16 %v1612
          %v2241 = vunpack.c.h.b16 %v1612
          %v2242 = vunpack.c.l.b16 %v1613
          %v2243 = vunpack.c.h.b16 %v1613
          %v2244 = vunpack.c.l.b16 %v1614
          %v2245 = vunpack.c.h.b16 %v1614
          %v2246 = vunpack.c.l.b16 %v1615
          %v2247 = vunpack.c.h.b16 %v1615
          %v2248 = vunpack.c.l.b16 %v1616
          %v2249 = vunpack.c.h.b16 %v1616
          %v2250 = vunpack.c.l.b16 %v1617
          %v2251 = vunpack.c.h.b16 %v1617
          %v2252 = vunpack.c.l.b16 %v1618
          %v2253 = vunpack.c.h.b16 %v1618
          %v2254 = vunpack.c.l.b16 %v1619
          %v2255 = vunpack.c.h.b16 %v1619
          %v2256 = vunpack.c.l.b16 %v1620
          %v2257 = vunpack.c.h.b16 %v1620
          %v2258 = vunpack.c.l.b16 %v1621
          %v2259 = vunpack.c.h.b16 %v1621
          %v2260 = vunpack.c.l.b16 %v1622
          %v2261 = vunpack.c.h.b16 %v1622
          %v2262 = vunpack.c.l.b16 %v1623
          %v2263 = vunpack.c.h.b16 %v1623
          %v2264 = vunpack.c.l.b16 %v1624
          %v2265 = vunpack.c.h.b16 %v1624
          %v2266 = vunpack.c.l.b16 %v1625
          %v2267 = vunpack.c.h.b16 %v1625
          %v2268 = vunpack.c.l.b16 %v1626
          %v2269 = vunpack.c.h.b16 %v1626
          %v2270 = vunpack.c.l.b16 %v1627
          %v2271 = vunpack.c.h.b16 %v1627
          %v2272 = vunpack.c.l.b16 %v1628
          %v2273 = vunpack.c.h.b16 %v1628
          %v2274 = vunpack.c.l.b16 %v1629
          %v2275 = vunpack.c.h.b16 %v1629
          %v2276 = vunpack.c.l.b16 %v1630
          %v2277 = vunpack.c.h.b16 %v1630
          %v2278 = vunpack.c.l.b16 %v1631
          %v2279 = vunpack.c.h.b16 %v1631
          %v2280 = vunpack.c.l.b16 %v1632
          %v2281 = vunpack.c.h.b16 %v1632
          %v2282 = vunpack.c.l.b16 %v1633
          %v2283 = vunpack.c.h.b16 %v1633
          %v2284 = vunpack.c.l.b16 %v1634
          %v2285 = vunpack.c.h.b16 %v1634
          %v2286 = vunpack.c.l.b16 %v1635
          %v2287 = vunpack.c.h.b16 %v1635
          %v2288 = vunpack.c.l.b16 %v1636
          %v2289 = vunpack.c.h.b16 %v1636
          %v2290 = vunpack.c.l.b16 %v1637
          %v2291 = vunpack.c.h.b16 %v1637
          %v2292 = vunpack.c.l.b16 %v1638
          %v2293 = vunpack.c.h.b16 %v1638
          %v2294 = vunpack.c.l.b16 %v1639
          %v2295 = vunpack.c.h.b16 %v1639
          %v2296 = vunpack.c.l.b16 %v1640
          %v2297 = vunpack.c.h.b16 %v1640
          %v2298 = vunpack.c.l.b16 %v1641
          %v2299 = vunpack.c.h.b16 %v1641
          %v2300 = vunpack.c.l.b16 %v1642
          %v2301 = vunpack.c.h.b16 %v1642
          %v2302 = vunpack.c.l.b16 %v1643
          %v2303 = vunpack.c.h.b16 %v1643
          %v2304 = vunpack.c.l.b16 %v1644
          %v2305 = vunpack.c.h.b16 %v1644
          %v2306 = vunpack.c.l.b16 %v1645
          %v2307 = vunpack.c.h.b16 %v1645
          %v2308 = vunpack.c.l.b16 %v1646
          %v2309 = vunpack.c.h.b16 %v1646
          %v2310 = vunpack.c.l.b16 %v1647
          %v2311 = vunpack.c.h.b16 %v1647
          %v2312 = vunpack.c.l.b16 %v1648
          %v2313 = vunpack.c.h.b16 %v1648
          %v2314 = vunpack.c.l.b16 %v1649
          %v2315 = vunpack.c.h.b16 %v1649
          %v2316 = vunpack.c.l.b16 %v1650
          %v2317 = vunpack.c.h.b16 %v1650
          %v2318 = vunpack.c.l.b16 %v1651
          %v2319 = vunpack.c.h.b16 %v1651
          %v2320 = vunpack.c.l.b16 %v1652
          %v2321 = vunpack.c.h.b16 %v1652
          %v2322 = vunpack.c.l.b16 %v1653
          %v2323 = vunpack.c.h.b16 %v1653
          %v2324 = vunpack.c.l.b16 %v1654
          %v2325 = vunpack.c.h.b16 %v1654
          %v2326 = vunpack.c.l.b16 %v1655
          %v2327 = vunpack.c.h.b16 %v1655
          %v2328 = vunpack.c.l.b16 %v1656
          %v2329 = vunpack.c.h.b16 %v1656
          %v2330 = vunpack.c.l.b16 %v1657
          %v2331 = vunpack.c.h.b16 %v1657
          %v2332 = vunpack.c.l.b16 %v1658
          %v2333 = vunpack.c.h.b16 %v1658
          %v2334 = vunpack.c.l.b16 %v1659
          %v2335 = vunpack.c.h.b16 %v1659
          %v2336 = vunpack.c.l.b16 %v1660
          %v2337 = vunpack.c.h.b16 %v1660
          %v2338 = vunpack.c.l.b16 %v1661
          %v2339 = vunpack.c.h.b16 %v1661
          %v2340 = vunpack.c.l.b16 %v1662
          %v2341 = vunpack.c.h.b16 %v1662
          %v2342 = vunpack.c.l.b16 %v1663
          %v2343 = vunpack.c.h.b16 %v1663
          %v2344 = vunpack.c.l.b16 %v1664
          %v2345 = vunpack.c.h.b16 %v1664
          %v2346 = vunpack.c.l.b16 %v1665
          %v2347 = vunpack.c.h.b16 %v1665
          %v2348 = vunpack.c.l.b16 %v1666
          %v2349 = vunpack.c.h.b16 %v1666
          %v2350 = vunpack.c.l.b16 %v1667
          %v2351 = vunpack.c.h.b16 %v1667
          %v2352 = vunpack.c.l.b16 %v1668
          %v2353 = vunpack.c.h.b16 %v1668
          %v2354 = vunpack.c.l.b16 %v1669
          %v2355 = vunpack.c.h.b16 %v1669
          %v2356 = vunpack.c.l.b16 %v1670
          %v2357 = vunpack.c.h.b16 %v1670
          %v2358 = vunpack.c.l.b16 %v1671
          %v2359 = vunpack.c.h.b16 %v1671
          %v2360 = vunpack.c.l.b16 %v1672
          %v2361 = vunpack.c.h.b16 %v1672
          %v2362 = vunpack.c.l.b16 %v1673
          %v2363 = vunpack.c.h.b16 %v1673
          %v2364 = vunpack.c.l.b16 %v1674
          %v2365 = vunpack.c.h.b16 %v1674
          %v2366 = vunpack.c.l.b16 %v1675
          %v2367 = vunpack.c.h.b16 %v1675
          %v2368 = vunpack.c.l.b16 %v1676
          %v2369 = vunpack.c.h.b16 %v1676
          %v2370 = vunpack.c.l.b16 %v1677
          %v2371 = vunpack.c.h.b16 %v1677
          %v2372 = vunpack.c.l.b16 %v1678
          %v2373 = vunpack.c.h.b16 %v1678
          %v2374 = vunpack.c.l.b16 %v1679
          %v2375 = vunpack.c.h.b16 %v1679
          %v2376 = vunpack.c.l.b16 %v1680
          %v2377 = vunpack.c.h.b16 %v1680
          %v2378 = vunpack.c.l.b16 %v1681
          %v2379 = vunpack.c.h.b16 %v1681
          %v2380 = vunpack.c.l.b16 %v1682
          %v2381 = vunpack.c.h.b16 %v1682
          %v2382 = vunpack.c.l.b16 %v1683
          %v2383 = vunpack.c.h.b16 %v1683
          %v2384 = vunpack.c.l.b16 %v1684
          %v2385 = vunpack.c.h.b16 %v1684
          %v2386 = vunpack.c.l.b16 %v1685
          %v2387 = vunpack.c.h.b16 %v1685
          %v2388 = vunpack.c.l.b16 %v1686
          %v2389 = vunpack.c.h.b16 %v1686
          %v2390 = vunpack.c.l.b16 %v1687
          %v2391 = vunpack.c.h.b16 %v1687
          %v2392 = vunpack.c.l.b16 %v1688
          %v2393 = vunpack.c.h.b16 %v1688
          %v2394 = vunpack.c.l.b16 %v1689
          %v2395 = vunpack.c.h.b16 %v1689
          %v2396 = vunpack.c.l.b16 %v1690
          %v2397 = vunpack.c.h.b16 %v1690
          %v2398 = vunpack.c.l.b16 %v1691
          %v2399 = vunpack.c.h.b16 %v1691
          %v2400 = vunpack.c.l.b16 %v1692
          %v2401 = vunpack.c.h.b16 %v1692
          %v2402 = vunpack.c.l.b16 %v1693
          %v2403 = vunpack.c.h.b16 %v1693
          %v2404 = vunpack.c.l.b16 %v1694
          %v2405 = vunpack.c.h.b16 %v1694
          %v2406 = vunpack.c.l.b16 %v1695
          %v2407 = vunpack.c.h.b16 %v1695
          %v2408 = vunpack.c.l.b16 %v1696
          %v2409 = vunpack.c.h.b16 %v1696
          %v2410 = vunpack.c.l.b16 %v1697
          %v2411 = vunpack.c.h.b16 %v1697
          %v2412 = vunpack.c.l.b16 %v1698
          %v2413 = vunpack.c.h.b16 %v1698
          %v2414 = vunpack.c.l.b16 %v1699
          %v2415 = vunpack.c.h.b16 %v1699
          %v2416 = vunpack.c.l.b16 %v1700
          %v2417 = vunpack.c.h.b16 %v1700
          %v2418 = vunpack.c.l.b16 %v1701
          %v2419 = vunpack.c.h.b16 %v1701
          %v2420 = vunpack.c.l.b16 %v1702
          %v2421 = vunpack.c.h.b16 %v1702
          %v2422 = vunpack.c.l.b16 %v1703
          %v2423 = vunpack.c.h.b16 %v1703
          %v2424 = vunpack.c.l.b16 %v1704
          %v2425 = vunpack.c.h.b16 %v1704
          %v2426 = vunpack.c.l.b16 %v1705
          %v2427 = vunpack.c.h.b16 %v1705
          %v2428 = vunpack.c.l.b16 %v1706
          %v2429 = vunpack.c.h.b16 %v1706
          %v2430 = vunpack.c.l.b16 %v1707
          %v2431 = vunpack.c.h.b16 %v1707
          %v2432 = vunpack.c.l.b16 %v1708
          %v2433 = vunpack.c.h.b16 %v1708
          %v2434 = vunpack.c.l.b16 %v1709
          %v2435 = vunpack.c.h.b16 %v1709
          %v2436 = vunpack.c.l.b16 %v1710
          %v2437 = vunpack.c.h.b16 %v1710
          %v2438 = vunpack.c.l.b16 %v1711
          %v2439 = vunpack.c.h.b16 %v1711
          %v2440 = vunpack.c.l.b16 %v1712
          %v2441 = vunpack.c.h.b16 %v1712
          %v2442 = vunpack.c.l.b16 %v1713
          %v2443 = vunpack.c.h.b16 %v1713
          %v2444 = vunpack.c.l.b16 %v1714
          %v2445 = vunpack.c.h.b16 %v1714
          %v2446 = vunpack.c.l.b16 %v1715
          %v2447 = vunpack.c.h.b16 %v1715
          %v2448 = vunpack.c.l.b16 %v1716
          %v2449 = vunpack.c.h.b16 %v1716
          %v2450 = vunpack.c.l.b16 %v1717
          %v2451 = vunpack.c.h.b16 %v1717
          %v2452 = vunpack.c.l.b16 %v1718
          %v2453 = vunpack.c.h.b16 %v1718
          %v2454 = vunpack.c.l.b16 %v1719
          %v2455 = vunpack.c.h.b16 %v1719
          %v2456 = vunpack.c.l.b16 %v1720
          %v2457 = vunpack.c.h.b16 %v1720
          %v2458 = vunpack.c.l.b16 %v1721
          %v2459 = vunpack.c.h.b16 %v1721
          %v2460 = vunpack.c.l.b16 %v1722
          %v2461 = vunpack.c.h.b16 %v1722
          %v2462 = vunpack.c.l.b16 %v1723
          %v2463 = vunpack.c.h.b16 %v1723
          %v2464 = vunpack.c.l.b16 %v1724
          %v2465 = vunpack.c.h.b16 %v1724
          %v2466 = vunpack.c.l.b16 %v1725
          %v2467 = vunpack.c.h.b16 %v1725
          %v2468 = vunpack.c.l.b16 %v1726
          %v2469 = vunpack.c.h.b16 %v1726
          %v2470 = vunpack.c.l.b16 %v1727
          %v2471 = vunpack.c.h.b16 %v1727
          %v2472 = vunpack.c.l.b16 %v1728
          %v2473 = vunpack.c.h.b16 %v1728
          %v2474 = vunpack.c.l.b16 %v1729
          %v2475 = vunpack.c.h.b16 %v1729
          %v2476 = vunpack.c.l.b16 %v1730
          %v2477 = vunpack.c.h.b16 %v1730
          %v2478 = vunpack.c.l.b16 %v1731
          %v2479 = vunpack.c.h.b16 %v1731
          %v2480 = vunpack.c.l.b16 %v1732
          %v2481 = vunpack.c.h.b16 %v1732
          %v2482 = vunpack.c.l.b16 %v1733
          %v2483 = vunpack.c.h.b16 %v1733
          %v2484 = vunpack.c.l.b16 %v1734
          %v2485 = vunpack.c.h.b16 %v1734
          %v2486 = vunpack.c.l.b16 %v1735
          %v2487 = vunpack.c.h.b16 %v1735
          %v2488 = vunpack.c.l.b16 %v1736
          %v2489 = vunpack.c.h.b16 %v1736
          %v2490 = vunpack.c.l.b16 %v1737
          %v2491 = vunpack.c.h.b16 %v1737
          %v2492 = vunpack.c.l.b16 %v1738
          %v2493 = vunpack.c.h.b16 %v1738
          %v2494 = vunpack.c.l.b16 %v1739
          %v2495 = vunpack.c.h.b16 %v1739
          %v2496 = vunpack.c.l.b16 %v1740
          %v2497 = vunpack.c.h.b16 %v1740
          %v2498 = vunpack.c.l.b16 %v1741
          %v2499 = vunpack.c.h.b16 %v1741
          %v2500 = vunpack.c.l.b16 %v1742
          %v2501 = vunpack.c.h.b16 %v1742
          %v2502 = vunpack.c.l.b16 %v1743
          %v2503 = vunpack.c.h.b16 %v1743
          %v2504 = vunpack.c.l.b16 %v1744
          %v2505 = vunpack.c.h.b16 %v1744
          %v2506 = vunpack.c.l.b16 %v1745
          %v2507 = vunpack.c.h.b16 %v1745
          %v2508 = vunpack.c.l.b16 %v1746
          %v2509 = vunpack.c.h.b16 %v1746
          %v2510 = vunpack.c.l.b16 %v1747
          %v2511 = vunpack.c.h.b16 %v1747
          %v2512 = vunpack.c.l.b16 %v1748
          %v2513 = vunpack.c.h.b16 %v1748
          %v2514 = vunpack.c.l.b16 %v1749
          %v2515 = vunpack.c.h.b16 %v1749
          %v2516 = vunpack.c.l.b16 %v1750
          %v2517 = vunpack.c.h.b16 %v1750
          %v2518 = vunpack.c.l.b16 %v1751
          %v2519 = vunpack.c.h.b16 %v1751
          %v2520 = vunpack.c.l.b16 %v1752
          %v2521 = vunpack.c.h.b16 %v1752
          %v2522 = vpack.c.b16 %v2014, %v2010
          %v2523 = vpack.c.b16 %v2015, %v2011
          %v2524 = vpack.c.b16 %v2016, %v2012
          %v2525 = vpack.c.b16 %v2017, %v2013
          %v2526 = vpack.c.b16 %v2022, %v2018
          %v2527 = vpack.c.b16 %v2023, %v2019
          %v2528 = vpack.c.b16 %v2024, %v2020
          %v2529 = vpack.c.b16 %v2025, %v2021
          %v2530 = vpack.c.b16 %v2030, %v2026
          %v2531 = vpack.c.b16 %v2031, %v2027
          %v2532 = vpack.c.b16 %v2032, %v2028
          %v2533 = vpack.c.b16 %v2033, %v2029
          %v2534 = vpack.c.b16 %v2038, %v2034
          %v2535 = vpack.c.b16 %v2039, %v2035
          %v2536 = vpack.c.b16 %v2040, %v2036
          %v2537 = vpack.c.b16 %v2041, %v2037
          %v2538 = vpack.c.b16 %v2046, %v2042
          %v2539 = vpack.c.b16 %v2047, %v2043
          %v2540 = vpack.c.b16 %v2048, %v2044
          %v2541 = vpack.c.b16 %v2049, %v2045
          %v2542 = vpack.c.b16 %v2054, %v2050
          %v2543 = vpack.c.b16 %v2055, %v2051
          %v2544 = vpack.c.b16 %v2056, %v2052
          %v2545 = vpack.c.b16 %v2057, %v2053
          %v2546 = vpack.c.b16 %v2062, %v2058
          %v2547 = vpack.c.b16 %v2063, %v2059
          %v2548 = vpack.c.b16 %v2064, %v2060
          %v2549 = vpack.c.b16 %v2065, %v2061
          %v2550 = vpack.c.b16 %v2070, %v2066
          %v2551 = vpack.c.b16 %v2071, %v2067
          %v2552 = vpack.c.b16 %v2072, %v2068
          %v2553 = vpack.c.b16 %v2073, %v2069
          %v2554 = vpack.c.b16 %v2078, %v2074
          %v2555 = vpack.c.b16 %v2079, %v2075
          %v2556 = vpack.c.b16 %v2080, %v2076
          %v2557 = vpack.c.b16 %v2081, %v2077
          %v2558 = vpack.c.b16 %v2086, %v2082
          %v2559 = vpack.c.b16 %v2087, %v2083
          %v2560 = vpack.c.b16 %v2088, %v2084
          %v2561 = vpack.c.b16 %v2089, %v2085
          %v2562 = vpack.c.b16 %v2094, %v2090
          %v2563 = vpack.c.b16 %v2095, %v2091
          %v2564 = vpack.c.b16 %v2096, %v2092
          %v2565 = vpack.c.b16 %v2097, %v2093
          %v2566 = vpack.c.b16 %v2102, %v2098
          %v2567 = vpack.c.b16 %v2103, %v2099
          %v2568 = vpack.c.b16 %v2104, %v2100
          %v2569 = vpack.c.b16 %v2105, %v2101
          %v2570 = vpack.c.b16 %v2110, %v2106
          %v2571 = vpack.c.b16 %v2111, %v2107
          %v2572 = vpack.c.b16 %v2112, %v2108
          %v2573 = vpack.c.b16 %v2113, %v2109
          %v2574 = vpack.c.b16 %v2118, %v2114
          %v2575 = vpack.c.b16 %v2119, %v2115
          %v2576 = vpack.c.b16 %v2120, %v2116
          %v2577 = vpack.c.b16 %v2121, %v2117
          %v2578 = vpack.c.b16 %v2126, %v2122
          %v2579 = vpack.c.b16 %v2127, %v2123
          %v2580 = vpack.c.b16 %v2128, %v2124
          %v2581 = vpack.c.b16 %v2129, %v2125
          %v2582 = vpack.c.b16 %v2134, %v2130
          %v2583 = vpack.c.b16 %v2135, %v2131
          %v2584 = vpack.c.b16 %v2136, %v2132
          %v2585 = vpack.c.b16 %v2137, %v2133
          %v2586 = vpack.c.b16 %v2142, %v2138
          %v2587 = vpack.c.b16 %v2143, %v2139
          %v2588 = vpack.c.b16 %v2144, %v2140
          %v2589 = vpack.c.b16 %v2145, %v2141
          %v2590 = vpack.c.b16 %v2150, %v2146
          %v2591 = vpack.c.b16 %v2151, %v2147
          %v2592 = vpack.c.b16 %v2152, %v2148
          %v2593 = vpack.c.b16 %v2153, %v2149
          %v2594 = vpack.c.b16 %v2158, %v2154
          %v2595 = vpack.c.b16 %v2159, %v2155
          %v2596 = vpack.c.b16 %v2160, %v2156
          %v2597 = vpack.c.b16 %v2161, %v2157
          %v2598 = vpack.c.b16 %v2166, %v2162
          %v2599 = vpack.c.b16 %v2167, %v2163
          %v2600 = vpack.c.b16 %v2168, %v2164
          %v2601 = vpack.c.b16 %v2169, %v2165
          %v2602 = vpack.c.b16 %v2174, %v2170
          %v2603 = vpack.c.b16 %v2175, %v2171
          %v2604 = vpack.c.b16 %v2176, %v2172
          %v2605 = vpack.c.b16 %v2177, %v2173
          %v2606 = vpack.c.b16 %v2182, %v2178
          %v2607 = vpack.c.b16 %v2183, %v2179
          %v2608 = vpack.c.b16 %v2184, %v2180
          %v2609 = vpack.c.b16 %v2185, %v2181
          %v2610 = vpack.c.b16 %v2190, %v2186
          %v2611 = vpack.c.b16 %v2191, %v2187
          %v2612 = vpack.c.b16 %v2192, %v2188
          %v2613 = vpack.c.b16 %v2193, %v2189
          %v2614 = vpack.c.b16 %v2198, %v2194
          %v2615 = vpack.c.b16 %v2199, %v2195
          %v2616 = vpack.c.b16 %v2200, %v2196
          %v2617 = vpack.c.b16 %v2201, %v2197
          %v2618 = vpack.c.b16 %v2206, %v2202
          %v2619 = vpack.c.b16 %v2207, %v2203
          %v2620 = vpack.c.b16 %v2208, %v2204
          %v2621 = vpack.c.b16 %v2209, %v2205
          %v2622 = vpack.c.b16 %v2214, %v2210
          %v2623 = vpack.c.b16 %v2215, %v2211
          %v2624 = vpack.c.b16 %v2216, %v2212
          %v2625 = vpack.c.b16 %v2217, %v2213
          %v2626 = vpack.c.b16 %v2222, %v2218
          %v2627 = vpack.c.b16 %v2223, %v2219
          %v2628 = vpack.c.b16 %v2224, %v2220
          %v2629 = vpack.c.b16 %v2225, %v2221
          %v2630 = vpack.c.b16 %v2230, %v2226
          %v2631 = vpack.c.b16 %v2231, %v2227
          %v2632 = vpack.c.b16 %v2232, %v2228
          %v2633 = vpack.c.b16 %v2233, %v2229
          %v2634 = vpack.c.b16 %v2238, %v2234
          %v2635 = vpack.c.b16 %v2239, %v2235
          %v2636 = vpack.c.b16 %v2240, %v2236
          %v2637 = vpack.c.b16 %v2241, %v2237
          %v2638 = vpack.c.b16 %v2246, %v2242
          %v2639 = vpack.c.b16 %v2247, %v2243
          %v2640 = vpack.c.b16 %v2248, %v2244
          %v2641 = vpack.c.b16 %v2249, %v2245
          %v2642 = vpack.c.b16 %v2254, %v2250
          %v2643 = vpack.c.b16 %v2255, %v2251
          %v2644 = vpack.c.b16 %v2256, %v2252
          %v2645 = vpack.c.b16 %v2257, %v2253
          %v2646 = vpack.c.b16 %v2262, %v2258
          %v2647 = vpack.c.b16 %v2263, %v2259
          %v2648 = vpack.c.b16 %v2264, %v2260
          %v2649 = vpack.c.b16 %v2265, %v2261
          %v2650 = vpack.c.b16 %v2270, %v2266
          %v2651 = vpack.c.b16 %v2271, %v2267
          %v2652 = vpack.c.b16 %v2272, %v2268
          %v2653 = vpack.c.b16 %v2273, %v2269
          %v2654 = vpack.c.b16 %v2278, %v2274
          %v2655 = vpack.c.b16 %v2279, %v2275
          %v2656 = vpack.c.b16 %v2280, %v2276
          %v2657 = vpack.c.b16 %v2281, %v2277
          %v2658 = vpack.c.b16 %v2286, %v2282
          %v2659 = vpack.c.b16 %v2287, %v2283
          %v2660 = vpack.c.b16 %v2288, %v2284
          %v2661 = vpack.c.b16 %v2289, %v2285
          %v2662 = vpack.c.b16 %v2294, %v2290
          %v2663 = vpack.c.b16 %v2295, %v2291
          %v2664 = vpack.c.b16 %v2296, %v2292
          %v2665 = vpack.c.b16 %v2297, %v2293
          %v2666 = vpack.c.b16 %v2302, %v2298
          %v2667 = vpack.c.b16 %v2303, %v2299
          %v2668 = vpack.c.b16 %v2304, %v2300
          %v2669 = vpack.c.b16 %v2305, %v2301
          %v2670 = vpack.c.b16 %v2310, %v2306
          %v2671 = vpack.c.b16 %v2311, %v2307
          %v2672 = vpack.c.b16 %v2312, %v2308
          %v2673 = vpack.c.b16 %v2313, %v2309
          %v2674 = vpack.c.b16 %v2318, %v2314
          %v2675 = vpack.c.b16 %v2319, %v2315
          %v2676 = vpack.c.b16 %v2320, %v2316
          %v2677 = vpack.c.b16 %v2321, %v2317
          %v2678 = vpack.c.b16 %v2326, %v2322
          %v2679 = vpack.c.b16 %v2327, %v2323
          %v2680 = vpack.c.b16 %v2328, %v2324
          %v2681 = vpack.c.b16 %v2329, %v2325
          %v2682 = vpack.c.b16 %v2334, %v2330
          %v2683 = vpack.c.b16 %v2335, %v2331
          %v2684 = vpack.c.b16 %v2336, %v2332
          %v2685 = vpack.c.b16 %v2337, %v2333
          %v2686 = vpack.c.b16 %v2342, %v2338
          %v2687 = vpack.c.b16 %v2343, %v2339
          %v2688 = vpack.c.b16 %v2344, %v2340
          %v2689 = vpack.c.b16 %v2345, %v2341
          %v2690 = vpack.c.b16 %v2350, %v2346
          %v2691 = vpack.c.b16 %v2351, %v2347
          %v2692 = vpack.c.b16 %v2352, %v2348
          %v2693 = vpack.c.b16 %v2353, %v2349
          %v2694 = vpack.c.b16 %v2358, %v2354
          %v2695 = vpack.c.b16 %v2359, %v2355
          %v2696 = vpack.c.b16 %v2360, %v2356
          %v2697 = vpack.c.b16 %v2361, %v2357
          %v2698 = vpack.c.b16 %v2366, %v2362
          %v2699 = vpack.c.b16 %v2367, %v2363
          %v2700 = vpack.c.b16 %v2368, %v2364
          %v2701 = vpack.c.b16 %v2369, %v2365
          %v2702 = vpack.c.b16 %v2374, %v2370
          %v2703 = vpack.c.b16 %v2375, %v2371
          %v2704 = vpack.c.b16 %v2376, %v2372
          %v2705 = vpack.c.b16 %v2377, %v2373
          %v2706 = vpack.c.b16 %v2382, %v2378
          %v2707 = vpack.c.b16 %v2383, %v2379
          %v2708 = vpack.c.b16 %v2384, %v2380
          %v2709 = vpack.c.b16 %v2385, %v2381
          %v2710 = vpack.c.b16 %v2390, %v2386
          %v2711 = vpack.c.b16 %v2391, %v2387
          %v2712 = vpack.c.b16 %v2392, %v2388
          %v2713 = vpack.c.b16 %v2393, %v2389
          %v2714 = vpack.c.b16 %v2398, %v2394
          %v2715 = vpack.c.b16 %v2399, %v2395
          %v2716 = vpack.c.b16 %v2400, %v2396
          %v2717 = vpack.c.b16 %v2401, %v2397
          %v2718 = vpack.c.b16 %v2406, %v2402
          %v2719 = vpack.c.b16 %v2407, %v2403
          %v2720 = vpack.c.b16 %v2408, %v2404
          %v2721 = vpack.c.b16 %v2409, %v2405
          %v2722 = vpack.c.b16 %v2414, %v2410
          %v2723 = vpack.c.b16 %v2415, %v2411
          %v2724 = vpack.c.b16 %v2416, %v2412
          %v2725 = vpack.c.b16 %v2417, %v2413
          %v2726 = vpack.c.b16 %v2422, %v2418
          %v2727 = vpack.c.b16 %v2423, %v2419
          %v2728 = vpack.c.b16 %v2424, %v2420
          %v2729 = vpack.c.b16 %v2425, %v2421
          %v2730 = vpack.c.b16 %v2430, %v2426
          %v2731 = vpack.c.b16 %v2431, %v2427
          %v2732 = vpack.c.b16 %v2432, %v2428
          %v2733 = vpack.c.b16 %v2433, %v2429
          %v2734 = vpack.c.b16 %v2438, %v2434
          %v2735 = vpack.c.b16 %v2439, %v2435
          %v2736 = vpack.c.b16 %v2440, %v2436
          %v2737 = vpack.c.b16 %v2441, %v2437
          %v2738 = vpack.c.b16 %v2446, %v2442
          %v2739 = vpack.c.b16 %v2447, %v2443
          %v2740 = vpack.c.b16 %v2448, %v2444
          %v2741 = vpack.c.b16 %v2449, %v2445
          %v2742 = vpack.c.b16 %v2454, %v2450
          %v2743 = vpack.c.b16 %v2455, %v2451
          %v2744 = vpack.c.b16 %v2456, %v2452
          %v2745 = vpack.c.b16 %v2457, %v2453
          %v2746 = vpack.c.b16 %v2462, %v2458
          %v2747 = vpack.c.b16 %v2463, %v2459
          %v2748 = vpack.c.b16 %v2464, %v2460
          %v2749 = vpack.c.b16 %v2465, %v2461
          %v2750 = vpack.c.b16 %v2470, %v2466
          %v2751 = vpack.c.b16 %v2471, %v2467
          %v2752 = vpack.c.b16 %v2472, %v2468
          %v2753 = vpack.c.b16 %v2473, %v2469
          %v2754 = vpack.c.b16 %v2478, %v2474
          %v2755 = vpack.c.b16 %v2479, %v2475
          %v2756 = vpack.c.b16 %v2480, %v2476
          %v2757 = vpack.c.b16 %v2481, %v2477
          %v2758 = vpack.c.b16 %v2486, %v2482
          %v2759 = vpack.c.b16 %v2487, %v2483
          %v2760 = vpack.c.b16 %v2488, %v2484
          %v2761 = vpack.c.b16 %v2489, %v2485
          %v2762 = vpack.c.b16 %v2494, %v2490
          %v2763 = vpack.c.b16 %v2495, %v2491
          %v2764 = vpack.c.b16 %v2496, %v2492
          %v2765 = vpack.c.b16 %v2497, %v2493
          %v2766 = vpack.c.b16 %v2502, %v2498
          %v2767 = vpack.c.b16 %v2503, %v2499
          %v2768 = vpack.c.b16 %v2504, %v2500
          %v2769 = vpack.c.b16 %v2505, %v2501
          %v2770 = vpack.c.b16 %v2510, %v2506
          %v2771 = vpack.c.b16 %v2511, %v2507
          %v2772 = vpack.c.b16 %v2512, %v2508
          %v2773 = vpack.c.b16 %v2513, %v2509
          %v2774 = vpack.c.b16 %v2518, %v2514
          %v2775 = vpack.c.b16 %v2519, %v2515
          %v2776 = vpack.c.b16 %v2520, %v2516
          %v2777 = vpack.c.b16 %v2521, %v2517
          %v3035 = vlaneseq
          %v3036 = vshrl.u32 %v3035, 7
          %v3037 = vsub.s32 0, %v3036
          %v3038 = vrot.slane %v1753, %v3037
          %v3039 = vlaneseq
          %v3040 = vshrl.u32 %v3039, 7
          %v3041 = vsub.s32 1, %v3040
          %v3042 = vrot.slane %v1753, %v3041
          %v3043 = vlaneseq
          %v3044 = vshrl.u32 %v3043, 7
          %v3045 = vsub.s32 2, %v3044
          %v3046 = vrot.slane %v1753, %v3045
          %v3047 = vlaneseq
          %v3048 = vshrl.u32 %v3047, 7
          %v3049 = vsub.s32 3, %v3048
          %v3050 = vrot.slane %v1753, %v3049
          %3055 = vmatprep.subr.bf16.mxu0 %v2523
          %3056 = vmatpush1.bf16.msra.mxu0 %v2522
          %3057 = vmatprep.subr.bf16.mxu0 %v2527
          %3058 = vmatpush1.bf16.msra.mxu0 %v2526
          %3059 = vmatprep.subr.bf16.mxu0 %v2531
          %3060 = vmatpush1.bf16.msra.mxu0 %v2530
          %3061 = vmatprep.subr.bf16.mxu0 %v2535
          %3062 = vmatpush1.bf16.msra.mxu0 %v2534
          %3063 = vmatprep.subr.bf16.mxu0 %v2539
          %3064 = vmatpush1.bf16.msra.mxu0 %v2538
          %3065 = vmatprep.subr.bf16.mxu0 %v2543
          %3066 = vmatpush1.bf16.msra.mxu0 %v2542
          %3067 = vmatprep.subr.bf16.mxu0 %v2547
          %3068 = vmatpush1.bf16.msra.mxu0 %v2546
          %3069 = vmatprep.subr.bf16.mxu0 %v2551
          %3070 = vmatpush1.bf16.msra.mxu0 %v2550
          %3071 = vmatprep.subr.bf16.mxu0 %v2555
          %3072 = vmatpush1.bf16.msra.mxu0 %v2554
          %3073 = vmatprep.subr.bf16.mxu0 %v2559
          %3074 = vmatpush1.bf16.msra.mxu0 %v2558
          %3075 = vmatprep.subr.bf16.mxu0 %v2563
          %3076 = vmatpush1.bf16.msra.mxu0 %v2562
          %3077 = vmatprep.subr.bf16.mxu0 %v2567
          %3078 = vmatpush1.bf16.msra.mxu0 %v2566
          %3079 = vmatprep.subr.bf16.mxu0 %v2571
          %3080 = vmatpush1.bf16.msra.mxu0 %v2570
          %3081 = vmatprep.subr.bf16.mxu0 %v2575
          %3082 = vmatpush1.bf16.msra.mxu0 %v2574
          %3083 = vmatprep.subr.bf16.mxu0 %v2579
          %3084 = vmatpush1.bf16.msra.mxu0 %v2578
          %3085 = vmatprep.subr.bf16.mxu0 %v2583
          %3086 = vmatpush1.bf16.msra.mxu0 %v2582
          %3087 = vmatprep.mubr.bf16.mxu0 %v1490
          %3088 = vmatmul.mubr.bf16.gmra.mrb[0].mxu0 %v1489
          %v3089 = vpop.f32.mrb[0].mxu0
          %v3090 = vadd.f32 %v3038, %v3089
          %v3091 = vpop.f32.mrb[0].mxu0
          %v3092 = vadd.f32 %v3042, %v3091
          %v3093 = vpop.f32.mrb[0].mxu0
          %v3094 = vpop.f32.mrb[0].mxu0
          %3095 = vdwg.mxu0
          %3096 = vmatprep.subr.bf16.mxu0 %v2587
          %3097 = vmatpush1.bf16.msra.mxu0 %v2586
          %3098 = vmatprep.subr.bf16.mxu0 %v2591
          %3099 = vmatpush1.bf16.msra.mxu0 %v2590
          %3100 = vmatprep.subr.bf16.mxu0 %v2595
          %3101 = vmatpush1.bf16.msra.mxu0 %v2594
          %3102 = vmatprep.subr.bf16.mxu0 %v2599
          %3103 = vmatpush1.bf16.msra.mxu0 %v2598
          %3104 = vmatprep.subr.bf16.mxu0 %v2603
          %3105 = vmatpush1.bf16.msra.mxu0 %v2602
          %3106 = vmatprep.subr.bf16.mxu0 %v2607
          %3107 = vmatpush1.bf16.msra.mxu0 %v2606
          %3108 = vmatprep.subr.bf16.mxu0 %v2611
          %3109 = vmatpush1.bf16.msra.mxu0 %v2610
          %3110 = vmatprep.subr.bf16.mxu0 %v2615
          %3111 = vmatpush1.bf16.msra.mxu0 %v2614
          %3112 = vmatprep.subr.bf16.mxu0 %v2619
          %3113 = vmatpush1.bf16.msra.mxu0 %v2618
          %3114 = vmatprep.subr.bf16.mxu0 %v2623
          %3115 = vmatpush1.bf16.msra.mxu0 %v2622
          %3116 = vmatprep.subr.bf16.mxu0 %v2627
          %3117 = vmatpush1.bf16.msra.mxu0 %v2626
          %3118 = vmatprep.subr.bf16.mxu0 %v2631
          %3119 = vmatpush1.bf16.msra.mxu0 %v2630
          %3120 = vmatprep.subr.bf16.mxu0 %v2635
          %3121 = vmatpush1.bf16.msra.mxu0 %v2634
          %3122 = vmatprep.subr.bf16.mxu0 %v2639
          %3123 = vmatpush1.bf16.msra.mxu0 %v2638
          %3124 = vmatprep.subr.bf16.mxu0 %v2643
          %3125 = vmatpush1.bf16.msra.mxu0 %v2642
          %3126 = vmatprep.subr.bf16.mxu0 %v2647
          %3127 = vmatpush1.bf16.msra.mxu0 %v2646
          %3128 = vmatprep.mubr.bf16.mxu0 %v1492
          %3129 = vmatmul.mubr.bf16.gmra.mrb[0].mxu0 %v1491
          %v3130 = vpop.f32.mrb[0].mxu0
          %v3131 = vadd.f32 %v3090, %v3130
          %v3132 = vpop.f32.mrb[0].mxu0
          %v3133 = vadd.f32 %v3092, %v3132
          %v3134 = vpop.f32.mrb[0].mxu0
          %v3135 = vpop.f32.mrb[0].mxu0
          %3136 = vdwg.mxu0
          %3137 = vmatprep.subr.bf16.mxu0 %v2651
          %3138 = vmatpush1.bf16.msra.mxu0 %v2650
          %3139 = vmatprep.subr.bf16.mxu0 %v2655
          %3140 = vmatpush1.bf16.msra.mxu0 %v2654
          %3141 = vmatprep.subr.bf16.mxu0 %v2659
          %3142 = vmatpush1.bf16.msra.mxu0 %v2658
          %3143 = vmatprep.subr.bf16.mxu0 %v2663
          %3144 = vmatpush1.bf16.msra.mxu0 %v2662
          %3145 = vmatprep.subr.bf16.mxu0 %v2667
          %3146 = vmatpush1.bf16.msra.mxu0 %v2666
          %3147 = vmatprep.subr.bf16.mxu0 %v2671
          %3148 = vmatpush1.bf16.msra.mxu0 %v2670
          %3149 = vmatprep.subr.bf16.mxu0 %v2675
          %3150 = vmatpush1.bf16.msra.mxu0 %v2674
          %3151 = vmatprep.subr.bf16.mxu0 %v2679
          %3152 = vmatpush1.bf16.msra.mxu0 %v2678
          %3153 = vmatprep.subr.bf16.mxu0 %v2683
          %3154 = vmatpush1.bf16.msra.mxu0 %v2682
          %3155 = vmatprep.subr.bf16.mxu0 %v2687
          %3156 = vmatpush1.bf16.msra.mxu0 %v2686
          %3157 = vmatprep.subr.bf16.mxu0 %v2691
          %3158 = vmatpush1.bf16.msra.mxu0 %v2690
          %3159 = vmatprep.subr.bf16.mxu0 %v2695
          %3160 = vmatpush1.bf16.msra.mxu0 %v2694
          %3161 = vmatprep.subr.bf16.mxu0 %v2699
          %3162 = vmatpush1.bf16.msra.mxu0 %v2698
          %3163 = vmatprep.subr.bf16.mxu0 %v2703
          %3164 = vmatpush1.bf16.msra.mxu0 %v2702
          %3165 = vmatprep.subr.bf16.mxu0 %v2707
          %3166 = vmatpush1.bf16.msra.mxu0 %v2706
          %3167 = vmatprep.subr.bf16.mxu0 %v2711
          %3168 = vmatpush1.bf16.msra.mxu0 %v2710
          %3169 = vmatprep.mubr.bf16.mxu0 %v1494
          %3170 = vmatmul.mubr.bf16.gmra.mrb[0].mxu0 %v1493
          %v3171 = vpop.f32.mrb[0].mxu0
          %v3172 = vadd.f32 %v3131, %v3171
          %v3173 = vpop.f32.mrb[0].mxu0
          %v3174 = vadd.f32 %v3133, %v3173
          %v3175 = vpop.f32.mrb[0].mxu0
          %v3176 = vpop.f32.mrb[0].mxu0
          %3177 = vdwg.mxu0
          %3178 = vmatprep.subr.bf16.mxu0 %v2715
          %3179 = vmatpush1.bf16.msra.mxu0 %v2714
          %3180 = vmatprep.subr.bf16.mxu0 %v2719
          %3181 = vmatpush1.bf16.msra.mxu0 %v2718
          %3182 = vmatprep.subr.bf16.mxu0 %v2723
          %3183 = vmatpush1.bf16.msra.mxu0 %v2722
          %3184 = vmatprep.subr.bf16.mxu0 %v2727
          %3185 = vmatpush1.bf16.msra.mxu0 %v2726
          %3186 = vmatprep.subr.bf16.mxu0 %v2731
          %3187 = vmatpush1.bf16.msra.mxu0 %v2730
          %3188 = vmatprep.subr.bf16.mxu0 %v2735
          %3189 = vmatpush1.bf16.msra.mxu0 %v2734
          %3190 = vmatprep.subr.bf16.mxu0 %v2739
          %3191 = vmatpush1.bf16.msra.mxu0 %v2738
          %3192 = vmatprep.subr.bf16.mxu0 %v2743
          %3193 = vmatpush1.bf16.msra.mxu0 %v2742
          %3194 = vmatprep.subr.bf16.mxu0 %v2747
          %3195 = vmatpush1.bf16.msra.mxu0 %v2746
          %3196 = vmatprep.subr.bf16.mxu0 %v2751
          %3197 = vmatpush1.bf16.msra.mxu0 %v2750
          %3198 = vmatprep.subr.bf16.mxu0 %v2755
          %3199 = vmatpush1.bf16.msra.mxu0 %v2754
          %3200 = vmatprep.subr.bf16.mxu0 %v2759
          %3201 = vmatpush1.bf16.msra.mxu0 %v2758
          %3202 = vmatprep.subr.bf16.mxu0 %v2763
          %3203 = vmatpush1.bf16.msra.mxu0 %v2762
          %3204 = vmatprep.subr.bf16.mxu0 %v2767
          %3205 = vmatpush1.bf16.msra.mxu0 %v2766
          %3206 = vmatprep.subr.bf16.mxu0 %v2771
          %3207 = vmatpush1.bf16.msra.mxu0 %v2770
          %3208 = vmatprep.subr.bf16.mxu0 %v2775
          %3209 = vmatpush1.bf16.msra.mxu0 %v2774
          %3210 = vmatprep.mubr.bf16.mxu0 %v1496
          %3211 = vmatmul.mubr.bf16.gmra.mrb[0].mxu0 %v1495
          %v3212 = vpop.f32.mrb[0].mxu0
          %v3213 = vadd.f32 %v3172, %v3212
          %v3214 = vpop.f32.mrb[0].mxu0
          %v3215 = vadd.f32 %v3174, %v3214
          %v3216 = vpop.f32.mrb[0].mxu0
          %v3217 = vpop.f32.mrb[0].mxu0
          %3218 = vdwg.mxu0
          %3219 = vmatprep.subr.bf16.mxu0 %v2525
          %3220 = vmatpush1.bf16.msra.mxu0 %v2524
          %3221 = vmatprep.subr.bf16.mxu0 %v2529
          %3222 = vmatpush1.bf16.msra.mxu0 %v2528
          %3223 = vmatprep.subr.bf16.mxu0 %v2533
          %3224 = vmatpush1.bf16.msra.mxu0 %v2532
          %3225 = vmatprep.subr.bf16.mxu0 %v2537
          %3226 = vmatpush1.bf16.msra.mxu0 %v2536
          %3227 = vmatprep.subr.bf16.mxu0 %v2541
          %3228 = vmatpush1.bf16.msra.mxu0 %v2540
          %3229 = vmatprep.subr.bf16.mxu0 %v2545
          %3230 = vmatpush1.bf16.msra.mxu0 %v2544
          %3231 = vmatprep.subr.bf16.mxu0 %v2549
          %3232 = vmatpush1.bf16.msra.mxu0 %v2548
          %3233 = vmatprep.subr.bf16.mxu0 %v2553
          %3234 = vmatpush1.bf16.msra.mxu0 %v2552
          %3235 = vmatprep.subr.bf16.mxu0 %v2557
          %3236 = vmatpush1.bf16.msra.mxu0 %v2556
          %3237 = vmatprep.subr.bf16.mxu0 %v2561
          %3238 = vmatpush1.bf16.msra.mxu0 %v2560
          %3239 = vmatprep.subr.bf16.mxu0 %v2565
          %3240 = vmatpush1.bf16.msra.mxu0 %v2564
          %3241 = vmatprep.subr.bf16.mxu0 %v2569
          %3242 = vmatpush1.bf16.msra.mxu0 %v2568
          %3243 = vmatprep.subr.bf16.mxu0 %v2573
          %3244 = vmatpush1.bf16.msra.mxu0 %v2572
          %3245 = vmatprep.subr.bf16.mxu0 %v2577
          %3246 = vmatpush1.bf16.msra.mxu0 %v2576
          %3247 = vmatprep.subr.bf16.mxu0 %v2581
          %3248 = vmatpush1.bf16.msra.mxu0 %v2580
          %3249 = vmatprep.subr.bf16.mxu0 %v2585
          %3250 = vmatpush1.bf16.msra.mxu0 %v2584
          %3251 = vmatprep.mubr.bf16.mxu0 %v1490
          %3252 = vmatmul.mubr.bf16.gmra.mrb[0].mxu0 %v1489
          %v3253 = vpop.f32.mrb[0].mxu0
          %v3254 = vadd.f32 %v3046, %v3253
          %v3255 = vpop.f32.mrb[0].mxu0
          %v3256 = vadd.f32 %v3050, %v3255
          %v3257 = vpop.f32.mrb[0].mxu0
          %v3258 = vpop.f32.mrb[0].mxu0
          %3259 = vdwg.mxu0
          %3260 = vmatprep.subr.bf16.mxu0 %v2589
          %3261 = vmatpush1.bf16.msra.mxu0 %v2588
          %3262 = vmatprep.subr.bf16.mxu0 %v2593
          %3263 = vmatpush1.bf16.msra.mxu0 %v2592
          %3264 = vmatprep.subr.bf16.mxu0 %v2597
          %3265 = vmatpush1.bf16.msra.mxu0 %v2596
          %3266 = vmatprep.subr.bf16.mxu0 %v2601
          %3267 = vmatpush1.bf16.msra.mxu0 %v2600
          %3268 = vmatprep.subr.bf16.mxu0 %v2605
          %3269 = vmatpush1.bf16.msra.mxu0 %v2604
          %3270 = vmatprep.subr.bf16.mxu0 %v2609
          %3271 = vmatpush1.bf16.msra.mxu0 %v2608
          %3272 = vmatprep.subr.bf16.mxu0 %v2613
          %3273 = vmatpush1.bf16.msra.mxu0 %v2612
          %3274 = vmatprep.subr.bf16.mxu0 %v2617
          %3275 = vmatpush1.bf16.msra.mxu0 %v2616
          %3276 = vmatprep.subr.bf16.mxu0 %v2621
          %3277 = vmatpush1.bf16.msra.mxu0 %v2620
          %3278 = vmatprep.subr.bf16.mxu0 %v2625
          %3279 = vmatpush1.bf16.msra.mxu0 %v2624
          %3280 = vmatprep.subr.bf16.mxu0 %v2629
          %3281 = vmatpush1.bf16.msra.mxu0 %v2628
          %3282 = vmatprep.subr.bf16.mxu0 %v2633
          %3283 = vmatpush1.bf16.msra.mxu0 %v2632
          %3284 = vmatprep.subr.bf16.mxu0 %v2637
          %3285 = vmatpush1.bf16.msra.mxu0 %v2636
          %3286 = vmatprep.subr.bf16.mxu0 %v2641
          %3287 = vmatpush1.bf16.msra.mxu0 %v2640
          %3288 = vmatprep.subr.bf16.mxu0 %v2645
          %3289 = vmatpush1.bf16.msra.mxu0 %v2644
          %3290 = vmatprep.subr.bf16.mxu0 %v2649
          %3291 = vmatpush1.bf16.msra.mxu0 %v2648
          %3292 = vmatprep.mubr.bf16.mxu0 %v1492
          %3293 = vmatmul.mubr.bf16.gmra.mrb[0].mxu0 %v1491
          %v3294 = vpop.f32.mrb[0].mxu0
          %v3295 = vadd.f32 %v3254, %v3294
          %v3296 = vpop.f32.mrb[0].mxu0
          %v3297 = vadd.f32 %v3256, %v3296
          %v3298 = vpop.f32.mrb[0].mxu0
          %v3299 = vpop.f32.mrb[0].mxu0
          %3300 = vdwg.mxu0
          %3301 = vmatprep.subr.bf16.mxu0 %v2653
          %3302 = vmatpush1.bf16.msra.mxu0 %v2652
          %3303 = vmatprep.subr.bf16.mxu0 %v2657
          %3304 = vmatpush1.bf16.msra.mxu0 %v2656
          %3305 = vmatprep.subr.bf16.mxu0 %v2661
          %3306 = vmatpush1.bf16.msra.mxu0 %v2660
          %3307 = vmatprep.subr.bf16.mxu0 %v2665
          %3308 = vmatpush1.bf16.msra.mxu0 %v2664
          %3309 = vmatprep.subr.bf16.mxu0 %v2669
          %3310 = vmatpush1.bf16.msra.mxu0 %v2668
          %3311 = vmatprep.subr.bf16.mxu0 %v2673
          %3312 = vmatpush1.bf16.msra.mxu0 %v2672
          %3313 = vmatprep.subr.bf16.mxu0 %v2677
          %3314 = vmatpush1.bf16.msra.mxu0 %v2676
          %3315 = vmatprep.subr.bf16.mxu0 %v2681
          %3316 = vmatpush1.bf16.msra.mxu0 %v2680
          %3317 = vmatprep.subr.bf16.mxu0 %v2685
          %3318 = vmatpush1.bf16.msra.mxu0 %v2684
          %3319 = vmatprep.subr.bf16.mxu0 %v2689
          %3320 = vmatpush1.bf16.msra.mxu0 %v2688
          %3321 = vmatprep.subr.bf16.mxu0 %v2693
          %3322 = vmatpush1.bf16.msra.mxu0 %v2692
          %3323 = vmatprep.subr.bf16.mxu0 %v2697
          %3324 = vmatpush1.bf16.msra.mxu0 %v2696
          %3325 = vmatprep.subr.bf16.mxu0 %v2701
          %3326 = vmatpush1.bf16.msra.mxu0 %v2700
          %3327 = vmatprep.subr.bf16.mxu0 %v2705
          %3328 = vmatpush1.bf16.msra.mxu0 %v2704
          %3329 = vmatprep.subr.bf16.mxu0 %v2709
          %3330 = vmatpush1.bf16.msra.mxu0 %v2708
          %3331 = vmatprep.subr.bf16.mxu0 %v2713
          %3332 = vmatpush1.bf16.msra.mxu0 %v2712
          %3333 = vmatprep.mubr.bf16.mxu0 %v1494
          %3334 = vmatmul.mubr.bf16.gmra.mrb[0].mxu0 %v1493
          %v3335 = vpop.f32.mrb[0].mxu0
          %v3336 = vadd.f32 %v3295, %v3335
          %v3337 = vpop.f32.mrb[0].mxu0
          %v3338 = vadd.f32 %v3297, %v3337
          %v3339 = vpop.f32.mrb[0].mxu0
          %v3340 = vpop.f32.mrb[0].mxu0
          %3341 = vdwg.mxu0
          %3342 = vmatprep.subr.bf16.mxu0 %v2717
          %3343 = vmatpush1.bf16.msra.mxu0 %v2716
          %3344 = vmatprep.subr.bf16.mxu0 %v2721
          %3345 = vmatpush1.bf16.msra.mxu0 %v2720
          %3346 = vmatprep.subr.bf16.mxu0 %v2725
          %3347 = vmatpush1.bf16.msra.mxu0 %v2724
          %3348 = vmatprep.subr.bf16.mxu0 %v2729
          %3349 = vmatpush1.bf16.msra.mxu0 %v2728
          %3350 = vmatprep.subr.bf16.mxu0 %v2733
          %3351 = vmatpush1.bf16.msra.mxu0 %v2732
          %3352 = vmatprep.subr.bf16.mxu0 %v2737
          %3353 = vmatpush1.bf16.msra.mxu0 %v2736
          %3354 = vmatprep.subr.bf16.mxu0 %v2741
          %3355 = vmatpush1.bf16.msra.mxu0 %v2740
          %3356 = vmatprep.subr.bf16.mxu0 %v2745
          %3357 = vmatpush1.bf16.msra.mxu0 %v2744
          %3358 = vmatprep.subr.bf16.mxu0 %v2749
          %3359 = vmatpush1.bf16.msra.mxu0 %v2748
          %3360 = vmatprep.subr.bf16.mxu0 %v2753
          %3361 = vmatpush1.bf16.msra.mxu0 %v2752
          %3362 = vmatprep.subr.bf16.mxu0 %v2757
          %3363 = vmatpush1.bf16.msra.mxu0 %v2756
          %3364 = vmatprep.subr.bf16.mxu0 %v2761
          %3365 = vmatpush1.bf16.msra.mxu0 %v2760
          %3366 = vmatprep.subr.bf16.mxu0 %v2765
          %3367 = vmatpush1.bf16.msra.mxu0 %v2764
          %3368 = vmatprep.subr.bf16.mxu0 %v2769
          %3369 = vmatpush1.bf16.msra.mxu0 %v2768
          %3370 = vmatprep.subr.bf16.mxu0 %v2773
          %3371 = vmatpush1.bf16.msra.mxu0 %v2772
          %3372 = vmatprep.subr.bf16.mxu0 %v2777
          %3373 = vmatpush1.bf16.msra.mxu0 %v2776
          %3374 = vmatprep.mubr.bf16.mxu0 %v1496
          %3375 = vmatmul.mubr.bf16.gmra.mrb[0].mxu0 %v1495
          %v3376 = vpop.f32.mrb[0].mxu0
          %v3377 = vadd.f32 %v3336, %v3376
          %v3378 = vpop.f32.mrb[0].mxu0
          %v3379 = vadd.f32 %v3338, %v3378
          %v3380 = vpop.f32.mrb[0].mxu0
          %v3381 = vpop.f32.mrb[0].mxu0
          %3382 = vdwg.mxu0
          %v3383 = vmax.f32 %v3213, 0.0
          %v3384 = vmax.f32 %v3215, 0.0
          %v3385 = vmax.f32 %v3377, 0.0
          %v3386 = vmax.f32 %v3379, 0.0
          %v3387 = vpack.c.bf16 %v3383, %v3383
          %v3388 = vpack.c.bf16 %v3384, %v3384
          %v3389 = vpack.c.bf16 %v3385, %v3385
          %v3390 = vpack.c.bf16 %v3386, %v3386
          %v3391 = vld [vmem:[#allocation8] sm:$0xff]
          %v3392 = vld [vmem:[#allocation8 + $0x8] sm:$0xff]
          %v3393 = vld [vmem:[#allocation8 + $0x10] sm:$0xff]
          %v3394 = vld [vmem:[#allocation8 + $0x18] sm:$0xff]
          %v3395 = vld [vmem:[#allocation8 + $0x20] sm:$0xff]
          %v3396 = vld [vmem:[#allocation8 + $0x28] sm:$0xff]
          %v3397 = vld [vmem:[#allocation8 + $0x30] sm:$0xff]
          %v3398 = vld [vmem:[#allocation8 + $0x38] sm:$0xff]
          %v3399 = vld [vmem:[#allocation8 + $0x40] sm:$0xff]
          %v3400 = vld [vmem:[#allocation8 + $0x48] sm:$0xff]
          %v3401 = vld [vmem:[#allocation8 + $0x50] sm:$0xff]
          %v3402 = vld [vmem:[#allocation8 + $0x58] sm:$0xff]
          %v3403 = vld [vmem:[#allocation8 + $0x60] sm:$0xff]
          %v3404 = vld [vmem:[#allocation8 + $0x68] sm:$0xff]
          %v3405 = vld [vmem:[#allocation8 + $0x70] sm:$0xff]
          %v3406 = vld [vmem:[#allocation8 + $0x78] sm:$0xff]
          %v3407 = vld [vmem:[#allocation8 + $0x80] sm:$0xff]
          %v3408 = vld [vmem:[#allocation8 + $0x88] sm:$0xff]
          %v3409 = vld [vmem:[#allocation8 + $0x90] sm:$0xff]
          %v3410 = vld [vmem:[#allocation8 + $0x98] sm:$0xff]
          %v3411 = vld [vmem:[#allocation8 + $0xa0] sm:$0xff]
          %v3412 = vld [vmem:[#allocation8 + $0xa8] sm:$0xff]
          %v3413 = vld [vmem:[#allocation8 + $0xb0] sm:$0xff]
          %v3414 = vld [vmem:[#allocation8 + $0xb8] sm:$0xff]
          %v3415 = vld [vmem:[#allocation8 + $0xc0] sm:$0xff]
          %v3416 = vld [vmem:[#allocation8 + $0xc8] sm:$0xff]
          %v3417 = vld [vmem:[#allocation8 + $0xd0] sm:$0xff]
          %v3418 = vld [vmem:[#allocation8 + $0xd8] sm:$0xff]
          %v3419 = vld [vmem:[#allocation8 + $0xe0] sm:$0xff]
          %v3420 = vld [vmem:[#allocation8 + $0xe8] sm:$0xff]
          %v3421 = vld [vmem:[#allocation8 + $0xf0] sm:$0xff]
          %v3422 = vld [vmem:[#allocation8 + $0xf8] sm:$0xff]
          %v3423 = vld [vmem:[#allocation8 + $0x100] sm:$0xff]
          %v3424 = vld [vmem:[#allocation8 + $0x108] sm:$0xff]
          %v3425 = vld [vmem:[#allocation8 + $0x110] sm:$0xff]
          %v3426 = vld [vmem:[#allocation8 + $0x118] sm:$0xff]
          %v3427 = vld [vmem:[#allocation8 + $0x120] sm:$0xff]
          %v3428 = vld [vmem:[#allocation8 + $0x128] sm:$0xff]
          %v3429 = vld [vmem:[#allocation8 + $0x130] sm:$0xff]
          %v3430 = vld [vmem:[#allocation8 + $0x138] sm:$0xff]
          %v3431 = vld [vmem:[#allocation8 + $0x140] sm:$0xff]
          %v3432 = vld [vmem:[#allocation8 + $0x148] sm:$0xff]
          %v3433 = vld [vmem:[#allocation8 + $0x150] sm:$0xff]
          %v3434 = vld [vmem:[#allocation8 + $0x158] sm:$0xff]
          %v3435 = vld [vmem:[#allocation8 + $0x160] sm:$0xff]
          %v3436 = vld [vmem:[#allocation8 + $0x168] sm:$0xff]
          %v3437 = vld [vmem:[#allocation8 + $0x170] sm:$0xff]
          %v3438 = vld [vmem:[#allocation8 + $0x178] sm:$0xff]
          %v3439 = vld [vmem:[#allocation8 + $0x180] sm:$0xff]
          %v3440 = vld [vmem:[#allocation8 + $0x188] sm:$0xff]
          %v3441 = vld [vmem:[#allocation8 + $0x190] sm:$0xff]
          %v3442 = vld [vmem:[#allocation8 + $0x198] sm:$0xff]
          %v3443 = vld [vmem:[#allocation8 + $0x1a0] sm:$0xff]
          %v3444 = vld [vmem:[#allocation8 + $0x1a8] sm:$0xff]
          %v3445 = vld [vmem:[#allocation8 + $0x1b0] sm:$0xff]
          %v3446 = vld [vmem:[#allocation8 + $0x1b8] sm:$0xff]
          %v3447 = vld [vmem:[#allocation8 + $0x1c0] sm:$0xff]
          %v3448 = vld [vmem:[#allocation8 + $0x1c8] sm:$0xff]
          %v3449 = vld [vmem:[#allocation8 + $0x1d0] sm:$0xff]
          %v3450 = vld [vmem:[#allocation8 + $0x1d8] sm:$0xff]
          %v3451 = vld [vmem:[#allocation8 + $0x1e0] sm:$0xff]
          %v3452 = vld [vmem:[#allocation8 + $0x1e8] sm:$0xff]
          %v3453 = vld [vmem:[#allocation8 + $0x1f0] sm:$0xff]
          %v3454 = vld [vmem:[#allocation8 + $0x1f8] sm:$0xff]
          %v3455 = vld [vmem:[%s10] sm:$0x3]
          %v3520 = vunpack.c.l.b16 %v3391
          %v3521 = vunpack.c.h.b16 %v3391
          %v3522 = vunpack.c.l.b16 %v3392
          %v3523 = vunpack.c.h.b16 %v3392
          %v3524 = vunpack.c.l.b16 %v3393
          %v3525 = vunpack.c.h.b16 %v3393
          %v3526 = vunpack.c.l.b16 %v3394
          %v3527 = vunpack.c.h.b16 %v3394
          %v3528 = vunpack.c.l.b16 %v3395
          %v3529 = vunpack.c.h.b16 %v3395
          %v3530 = vunpack.c.l.b16 %v3396
          %v3531 = vunpack.c.h.b16 %v3396
          %v3532 = vunpack.c.l.b16 %v3397
          %v3533 = vunpack.c.h.b16 %v3397
          %v3534 = vunpack.c.l.b16 %v3398
          %v3535 = vunpack.c.h.b16 %v3398
          %v3536 = vunpack.c.l.b16 %v3399
          %v3537 = vunpack.c.h.b16 %v3399
          %v3538 = vunpack.c.l.b16 %v3400
          %v3539 = vunpack.c.h.b16 %v3400
          %v3540 = vunpack.c.l.b16 %v3401
          %v3541 = vunpack.c.h.b16 %v3401
          %v3542 = vunpack.c.l.b16 %v3402
          %v3543 = vunpack.c.h.b16 %v3402
          %v3544 = vunpack.c.l.b16 %v3403
          %v3545 = vunpack.c.h.b16 %v3403
          %v3546 = vunpack.c.l.b16 %v3404
          %v3547 = vunpack.c.h.b16 %v3404
          %v3548 = vunpack.c.l.b16 %v3405
          %v3549 = vunpack.c.h.b16 %v3405
          %v3550 = vunpack.c.l.b16 %v3406
          %v3551 = vunpack.c.h.b16 %v3406
          %v3552 = vunpack.c.l.b16 %v3407
          %v3553 = vunpack.c.h.b16 %v3407
          %v3554 = vunpack.c.l.b16 %v3408
          %v3555 = vunpack.c.h.b16 %v3408
          %v3556 = vunpack.c.l.b16 %v3409
          %v3557 = vunpack.c.h.b16 %v3409
          %v3558 = vunpack.c.l.b16 %v3410
          %v3559 = vunpack.c.h.b16 %v3410
          %v3560 = vunpack.c.l.b16 %v3411
          %v3561 = vunpack.c.h.b16 %v3411
          %v3562 = vunpack.c.l.b16 %v3412
          %v3563 = vunpack.c.h.b16 %v3412
          %v3564 = vunpack.c.l.b16 %v3413
          %v3565 = vunpack.c.h.b16 %v3413
          %v3566 = vunpack.c.l.b16 %v3414
          %v3567 = vunpack.c.h.b16 %v3414
          %v3568 = vunpack.c.l.b16 %v3415
          %v3569 = vunpack.c.h.b16 %v3415
          %v3570 = vunpack.c.l.b16 %v3416
          %v3571 = vunpack.c.h.b16 %v3416
          %v3572 = vunpack.c.l.b16 %v3417
          %v3573 = vunpack.c.h.b16 %v3417
          %v3574 = vunpack.c.l.b16 %v3418
          %v3575 = vunpack.c.h.b16 %v3418
          %v3576 = vunpack.c.l.b16 %v3419
          %v3577 = vunpack.c.h.b16 %v3419
          %v3578 = vunpack.c.l.b16 %v3420
          %v3579 = vunpack.c.h.b16 %v3420
          %v3580 = vunpack.c.l.b16 %v3421
          %v3581 = vunpack.c.h.b16 %v3421
          %v3582 = vunpack.c.l.b16 %v3422
          %v3583 = vunpack.c.h.b16 %v3422
          %v3584 = vunpack.c.l.b16 %v3423
          %v3585 = vunpack.c.h.b16 %v3423
          %v3586 = vunpack.c.l.b16 %v3424
          %v3587 = vunpack.c.h.b16 %v3424
          %v3588 = vunpack.c.l.b16 %v3425
          %v3589 = vunpack.c.h.b16 %v3425
          %v3590 = vunpack.c.l.b16 %v3426
          %v3591 = vunpack.c.h.b16 %v3426
          %v3592 = vunpack.c.l.b16 %v3427
          %v3593 = vunpack.c.h.b16 %v3427
          %v3594 = vunpack.c.l.b16 %v3428
          %v3595 = vunpack.c.h.b16 %v3428
          %v3596 = vunpack.c.l.b16 %v3429
          %v3597 = vunpack.c.h.b16 %v3429
          %v3598 = vunpack.c.l.b16 %v3430
          %v3599 = vunpack.c.h.b16 %v3430
          %v3600 = vunpack.c.l.b16 %v3431
          %v3601 = vunpack.c.h.b16 %v3431
          %v3602 = vunpack.c.l.b16 %v3432
          %v3603 = vunpack.c.h.b16 %v3432
          %v3604 = vunpack.c.l.b16 %v3433
          %v3605 = vunpack.c.h.b16 %v3433
          %v3606 = vunpack.c.l.b16 %v3434
          %v3607 = vunpack.c.h.b16 %v3434
          %v3608 = vunpack.c.l.b16 %v3435
          %v3609 = vunpack.c.h.b16 %v3435
          %v3610 = vunpack.c.l.b16 %v3436
          %v3611 = vunpack.c.h.b16 %v3436
          %v3612 = vunpack.c.l.b16 %v3437
          %v3613 = vunpack.c.h.b16 %v3437
          %v3614 = vunpack.c.l.b16 %v3438
          %v3615 = vunpack.c.h.b16 %v3438
          %v3616 = vunpack.c.l.b16 %v3439
          %v3617 = vunpack.c.h.b16 %v3439
          %v3618 = vunpack.c.l.b16 %v3440
          %v3619 = vunpack.c.h.b16 %v3440
          %v3620 = vunpack.c.l.b16 %v3441
          %v3621 = vunpack.c.h.b16 %v3441
          %v3622 = vunpack.c.l.b16 %v3442
          %v3623 = vunpack.c.h.b16 %v3442
          %v3624 = vunpack.c.l.b16 %v3443
          %v3625 = vunpack.c.h.b16 %v3443
          %v3626 = vunpack.c.l.b16 %v3444
          %v3627 = vunpack.c.h.b16 %v3444
          %v3628 = vunpack.c.l.b16 %v3445
          %v3629 = vunpack.c.h.b16 %v3445
          %v3630 = vunpack.c.l.b16 %v3446
          %v3631 = vunpack.c.h.b16 %v3446
          %v3632 = vunpack.c.l.b16 %v3447
          %v3633 = vunpack.c.h.b16 %v3447
          %v3634 = vunpack.c.l.b16 %v3448
          %v3635 = vunpack.c.h.b16 %v3448
          %v3636 = vunpack.c.l.b16 %v3449
          %v3637 = vunpack.c.h.b16 %v3449
          %v3638 = vunpack.c.l.b16 %v3450
          %v3639 = vunpack.c.h.b16 %v3450
          %v3640 = vunpack.c.l.b16 %v3451
          %v3641 = vunpack.c.h.b16 %v3451
          %v3642 = vunpack.c.l.b16 %v3452
          %v3643 = vunpack.c.h.b16 %v3452
          %v3644 = vunpack.c.l.b16 %v3453
          %v3645 = vunpack.c.h.b16 %v3453
          %v3646 = vunpack.c.l.b16 %v3454
          %v3647 = vunpack.c.h.b16 %v3454
          %v3648 = vpack.c.b16 %v3522, %v3520
          %v3649 = vpack.c.b16 %v3523, %v3521
          %v3650 = vpack.c.b16 %v3526, %v3524
          %v3651 = vpack.c.b16 %v3527, %v3525
          %v3652 = vpack.c.b16 %v3530, %v3528
          %v3653 = vpack.c.b16 %v3531, %v3529
          %v3654 = vpack.c.b16 %v3534, %v3532
          %v3655 = vpack.c.b16 %v3535, %v3533
          %v3656 = vpack.c.b16 %v3538, %v3536
          %v3657 = vpack.c.b16 %v3539, %v3537
          %v3658 = vpack.c.b16 %v3542, %v3540
          %v3659 = vpack.c.b16 %v3543, %v3541
          %v3660 = vpack.c.b16 %v3546, %v3544
          %v3661 = vpack.c.b16 %v3547, %v3545
          %v3662 = vpack.c.b16 %v3550, %v3548
          %v3663 = vpack.c.b16 %v3551, %v3549
          %v3664 = vpack.c.b16 %v3554, %v3552
          %v3665 = vpack.c.b16 %v3555, %v3553
          %v3666 = vpack.c.b16 %v3558, %v3556
          %v3667 = vpack.c.b16 %v3559, %v3557
          %v3668 = vpack.c.b16 %v3562, %v3560
          %v3669 = vpack.c.b16 %v3563, %v3561
          %v3670 = vpack.c.b16 %v3566, %v3564
          %v3671 = vpack.c.b16 %v3567, %v3565
          %v3672 = vpack.c.b16 %v3570, %v3568
          %v3673 = vpack.c.b16 %v3571, %v3569
          %v3674 = vpack.c.b16 %v3574, %v3572
          %v3675 = vpack.c.b16 %v3575, %v3573
          %v3676 = vpack.c.b16 %v3578, %v3576
          %v3677 = vpack.c.b16 %v3579, %v3577
          %v3678 = vpack.c.b16 %v3582, %v3580
          %v3679 = vpack.c.b16 %v3583, %v3581
          %v3680 = vpack.c.b16 %v3586, %v3584
          %v3681 = vpack.c.b16 %v3587, %v3585
          %v3682 = vpack.c.b16 %v3590, %v3588
          %v3683 = vpack.c.b16 %v3591, %v3589
          %v3684 = vpack.c.b16 %v3594, %v3592
          %v3685 = vpack.c.b16 %v3595, %v3593
          %v3686 = vpack.c.b16 %v3598, %v3596
          %v3687 = vpack.c.b16 %v3599, %v3597
          %v3688 = vpack.c.b16 %v3602, %v3600
          %v3689 = vpack.c.b16 %v3603, %v3601
          %v3690 = vpack.c.b16 %v3606, %v3604
          %v3691 = vpack.c.b16 %v3607, %v3605
          %v3692 = vpack.c.b16 %v3610, %v3608
          %v3693 = vpack.c.b16 %v3611, %v3609
          %v3694 = vpack.c.b16 %v3614, %v3612
          %v3695 = vpack.c.b16 %v3615, %v3613
          %v3696 = vpack.c.b16 %v3618, %v3616
          %v3697 = vpack.c.b16 %v3619, %v3617
          %v3698 = vpack.c.b16 %v3622, %v3620
          %v3699 = vpack.c.b16 %v3623, %v3621
          %v3700 = vpack.c.b16 %v3626, %v3624
          %v3701 = vpack.c.b16 %v3627, %v3625
          %v3702 = vpack.c.b16 %v3630, %v3628
          %v3703 = vpack.c.b16 %v3631, %v3629
          %v3704 = vpack.c.b16 %v3634, %v3632
          %v3705 = vpack.c.b16 %v3635, %v3633
          %v3706 = vpack.c.b16 %v3638, %v3636
          %v3707 = vpack.c.b16 %v3639, %v3637
          %v3708 = vpack.c.b16 %v3642, %v3640
          %v3709 = vpack.c.b16 %v3643, %v3641
          %v3710 = vpack.c.b16 %v3646, %v3644
          %v3711 = vpack.c.b16 %v3647, %v3645
          %v3777 = vlaneseq
          %v3778 = vshrl.u32 %v3777, 7
          %v3779 = vsub.s32 0, %v3778
          %v3780 = vrot.slane %v3455, %v3779
          %v3781 = vlaneseq
          %v3782 = vshrl.u32 %v3781, 7
          %v3783 = vsub.s32 1, %v3782
          %v3784 = vrot.slane %v3455, %v3783
          %3787 = vmatprep.subr.bf16.mxu0 %v3649
          %3788 = vmatpush1.bf16.msra.mxu0 %v3648
          %3789 = vmatprep.subr.bf16.mxu0 %v3651
          %3790 = vmatpush1.bf16.msra.mxu0 %v3650
          %3791 = vmatprep.subr.bf16.mxu0 %v3653
          %3792 = vmatpush1.bf16.msra.mxu0 %v3652
          %3793 = vmatprep.subr.bf16.mxu0 %v3655
          %3794 = vmatpush1.bf16.msra.mxu0 %v3654
          %3795 = vmatprep.subr.bf16.mxu0 %v3657
          %3796 = vmatpush1.bf16.msra.mxu0 %v3656
          %3797 = vmatprep.subr.bf16.mxu0 %v3659
          %3798 = vmatpush1.bf16.msra.mxu0 %v3658
          %3799 = vmatprep.subr.bf16.mxu0 %v3661
          %3800 = vmatpush1.bf16.msra.mxu0 %v3660
          %3801 = vmatprep.subr.bf16.mxu0 %v3663
          %3802 = vmatpush1.bf16.msra.mxu0 %v3662
          %3803 = vmatprep.subr.bf16.mxu0 %v3665
          %3804 = vmatpush1.bf16.msra.mxu0 %v3664
          %3805 = vmatprep.subr.bf16.mxu0 %v3667
          %3806 = vmatpush1.bf16.msra.mxu0 %v3666
          %3807 = vmatprep.subr.bf16.mxu0 %v3669
          %3808 = vmatpush1.bf16.msra.mxu0 %v3668
          %3809 = vmatprep.subr.bf16.mxu0 %v3671
          %3810 = vmatpush1.bf16.msra.mxu0 %v3670
          %3811 = vmatprep.subr.bf16.mxu0 %v3673
          %3812 = vmatpush1.bf16.msra.mxu0 %v3672
          %3813 = vmatprep.subr.bf16.mxu0 %v3675
          %3814 = vmatpush1.bf16.msra.mxu0 %v3674
          %3815 = vmatprep.subr.bf16.mxu0 %v3677
          %3816 = vmatpush1.bf16.msra.mxu0 %v3676
          %3817 = vmatprep.subr.bf16.mxu0 %v3679
          %3818 = vmatpush1.bf16.msra.mxu0 %v3678
          %3819 = vmatprep.mubr.bf16.mxu0 %v3388
          %3820 = vmatmul.mubr.bf16.gmra.mrb[0].mxu0 %v3387
          %v3821 = vpop.f32.mrb[0].mxu0
          %v3822 = vadd.f32 %v3780, %v3821
          %v3823 = vpop.f32.mrb[0].mxu0
          %v3824 = vadd.f32 %v3784, %v3823
          %v3825 = vpop.f32.mrb[0].mxu0
          %v3826 = vpop.f32.mrb[0].mxu0
          %3827 = vdwg.mxu0
          %3828 = vmatprep.subr.bf16.mxu0 %v3681
          %3829 = vmatpush1.bf16.msra.mxu0 %v3680
          %3830 = vmatprep.subr.bf16.mxu0 %v3683
          %3831 = vmatpush1.bf16.msra.mxu0 %v3682
          %3832 = vmatprep.subr.bf16.mxu0 %v3685
          %3833 = vmatpush1.bf16.msra.mxu0 %v3684
          %3834 = vmatprep.subr.bf16.mxu0 %v3687
          %3835 = vmatpush1.bf16.msra.mxu0 %v3686
          %3836 = vmatprep.subr.bf16.mxu0 %v3689
          %3837 = vmatpush1.bf16.msra.mxu0 %v3688
          %3838 = vmatprep.subr.bf16.mxu0 %v3691
          %3839 = vmatpush1.bf16.msra.mxu0 %v3690
          %3840 = vmatprep.subr.bf16.mxu0 %v3693
          %3841 = vmatpush1.bf16.msra.mxu0 %v3692
          %3842 = vmatprep.subr.bf16.mxu0 %v3695
          %3843 = vmatpush1.bf16.msra.mxu0 %v3694
          %3844 = vmatprep.subr.bf16.mxu0 %v3697
          %3845 = vmatpush1.bf16.msra.mxu0 %v3696
          %3846 = vmatprep.subr.bf16.mxu0 %v3699
          %3847 = vmatpush1.bf16.msra.mxu0 %v3698
          %3848 = vmatprep.subr.bf16.mxu0 %v3701
          %3849 = vmatpush1.bf16.msra.mxu0 %v3700
          %3850 = vmatprep.subr.bf16.mxu0 %v3703
          %3851 = vmatpush1.bf16.msra.mxu0 %v3702
          %3852 = vmatprep.subr.bf16.mxu0 %v3705
          %3853 = vmatpush1.bf16.msra.mxu0 %v3704
          %3854 = vmatprep.subr.bf16.mxu0 %v3707
          %3855 = vmatpush1.bf16.msra.mxu0 %v3706
          %3856 = vmatprep.subr.bf16.mxu0 %v3709
          %3857 = vmatpush1.bf16.msra.mxu0 %v3708
          %3858 = vmatprep.subr.bf16.mxu0 %v3711
          %3859 = vmatpush1.bf16.msra.mxu0 %v3710
          %3860 = vmatprep.mubr.bf16.mxu0 %v3390
          %3861 = vmatmul.mubr.bf16.gmra.mrb[0].mxu0 %v3389
          %v3862 = vpop.f32.mrb[0].mxu0
          %v3863 = vadd.f32 %v3822, %v3862
          %v3864 = vpop.f32.mrb[0].mxu0
          %v3865 = vadd.f32 %v3824, %v3864
          %v3866 = vpop.f32.mrb[0].mxu0
          %v3867 = vpop.f32.mrb[0].mxu0
          %3868 = vdwg.mxu0
          %v3869 = vmax.f32 %v3863, 0.0
          %v3870 = vmax.f32 %v3865, 0.0
          %v3871 = vpack.c.bf16 %v3869, %v3869
          %v3872 = vpack.c.bf16 %v3870, %v3870
          %v3873 = vld [vmem:[%s11] sm:$0xff]
          %v3874 = vld [vmem:[%s11 + $0x8] sm:$0xff]
          %v3875 = vld [vmem:[%s11 + $0x10] sm:$0xff]
          %v3876 = vld [vmem:[%s11 + $0x18] sm:$0xff]
          %v3877 = vld [vmem:[%s11 + $0x20] sm:$0xff]
          %v3878 = vld [vmem:[%s11 + $0x28] sm:$0xff]
          %v3879 = vld [vmem:[%s11 + $0x30] sm:$0xff]
          %v3880 = vld [vmem:[%s11 + $0x38] sm:$0xff]
          %v3881 = vld [vmem:[%s11 + $0x40] sm:$0xff]
          %v3882 = vld [vmem:[%s11 + $0x48] sm:$0xff]
          %v3883 = vld [vmem:[%s11 + $0x50] sm:$0xff]
          %v3884 = vld [vmem:[%s11 + $0x58] sm:$0xff]
          %v3885 = vld [vmem:[%s11 + $0x60] sm:$0xff]
          %v3886 = vld [vmem:[%s11 + $0x68] sm:$0xff]
          %v3887 = vld [vmem:[%s11 + $0x70] sm:$0xff]
          %v3888 = vld [vmem:[%s11 + $0x78] sm:$0xff]
          %v3889 = vld [vmem:[%s11 + $0x80] sm:$0xff]
          %v3890 = vld [vmem:[%s11 + $0x88] sm:$0xff]
          %v3891 = vld [vmem:[%s11 + $0x90] sm:$0xff]
          %v3892 = vld [vmem:[%s11 + $0x98] sm:$0xff]
          %v3893 = vld [vmem:[%s11 + $0xa0] sm:$0xff]
          %v3894 = vld [vmem:[%s11 + $0xa8] sm:$0xff]
          %v3895 = vld [vmem:[%s11 + $0xb0] sm:$0xff]
          %v3896 = vld [vmem:[%s11 + $0xb8] sm:$0xff]
          %v3897 = vld [vmem:[%s11 + $0xc0] sm:$0xff]
          %v3898 = vld [vmem:[%s11 + $0xc8] sm:$0xff]
          %v3899 = vld [vmem:[%s11 + $0xd0] sm:$0xff]
          %v3900 = vld [vmem:[%s11 + $0xd8] sm:$0xff]
          %v3901 = vld [vmem:[%s11 + $0xe0] sm:$0xff]
          %v3902 = vld [vmem:[%s11 + $0xe8] sm:$0xff]
          %v3903 = vld [vmem:[%s11 + $0xf0] sm:$0xff]
          %v3904 = vld [vmem:[%s11 + $0xf8] sm:$0xff]
          %v3905 = vld [vmem:[%s12] sm:$0x3]
          %v3938 = vunpack.c.l.b16 %v3873
          %v3939 = vunpack.c.h.b16 %v3873
          %v3940 = vunpack.c.l.b16 %v3874
          %v3941 = vunpack.c.h.b16 %v3874
          %v3942 = vunpack.c.l.b16 %v3875
          %v3943 = vunpack.c.h.b16 %v3875
          %v3944 = vunpack.c.l.b16 %v3876
          %v3945 = vunpack.c.h.b16 %v3876
          %v3946 = vunpack.c.l.b16 %v3877
          %v3947 = vunpack.c.h.b16 %v3877
          %v3948 = vunpack.c.l.b16 %v3878
          %v3949 = vunpack.c.h.b16 %v3878
          %v3950 = vunpack.c.l.b16 %v3879
          %v3951 = vunpack.c.h.b16 %v3879
          %v3952 = vunpack.c.l.b16 %v3880
          %v3953 = vunpack.c.h.b16 %v3880
          %v3954 = vunpack.c.l.b16 %v3881
          %v3955 = vunpack.c.h.b16 %v3881
          %v3956 = vunpack.c.l.b16 %v3882
          %v3957 = vunpack.c.h.b16 %v3882
          %v3958 = vunpack.c.l.b16 %v3883
          %v3959 = vunpack.c.h.b16 %v3883
          %v3960 = vunpack.c.l.b16 %v3884
          %v3961 = vunpack.c.h.b16 %v3884
          %v3962 = vunpack.c.l.b16 %v3885
          %v3963 = vunpack.c.h.b16 %v3885
          %v3964 = vunpack.c.l.b16 %v3886
          %v3965 = vunpack.c.h.b16 %v3886
          %v3966 = vunpack.c.l.b16 %v3887
          %v3967 = vunpack.c.h.b16 %v3887
          %v3968 = vunpack.c.l.b16 %v3888
          %v3969 = vunpack.c.h.b16 %v3888
          %v3970 = vunpack.c.l.b16 %v3889
          %v3971 = vunpack.c.h.b16 %v3889
          %v3972 = vunpack.c.l.b16 %v3890
          %v3973 = vunpack.c.h.b16 %v3890
          %v3974 = vunpack.c.l.b16 %v3891
          %v3975 = vunpack.c.h.b16 %v3891
          %v3976 = vunpack.c.l.b16 %v3892
          %v3977 = vunpack.c.h.b16 %v3892
          %v3978 = vunpack.c.l.b16 %v3893
          %v3979 = vunpack.c.h.b16 %v3893
          %v3980 = vunpack.c.l.b16 %v3894
          %v3981 = vunpack.c.h.b16 %v3894
          %v3982 = vunpack.c.l.b16 %v3895
          %v3983 = vunpack.c.h.b16 %v3895
          %v3984 = vunpack.c.l.b16 %v3896
          %v3985 = vunpack.c.h.b16 %v3896
          %v3986 = vunpack.c.l.b16 %v3897
          %v3987 = vunpack.c.h.b16 %v3897
          %v3988 = vunpack.c.l.b16 %v3898
          %v3989 = vunpack.c.h.b16 %v3898
          %v3990 = vunpack.c.l.b16 %v3899
          %v3991 = vunpack.c.h.b16 %v3899
          %v3992 = vunpack.c.l.b16 %v3900
          %v3993 = vunpack.c.h.b16 %v3900
          %v3994 = vunpack.c.l.b16 %v3901
          %v3995 = vunpack.c.h.b16 %v3901
          %v3996 = vunpack.c.l.b16 %v3902
          %v3997 = vunpack.c.h.b16 %v3902
          %v3998 = vunpack.c.l.b16 %v3903
          %v3999 = vunpack.c.h.b16 %v3903
          %v4000 = vunpack.c.l.b16 %v3904
          %v4001 = vunpack.c.h.b16 %v3904
          %v4002 = vpack.c.b16 %v3940, %v3938
          %v4003 = vpack.c.b16 %v3941, %v3939
          %v4004 = vpack.c.b16 %v3944, %v3942
          %v4005 = vpack.c.b16 %v3945, %v3943
          %v4006 = vpack.c.b16 %v3948, %v3946
          %v4007 = vpack.c.b16 %v3949, %v3947
          %v4008 = vpack.c.b16 %v3952, %v3950
          %v4009 = vpack.c.b16 %v3953, %v3951
          %v4010 = vpack.c.b16 %v3956, %v3954
          %v4011 = vpack.c.b16 %v3957, %v3955
          %v4012 = vpack.c.b16 %v3960, %v3958
          %v4013 = vpack.c.b16 %v3961, %v3959
          %v4014 = vpack.c.b16 %v3964, %v3962
          %v4015 = vpack.c.b16 %v3965, %v3963
          %v4016 = vpack.c.b16 %v3968, %v3966
          %v4017 = vpack.c.b16 %v3969, %v3967
          %v4018 = vpack.c.b16 %v3972, %v3970
          %v4019 = vpack.c.b16 %v3973, %v3971
          %v4020 = vpack.c.b16 %v3976, %v3974
          %v4021 = vpack.c.b16 %v3977, %v3975
          %v4022 = vpack.c.b16 %v3980, %v3978
          %v4023 = vpack.c.b16 %v3981, %v3979
          %v4024 = vpack.c.b16 %v3984, %v3982
          %v4025 = vpack.c.b16 %v3985, %v3983
          %v4026 = vpack.c.b16 %v3988, %v3986
          %v4027 = vpack.c.b16 %v3989, %v3987
          %v4028 = vpack.c.b16 %v3992, %v3990
          %v4029 = vpack.c.b16 %v3993, %v3991
          %v4030 = vpack.c.b16 %v3996, %v3994
          %v4031 = vpack.c.b16 %v3997, %v3995
          %v4032 = vpack.c.b16 %v4000, %v3998
          %v4033 = vpack.c.b16 %v4001, %v3999
          %v4067 = vlaneseq
          %v4068 = vshrl.u32 %v4067, 7
          %v4069 = vsub.s32 0, %v4068
          %v4070 = vrot.slane %v3905, %v4069
          %v4071 = vlaneseq
          %v4072 = vshrl.u32 %v4071, 7
          %v4073 = vsub.s32 1, %v4072
          %v4074 = vrot.slane %v3905, %v4073
          %4077 = vmatprep.subr.bf16.mxu0 %v4003
          %4078 = vmatpush1.bf16.msra.mxu0 %v4002
          %4079 = vmatprep.subr.bf16.mxu0 %v4005
          %4080 = vmatpush1.bf16.msra.mxu0 %v4004
          %4081 = vmatprep.subr.bf16.mxu0 %v4007
          %4082 = vmatpush1.bf16.msra.mxu0 %v4006
          %4083 = vmatprep.subr.bf16.mxu0 %v4009
          %4084 = vmatpush1.bf16.msra.mxu0 %v4008
          %4085 = vmatprep.subr.bf16.mxu0 %v4011
          %4086 = vmatpush1.bf16.msra.mxu0 %v4010
          %4087 = vmatprep.subr.bf16.mxu0 %v4013
          %4088 = vmatpush1.bf16.msra.mxu0 %v4012
          %4089 = vmatprep.subr.bf16.mxu0 %v4015
          %4090 = vmatpush1.bf16.msra.mxu0 %v4014
          %4091 = vmatprep.subr.bf16.mxu0 %v4017
          %4092 = vmatpush1.bf16.msra.mxu0 %v4016
          %4093 = vmatprep.subr.bf16.mxu0 %v4019
          %4094 = vmatpush1.bf16.msra.mxu0 %v4018
          %4095 = vmatprep.subr.bf16.mxu0 %v4021
          %4096 = vmatpush1.bf16.msra.mxu0 %v4020
          %4097 = vmatprep.subr.bf16.mxu0 %v4023
          %4098 = vmatpush1.bf16.msra.mxu0 %v4022
          %4099 = vmatprep.subr.bf16.mxu0 %v4025
          %4100 = vmatpush1.bf16.msra.mxu0 %v4024
          %4101 = vmatprep.subr.bf16.mxu0 %v4027
          %4102 = vmatpush1.bf16.msra.mxu0 %v4026
          %4103 = vmatprep.subr.bf16.mxu0 %v4029
          %4104 = vmatpush1.bf16.msra.mxu0 %v4028
          %4105 = vmatprep.subr.bf16.mxu0 %v4031
          %4106 = vmatpush1.bf16.msra.mxu0 %v4030
          %4107 = vmatprep.subr.bf16.mxu0 %v4033
          %4108 = vmatpush1.bf16.msra.mxu0 %v4032
          %4109 = vmatprep.mubr.bf16.mxu0 %v3872
          %4110 = vmatmul.mubr.bf16.gmra.mrb[0].mxu0 %v3871
          %v4111 = vpop.f32.mrb[0].mxu0
          %v4112 = vadd.f32 %v4070, %v4111
          %v4113 = vpop.f32.mrb[0].mxu0
          %v4114 = vadd.f32 %v4074, %v4113
          %v4115 = vpop.f32.mrb[0].mxu0
          %v4116 = vpop.f32.mrb[0].mxu0
          %4117 = vdwg.mxu0
          %v4120 = vcombine.low %v4112, %v4114
          %v4122 = vunpack.c.l.s4 1966171168
          %v4123 = vunpack.c.0.s8 %v4122
          %v4124 = vlaneseq
          %v4125 = vshrl.u32 %v4124, 7
          %v4126 = vsub.s32 %v4123, %v4125
          %v4127 = vrot.slane %v4120, %v4126
          %v4129 = vunpack.c.l.s4 1966171168
          %v4130 = vunpack.c.0.s8 %v4129
          %v4131 = vlaneseq
          %v4132 = vshrl.u32 %v4131, 7
          %v4133 = vsub.s32 %v4130, %v4132
          %v4134 = vrot.slane %v4127, %v4133
          %vm4136 = vcmp.lt.s32.totalorder %v869, 169
          %vm4137 = vmand %vm870, %vm4136
          %4138 = vst.msk [vmem:[%s500] sm:$0x3] %vm4137, %v4134
        $region92: #{tpu_custom_call.1} parent=71 // pred_fallthru
          _
        %s4139 = sand.u32 %s329, 1
        %s4140 = scalar_lea.sflag [#allocation5], %s4139
        %s4141 = sand.u32 %s329, 1
        %s4142 = smul.addr %s4141, 2
        %s4143 = scalar_lea.vmem [#allocation9], %s4142
        // Predicated region
        $region93: #{tpu_custom_call.1} parent=71 // pred_check
          %p4144 = pneg %p339
        $region94: #{tpu_custom_call.1} parent=71 // pred_check_branch
          %4146 = sbr.rel (%p4144) target = $region96
        $region95: #{tpu_custom_call.1} parent=71 // pred_region
          %s4148 = ssub.s32 32, 32
          %4149 = vsyncadd %s4140, %s4148
          %s4150 = smul.addr %s33, 2
          %s4151 = smul.addr %s4150, 16
          %s4152 = scalar_lea.hbm %s13, %s4151
          %s4154 = sshll.u32 %s4143, 4
          %s4155 = int_to_ptr.vmem [resolvable:$true] %s4154
          %4157 = dma.vmem_to_hbm [thread:$0]  %s4155, 32, %s4152, %s4140
        $region96: #{tpu_custom_call.1} parent=71 // pred_fallthru
          _
      $region72: #{tpu_custom_call.1} parent=5 // pred_fallthru
        _
      %p4158 = scmp.le.s32.totalorder 2, %s24
      // Predicated region
      $region97: #{tpu_custom_call.1} parent=5 // pred_check
        %p4159 = pneg %p4158
      $region98: #{tpu_custom_call.1} parent=5 // pred_check_branch
        %4161 = sbr.rel (%p4159) target = $region100
      $region99: #{tpu_custom_call.1} parent=5 // pred_region
        %s4162 = ssub.s32 %s24, 2
        // Predicated region
        $region101: #{tpu_custom_call.1} parent=99 // pred_check
          %p4163 = pneg %p345
        $region102: #{tpu_custom_call.1} parent=99 // pred_check_branch
          %4165 = sbr.rel (%p4163) target = $region104
        $region103: #{tpu_custom_call.1} parent=99 // pred_region
          %s4166 = sand.u32 %s330, 1
          %s4167 = scalar_lea.sflag [#allocation5], %s4166
          %s4168 = sand.u32 %s330, 1
          %s4169 = smul.addr %s4168, 2
          %s4170 = scalar_lea.vmem [#allocation9], %s4169
          %4171 = dma.done %s4167, 32
        $region104: #{tpu_custom_call.1} parent=99 // pred_fallthru
          _
      $region100: #{tpu_custom_call.1} parent=5 // pred_fallthru
        _
    $region6: #{tpu_custom_call.1} parent=1 // loop_footer
      %s28 = sadd.s32 1, %s24
    $region7: #{tpu_custom_call.1} parent=1 // loop_footer_branch
      %23 = sbr.rel target = $region3
    $region8: #{tpu_custom_call.1} parent=1 // loop_exit
      _
    %4172 = vsyncpa [#allocation4], 1
    %s4173 = scalar_lea.sflag [#allocation4], 1
    %4174 = vsyncpa %s4173, 1
    %4175 = vsyncpa [#allocation7], 1
    %4176 = vsyncpa [#allocation5], 1
    %s4177 = scalar_lea.sflag [#allocation5], 1
    %4178 = vsyncpa %s4177, 1

</llo_original>
